<compile_context>
chip_gen: v7x
topology: tpu7x:2x2x1
jax: 0.10.0
libtpu: 0.0.40
codegen_flags: <defaults>
</compile_context>

<pallas_src>
import jax
import jax.numpy as jnp
from jax.experimental import pallas as pl
from jax.experimental.pallas import tpu as pltpu

N, C_IN, H, W = 1, 1248, 7, 7
C_MID = 208
BN_EPS = 1e-5


def _fused_kernel(x303_ref, x299_ref, x293_ref, w1_ref, gamma_ref, beta_ref,
                  w2_ref, out_ref):
    # Channel-major ("transposed") layout: rows = channels, cols = H*W.
    #   x303_ref : [C_IN, 1]     f32   squeeze-excite gate logits
    #   x299_ref : [C_IN, HW]    f32
    #   x293_ref : [C_MID, HW]   f32
    #   w1_ref   : [C_MID, C_IN] bf16  (conv2d103 weight, natural OI layout)
    #   gamma/beta: [C_MID, 1]   f32
    #   w2_ref   : [C_IN, C_MID] bf16  (conv2d104 weight, natural OI layout)
    #   out_ref  : [C_IN, HW]    f32
    gate = jax.nn.sigmoid(x303_ref[...])                       # [C_IN, 1]
    x305_t = x299_ref[...] * gate                              # [C_IN, HW]

    # 1x1 conv #1 (project) as transposed matmul: [C_MID,C_IN] @ [C_IN,HW]
    x306_t = jnp.dot(w1_ref[...], x305_t.astype(jnp.bfloat16),
                     preferred_element_type=jnp.float32)       # [C_MID, HW] f32

    # BatchNorm2d, training mode: per-channel stats over N*H*W (= axis 1 here),
    # biased variance, computed as E[x^2] - E[x]^2.
    mean = jnp.mean(x306_t, axis=1, keepdims=True)             # [C_MID, 1]
    mean_sq = jnp.mean(x306_t * x306_t, axis=1, keepdims=True)
    var = mean_sq - mean * mean
    x307_t = (x306_t - mean) * jax.lax.rsqrt(var + BN_EPS)
    x307_t = x307_t * gamma_ref[...] + beta_ref[...]

    # residual add
    x308_t = x307_t + x293_ref[...]                            # [C_MID, HW]

    # 1x1 conv #2 (expand): [C_IN,C_MID] @ [C_MID,HW]
    out_ref[...] = jnp.dot(w2_ref[...], x308_t.astype(jnp.bfloat16),
                           preferred_element_type=jnp.float32)


def fused_forward(x303, x299, x293, w1_oihw, gamma, beta, w2_oihw):
    """x303: [N, C_IN, 1, 1], x299: [N, C_IN, H, W], x293: [N, C_MID, H, W] (NCHW).
    Returns [N, C_IN, H, W] matching the PyTorch module output (f32)."""
    n, c_in, h, w = x299.shape
    c_mid = x293.shape[1]
    assert n == 1, "kernel assumes batch 1 (the SE gate is per (n, c))"
    hw = h * w

    # All of the following are free views of contiguous NCHW / OIHW buffers:
    x299_t = x299.reshape(c_in, hw)                       # [C_IN, HW]
    x293_t = x293.reshape(c_mid, hw)                      # [C_MID, HW]
    x303_t = x303.reshape(c_in, 1)                        # [C_IN, 1]
    gamma2d = gamma.reshape(c_mid, 1)
    beta2d = beta.reshape(c_mid, 1)
    # Weights in natural [C_out, C_in] layout, cast to bf16 (halves weight DMA).
    # In a real model these would simply be stored in bf16.
    w1 = w1_oihw.reshape(c_mid, c_in).astype(jnp.bfloat16)   # [C_MID, C_IN]
    w2 = w2_oihw.reshape(c_in, c_mid).astype(jnp.bfloat16)   # [C_IN, C_MID]

    flops = 4 * hw * c_in * c_mid                         # two 1x1-conv matmuls
    bytes_accessed = (
        (x303_t.size + x299_t.size + x293_t.size + gamma2d.size + beta2d.size) * 4
        + (w1.size + w2.size) * 2
        + c_in * hw * 4)                                  # output
    cost = pl.CostEstimate(flops=flops,
                           transcendentals=c_in + c_mid,  # sigmoid + rsqrt
                           bytes_accessed=bytes_accessed)

    vmem = pl.BlockSpec(memory_space=pltpu.MemorySpace.VMEM)
    out_t = pl.pallas_call(
        _fused_kernel,
        out_shape=jax.ShapeDtypeStruct((c_in, hw), jnp.float32),
        in_specs=[vmem] * 7,
        out_specs=vmem,
        cost_estimate=cost,
    )(x303_t, x299_t, x293_t, w1, gamma2d, beta2d, w2)

    # [C_IN, HW] -> NCHW (free reshape)
    return out_t.reshape(n, c_in, h, w)


# TODO(synk): BatchNorm running_mean/running_var/num_batches_tracked updates are
# not modeled; only the training-mode forward output is produced (matches M()).


def reference_forward(x303, x299, x293, w1_oihw, gamma, beta, w2_oihw):
    """Pure-JAX f32 reference mirroring the PyTorch forward (training-mode BN)."""
    hp = jax.lax.Precision.HIGHEST
    x304 = jax.nn.sigmoid(x303)
    x305 = x299 * x304
    x306 = jnp.einsum('nchw,oc->nohw', x305, w1_oihw.reshape(C_MID, C_IN),
                      precision=hp)
    mean = jnp.mean(x306, axis=(0, 2, 3), keepdims=True)
    var = jnp.mean((x306 - mean) ** 2, axis=(0, 2, 3), keepdims=True)
    x307 = (x306 - mean) / jnp.sqrt(var + BN_EPS)
    x307 = x307 * gamma.reshape(1, C_MID, 1, 1) + beta.reshape(1, C_MID, 1, 1)
    x308 = x307 + x293
    x309 = jnp.einsum('nchw,oc->nohw', x308, w2_oihw.reshape(C_IN, C_MID),
                      precision=hp)
    return x309


if __name__ == "__main__":
    key = jax.random.PRNGKey(0)
    k1, k2, k3, k4, k5, k6, k7 = jax.random.split(key, 7)

    # Inputs (channel counts fixed by the module: 1248 / 208; spatial 7x7, batch 1)
    x303 = jax.random.normal(k1, (N, C_IN, 1, 1), jnp.float32)
    x299 = jax.random.normal(k2, (N, C_IN, H, W), jnp.float32)
    x293 = jax.random.normal(k3, (N, C_MID, H, W), jnp.float32)

    # Deterministic parameter init (shapes from the module __init__)
    w1_oihw = jax.random.normal(k4, (C_MID, C_IN, 1, 1), jnp.float32) * 0.02
    w2_oihw = jax.random.normal(k5, (C_IN, C_MID, 1, 1), jnp.float32) * 0.02
    gamma = 1.0 + 0.1 * jax.random.normal(k6, (C_MID,), jnp.float32)
    beta = 0.1 * jax.random.normal(k7, (C_MID,), jnp.float32)

    fused = jax.jit(fused_forward)
    out = fused(x303, x299, x293, w1_oihw, gamma, beta, w2_oihw)
    out = jax.block_until_ready(out)

    ref = reference_forward(x303, x299, x293, w1_oihw, gamma, beta, w2_oihw)
    ref = jax.block_until_ready(ref)

    assert out.shape == (N, C_IN, H, W), out.shape
    # Kernel uses bf16 weights/matmul operands (f32 accumulation); compare
    # against a full-f32 HIGHEST-precision reference with bf16-level tolerance.
    max_err = float(jnp.max(jnp.abs(out - ref)))
    assert jnp.allclose(out, ref, atol=1e-2, rtol=1e-2), max_err

    print("KERNEL_OK")
</pallas_src>

<mosaic_0001>
module attributes {stable_mosaic.version = 11 : i64} {
  func.func @_fused_kernel(%arg0: memref<1248x1xf32, #tpu.memory_space<vmem>>, %arg1: memref<1248x49xf32, #tpu.memory_space<vmem>>, %arg2: memref<208x49xf32, #tpu.memory_space<vmem>>, %arg3: memref<208x1248xbf16, #tpu.memory_space<vmem>>, %arg4: memref<208x1xf32, #tpu.memory_space<vmem>>, %arg5: memref<208x1xf32, #tpu.memory_space<vmem>>, %arg6: memref<1248x208xbf16, #tpu.memory_space<vmem>>, %arg7: memref<1248x49xf32, #tpu.memory_space<vmem>>) attributes {dimension_semantics = [], scalar_prefetch = 0 : i64, scratch_operands = 0 : i64, tpu.core_type = #tpu.core_type<tc>} {
    %c0 = arith.constant 0 : index
    %c0_0 = arith.constant 0 : index
    %0 = vector.load %arg0[%c0, %c0_0] : memref<1248x1xf32, #tpu.memory_space<vmem>>, vector<1248x1xf32>
    %1 = arith.negf %0 : vector<1248x1xf32>
    %2 = math.exp %1 : vector<1248x1xf32>
    %cst = arith.constant 1.000000e+00 : f32
    %3 = vector.broadcast %cst : f32 to vector<1248x1xf32>
    %4 = arith.addf %3, %2 : vector<1248x1xf32>
    %5 = arith.divf %3, %4 : vector<1248x1xf32>
    %c0_1 = arith.constant 0 : index
    %c0_2 = arith.constant 0 : index
    %6 = vector.load %arg1[%c0_1, %c0_2] : memref<1248x49xf32, #tpu.memory_space<vmem>>, vector<1248x49xf32>
    %7 = vector.broadcast %5 : vector<1248x1xf32> to vector<1248x49xf32>
    %8 = arith.mulf %6, %7 : vector<1248x49xf32>
    %c0_3 = arith.constant 0 : index
    %c0_4 = arith.constant 0 : index
    %9 = vector.load %arg3[%c0_3, %c0_4] : memref<208x1248xbf16, #tpu.memory_space<vmem>>, vector<208x1248xbf16>
    %10 = arith.truncf %8 : vector<1248x49xf32> to vector<1248x49xbf16>
    %cst_5 = arith.constant dense<0.000000e+00> : vector<208x49xf32>
    %11 = tpu.matmul %9, %10, %cst_5 {dimension_numbers = #tpu.dot_dimension_numbers<[1], [0], [0], [1], [0, 0, 1, 1], [], []>} : vector<208x1248xbf16>, vector<1248x49xbf16>, vector<208x49xf32> -> vector<208x49xf32>
    %cst_6 = arith.constant dense<0.000000e+00> : vector<208xf32>
    %12 = vector.multi_reduction <add>, %11, %cst_6 [1] : vector<208x49xf32> to vector<208xf32>
    %13 = vector.shape_cast %12 : vector<208xf32> to vector<208x1xf32>
    %cst_7 = arith.constant 4.900000e+01 : f32
    %14 = vector.broadcast %cst_7 : f32 to vector<208x1xf32>
    %15 = arith.divf %13, %14 : vector<208x1xf32>
    %16 = arith.mulf %11, %11 : vector<208x49xf32>
    %cst_8 = arith.constant dense<0.000000e+00> : vector<208xf32>
    %17 = vector.multi_reduction <add>, %16, %cst_8 [1] : vector<208x49xf32> to vector<208xf32>
    %18 = vector.shape_cast %17 : vector<208xf32> to vector<208x1xf32>
    %cst_9 = arith.constant 4.900000e+01 : f32
    %19 = vector.broadcast %cst_9 : f32 to vector<208x1xf32>
    %20 = arith.divf %18, %19 : vector<208x1xf32>
    %21 = arith.mulf %15, %15 : vector<208x1xf32>
    %22 = arith.subf %20, %21 : vector<208x1xf32>
    %23 = vector.broadcast %15 : vector<208x1xf32> to vector<208x49xf32>
    %24 = arith.subf %11, %23 : vector<208x49xf32>
    %cst_10 = arith.constant 9.99999974E-6 : f32
    %25 = vector.broadcast %cst_10 : f32 to vector<208x1xf32>
    %26 = arith.addf %22, %25 : vector<208x1xf32>
    %27 = math.rsqrt %26 : vector<208x1xf32>
    %28 = vector.broadcast %27 : vector<208x1xf32> to vector<208x49xf32>
    %29 = arith.mulf %24, %28 : vector<208x49xf32>
    %c0_11 = arith.constant 0 : index
    %c0_12 = arith.constant 0 : index
    %30 = vector.load %arg4[%c0_11, %c0_12] : memref<208x1xf32, #tpu.memory_space<vmem>>, vector<208x1xf32>
    %31 = vector.broadcast %30 : vector<208x1xf32> to vector<208x49xf32>
    %32 = arith.mulf %29, %31 : vector<208x49xf32>
    %c0_13 = arith.constant 0 : index
    %c0_14 = arith.constant 0 : index
    %33 = vector.load %arg5[%c0_13, %c0_14] : memref<208x1xf32, #tpu.memory_space<vmem>>, vector<208x1xf32>
    %34 = vector.broadcast %33 : vector<208x1xf32> to vector<208x49xf32>
    %35 = arith.addf %32, %34 : vector<208x49xf32>
    %c0_15 = arith.constant 0 : index
    %c0_16 = arith.constant 0 : index
    %36 = vector.load %arg2[%c0_15, %c0_16] : memref<208x49xf32, #tpu.memory_space<vmem>>, vector<208x49xf32>
    %37 = arith.addf %35, %36 : vector<208x49xf32>
    %c0_17 = arith.constant 0 : index
    %c0_18 = arith.constant 0 : index
    %38 = vector.load %arg6[%c0_17, %c0_18] : memref<1248x208xbf16, #tpu.memory_space<vmem>>, vector<1248x208xbf16>
    %39 = arith.truncf %37 : vector<208x49xf32> to vector<208x49xbf16>
    %cst_19 = arith.constant dense<0.000000e+00> : vector<1248x49xf32>
    %40 = tpu.matmul %38, %39, %cst_19 {dimension_numbers = #tpu.dot_dimension_numbers<[1], [0], [0], [1], [0, 0, 1, 1], [], []>} : vector<1248x208xbf16>, vector<208x49xbf16>, vector<1248x49xf32> -> vector<1248x49xf32>
    %c0_20 = arith.constant 0 : index
    %c0_21 = arith.constant 0 : index
    %41 = vector.load %arg7[%c0_20, %c0_21] : memref<1248x49xf32, #tpu.memory_space<vmem>>, vector<1248x49xf32>
    tpu.vector_store %arg7[%c0_20, %c0_21], %40 {strides = array<i32>} : memref<1248x49xf32, #tpu.memory_space<vmem>>, vector<1248x49xf32>,
    return
  }
}

</mosaic_0001>

<llo_original>
// kernel: fused_forward.1
$region0: #{fused_forward.1}
  #allocation0 [shape = 'u32[]', space=smem, size = 0x4, offset = 0x4, fixed_abs, tag = 'smem constant byte address 0x4 - core index']
  #allocation1 [shape = 'u32[144,128]{1,0:T(1,128)}', space=vmem, size = 0x12000, scoped, tag = 'internal scratch']
  %s0 = inlined_call_operand.vmem [shape: f32[1248,1], index: 0, kind: input, shape index: {}]
  %s1 = inlined_call_operand.vmem [shape: f32[1248,49], index: 1, kind: input, shape index: {}]
  %s2 = inlined_call_operand.vmem [shape: f32[208,49], index: 2, kind: input, shape index: {}]
  %s3 = inlined_call_operand.vmem [shape: bf16[208,1248], index: 3, kind: input, shape index: {}]
  %s4 = inlined_call_operand.vmem [shape: f32[208,1], index: 4, kind: input, shape index: {}]
  %s5 = inlined_call_operand.vmem [shape: f32[208,1], index: 5, kind: input, shape index: {}]
  %s6 = inlined_call_operand.vmem [shape: bf16[1248,208], index: 6, kind: input, shape index: {}]
  %s7 = inlined_call_operand.vmem [shape: f32[1248,49], index: 7, kind: output, shape index: {}]
  %s8 = sld [smem:[#allocation0]]
  $region38: #{fused_forward.1} parent=0
    _
  %s10 = ssub.s32 1, %s8
  %s11 = scalar_select 0, %s10, %s8
  // Predicated region
  $region2: #{fused_forward.1} parent=0 // pred_check
    _
  $region3: #{fused_forward.1} parent=0 // pred_check_branch
    %13 = sbr.rel (0) target = $region5
  $region4: #{fused_forward.1} parent=0 // pred_region
    _
  $region5: #{fused_forward.1} parent=0 // pred_fallthru
    _
  // Predicated region
  $region6: #{fused_forward.1} parent=0 // pred_check
    _
  $region7: #{fused_forward.1} parent=0 // pred_check_branch
    %15 = sbr.rel (0) target = $region9
  $region8: #{fused_forward.1} parent=0 // pred_region
    _
  $region9: #{fused_forward.1} parent=0 // pred_fallthru
    _
  // Predicated region
  $region10: #{fused_forward.1} parent=0 // pred_check
    _
  $region11: #{fused_forward.1} parent=0 // pred_check_branch
    %17 = sbr.rel (0) target = $region13
  $region12: #{fused_forward.1} parent=0 // pred_region
    _
  $region13: #{fused_forward.1} parent=0 // pred_fallthru
    _
  // Predicated region
  $region14: #{fused_forward.1} parent=0 // pred_check
    _
  $region15: #{fused_forward.1} parent=0 // pred_check_branch
    %19 = sbr.rel (0) target = $region17
  $region16: #{fused_forward.1} parent=0 // pred_region
    _
  $region17: #{fused_forward.1} parent=0 // pred_fallthru
    _
  // Predicated region
  $region18: #{fused_forward.1} parent=0 // pred_check
    _
  $region19: #{fused_forward.1} parent=0 // pred_check_branch
    %21 = sbr.rel (0) target = $region21
  $region20: #{fused_forward.1} parent=0 // pred_region
    _
  $region21: #{fused_forward.1} parent=0 // pred_fallthru
    _
  // Predicated region
  $region22: #{fused_forward.1} parent=0 // pred_check
    _
  $region23: #{fused_forward.1} parent=0 // pred_check_branch
    %23 = sbr.rel (0) target = $region25
  $region24: #{fused_forward.1} parent=0 // pred_region
    _
  $region25: #{fused_forward.1} parent=0 // pred_fallthru
    _
  // Predicated region
  $region26: #{fused_forward.1} parent=0 // pred_check
    _
  $region27: #{fused_forward.1} parent=0 // pred_check_branch
    %25 = sbr.rel (0) target = $region29
  $region28: #{fused_forward.1} parent=0 // pred_region
    _
  $region29: #{fused_forward.1} parent=0 // pred_fallthru
    _
  %v27 = vld [vmem:[%s0] sm:$0xff]
  %v28 = vld [vmem:[%s0 + $0x8] sm:$0xff]
  %v29 = vld [vmem:[%s0 + $0x10] sm:$0xff]
  %v30 = vld [vmem:[%s0 + $0x18] sm:$0xff]
  %v31 = vld [vmem:[%s0 + $0x20] sm:$0xff]
  %v32 = vld [vmem:[%s0 + $0x28] sm:$0xff]
  %v33 = vld [vmem:[%s0 + $0x30] sm:$0xff]
  %v34 = vld [vmem:[%s0 + $0x38] sm:$0xff]
  %v35 = vld [vmem:[%s0 + $0x40] sm:$0xff]
  %v36 = vld [vmem:[%s0 + $0x48] sm:$0xff]
  %v37 = vld [vmem:[%s0 + $0x50] sm:$0xff]
  %v38 = vld [vmem:[%s0 + $0x58] sm:$0xff]
  %v39 = vld [vmem:[%s0 + $0x60] sm:$0xff]
  %v40 = vld [vmem:[%s0 + $0x68] sm:$0xff]
  %v41 = vld [vmem:[%s0 + $0x70] sm:$0xff]
  %v42 = vld [vmem:[%s0 + $0x78] sm:$0xff]
  %v43 = vld [vmem:[%s0 + $0x80] sm:$0xff]
  %v44 = vld [vmem:[%s0 + $0x88] sm:$0xff]
  %v45 = vld [vmem:[%s0 + $0x90] sm:$0xff]
  %v46 = vld [vmem:[%s0 + $0x98] sm:$0xff]
  %v47 = vld [vmem:[%s0 + $0xa0] sm:$0xff]
  %v48 = vld [vmem:[%s0 + $0xa8] sm:$0xff]
  %v49 = vld [vmem:[%s0 + $0xb0] sm:$0xff]
  %v50 = vld [vmem:[%s0 + $0xb8] sm:$0xff]
  %v51 = vld [vmem:[%s0 + $0xc0] sm:$0xff]
  %v52 = vld [vmem:[%s0 + $0xc8] sm:$0xff]
  %v53 = vld [vmem:[%s0 + $0xd0] sm:$0xff]
  %v54 = vld [vmem:[%s0 + $0xd8] sm:$0xff]
  %v55 = vld [vmem:[%s0 + $0xe0] sm:$0xff]
  %v56 = vld [vmem:[%s0 + $0xe8] sm:$0xff]
  %v57 = vld [vmem:[%s0 + $0xf0] sm:$0xff]
  %v58 = vld [vmem:[%s0 + $0xf8] sm:$0xff]
  %v59 = vld [vmem:[%s0 + $0x100] sm:$0xff]
  %v60 = vld [vmem:[%s0 + $0x108] sm:$0xff]
  %v61 = vld [vmem:[%s0 + $0x110] sm:$0xff]
  %v62 = vld [vmem:[%s0 + $0x118] sm:$0xff]
  %v63 = vld [vmem:[%s0 + $0x120] sm:$0xff]
  %v64 = vld [vmem:[%s0 + $0x128] sm:$0xff]
  %v65 = vld [vmem:[%s0 + $0x130] sm:$0xff]
  %v66 = vld [vmem:[%s0 + $0x138] sm:$0xff]
  %v67 = vld [vmem:[%s0 + $0x140] sm:$0xff]
  %v68 = vld [vmem:[%s0 + $0x148] sm:$0xff]
  %v69 = vld [vmem:[%s0 + $0x150] sm:$0xff]
  %v70 = vld [vmem:[%s0 + $0x158] sm:$0xff]
  %v71 = vld [vmem:[%s0 + $0x160] sm:$0xff]
  %v72 = vld [vmem:[%s0 + $0x168] sm:$0xff]
  %v73 = vld [vmem:[%s0 + $0x170] sm:$0xff]
  %v74 = vld [vmem:[%s0 + $0x178] sm:$0xff]
  %v75 = vld [vmem:[%s0 + $0x180] sm:$0xff]
  %v76 = vld [vmem:[%s0 + $0x188] sm:$0xff]
  %v77 = vld [vmem:[%s0 + $0x190] sm:$0xff]
  %v78 = vld [vmem:[%s0 + $0x198] sm:$0xff]
  %v79 = vld [vmem:[%s0 + $0x1a0] sm:$0xff]
  %v80 = vld [vmem:[%s0 + $0x1a8] sm:$0xff]
  %v81 = vld [vmem:[%s0 + $0x1b0] sm:$0xff]
  %v82 = vld [vmem:[%s0 + $0x1b8] sm:$0xff]
  %v83 = vld [vmem:[%s0 + $0x1c0] sm:$0xff]
  %v84 = vld [vmem:[%s0 + $0x1c8] sm:$0xff]
  %v85 = vld [vmem:[%s0 + $0x1d0] sm:$0xff]
  %v86 = vld [vmem:[%s0 + $0x1d8] sm:$0xff]
  %v87 = vld [vmem:[%s0 + $0x1e0] sm:$0xff]
  %v88 = vld [vmem:[%s0 + $0x1e8] sm:$0xff]
  %v89 = vld [vmem:[%s0 + $0x1f0] sm:$0xff]
  %v90 = vld [vmem:[%s0 + $0x1f8] sm:$0xff]
  %v91 = vld [vmem:[%s0 + $0x200] sm:$0xff]
  %v92 = vld [vmem:[%s0 + $0x208] sm:$0xff]
  %v93 = vld [vmem:[%s0 + $0x210] sm:$0xff]
  %v94 = vld [vmem:[%s0 + $0x218] sm:$0xff]
  %v95 = vld [vmem:[%s0 + $0x220] sm:$0xff]
  %v96 = vld [vmem:[%s0 + $0x228] sm:$0xff]
  %v97 = vld [vmem:[%s0 + $0x230] sm:$0xff]
  %v98 = vld [vmem:[%s0 + $0x238] sm:$0xff]
  %v99 = vld [vmem:[%s0 + $0x240] sm:$0xff]
  %v100 = vld [vmem:[%s0 + $0x248] sm:$0xff]
  %v101 = vld [vmem:[%s0 + $0x250] sm:$0xff]
  %v102 = vld [vmem:[%s0 + $0x258] sm:$0xff]
  %v103 = vld [vmem:[%s0 + $0x260] sm:$0xff]
  %v104 = vld [vmem:[%s0 + $0x268] sm:$0xff]
  %v105 = vld [vmem:[%s0 + $0x270] sm:$0xff]
  %v106 = vld [vmem:[%s0 + $0x278] sm:$0xff]
  %v107 = vld [vmem:[%s0 + $0x280] sm:$0xff]
  %v108 = vld [vmem:[%s0 + $0x288] sm:$0xff]
  %v109 = vld [vmem:[%s0 + $0x290] sm:$0xff]
  %v110 = vld [vmem:[%s0 + $0x298] sm:$0xff]
  %v111 = vld [vmem:[%s0 + $0x2a0] sm:$0xff]
  %v112 = vld [vmem:[%s0 + $0x2a8] sm:$0xff]
  %v113 = vld [vmem:[%s0 + $0x2b0] sm:$0xff]
  %v114 = vld [vmem:[%s0 + $0x2b8] sm:$0xff]
  %v115 = vld [vmem:[%s0 + $0x2c0] sm:$0xff]
  %v116 = vld [vmem:[%s0 + $0x2c8] sm:$0xff]
  %v117 = vld [vmem:[%s0 + $0x2d0] sm:$0xff]
  %v118 = vld [vmem:[%s0 + $0x2d8] sm:$0xff]
  %v119 = vld [vmem:[%s0 + $0x2e0] sm:$0xff]
  %v120 = vld [vmem:[%s0 + $0x2e8] sm:$0xff]
  %v121 = vld [vmem:[%s0 + $0x2f0] sm:$0xff]
  %v122 = vld [vmem:[%s0 + $0x2f8] sm:$0xff]
  %v123 = vld [vmem:[%s0 + $0x300] sm:$0xff]
  %v124 = vld [vmem:[%s0 + $0x308] sm:$0xff]
  %v125 = vld [vmem:[%s0 + $0x310] sm:$0xff]
  %v126 = vld [vmem:[%s0 + $0x318] sm:$0xff]
  %v127 = vld [vmem:[%s0 + $0x320] sm:$0xff]
  %v128 = vld [vmem:[%s0 + $0x328] sm:$0xff]
  %v129 = vld [vmem:[%s0 + $0x330] sm:$0xff]
  %v130 = vld [vmem:[%s0 + $0x338] sm:$0xff]
  %v131 = vld [vmem:[%s0 + $0x340] sm:$0xff]
  %v132 = vld [vmem:[%s0 + $0x348] sm:$0xff]
  %v133 = vld [vmem:[%s0 + $0x350] sm:$0xff]
  %v134 = vld [vmem:[%s0 + $0x358] sm:$0xff]
  %v135 = vld [vmem:[%s0 + $0x360] sm:$0xff]
  %v136 = vld [vmem:[%s0 + $0x368] sm:$0xff]
  %v137 = vld [vmem:[%s0 + $0x370] sm:$0xff]
  %v138 = vld [vmem:[%s0 + $0x378] sm:$0xff]
  %v139 = vld [vmem:[%s0 + $0x380] sm:$0xff]
  %v140 = vld [vmem:[%s0 + $0x388] sm:$0xff]
  %v141 = vld [vmem:[%s0 + $0x390] sm:$0xff]
  %v142 = vld [vmem:[%s0 + $0x398] sm:$0xff]
  %v143 = vld [vmem:[%s0 + $0x3a0] sm:$0xff]
  %v144 = vld [vmem:[%s0 + $0x3a8] sm:$0xff]
  %v145 = vld [vmem:[%s0 + $0x3b0] sm:$0xff]
  %v146 = vld [vmem:[%s0 + $0x3b8] sm:$0xff]
  %v147 = vld [vmem:[%s0 + $0x3c0] sm:$0xff]
  %v148 = vld [vmem:[%s0 + $0x3c8] sm:$0xff]
  %v149 = vld [vmem:[%s0 + $0x3d0] sm:$0xff]
  %v150 = vld [vmem:[%s0 + $0x3d8] sm:$0xff]
  %v151 = vld [vmem:[%s0 + $0x3e0] sm:$0xff]
  %v152 = vld [vmem:[%s0 + $0x3e8] sm:$0xff]
  %v153 = vld [vmem:[%s0 + $0x3f0] sm:$0xff]
  %v154 = vld [vmem:[%s0 + $0x3f8] sm:$0xff]
  %v155 = vld [vmem:[%s0 + $0x400] sm:$0xff]
  %v156 = vld [vmem:[%s0 + $0x408] sm:$0xff]
  %v157 = vld [vmem:[%s0 + $0x410] sm:$0xff]
  %v158 = vld [vmem:[%s0 + $0x418] sm:$0xff]
  %v159 = vld [vmem:[%s0 + $0x420] sm:$0xff]
  %v160 = vld [vmem:[%s0 + $0x428] sm:$0xff]
  %v161 = vld [vmem:[%s0 + $0x430] sm:$0xff]
  %v162 = vld [vmem:[%s0 + $0x438] sm:$0xff]
  %v163 = vld [vmem:[%s0 + $0x440] sm:$0xff]
  %v164 = vld [vmem:[%s0 + $0x448] sm:$0xff]
  %v165 = vld [vmem:[%s0 + $0x450] sm:$0xff]
  %v166 = vld [vmem:[%s0 + $0x458] sm:$0xff]
  %v167 = vld [vmem:[%s0 + $0x460] sm:$0xff]
  %v168 = vld [vmem:[%s0 + $0x468] sm:$0xff]
  %v169 = vld [vmem:[%s0 + $0x470] sm:$0xff]
  %v170 = vld [vmem:[%s0 + $0x478] sm:$0xff]
  %v171 = vld [vmem:[%s0 + $0x480] sm:$0xff]
  %v172 = vld [vmem:[%s0 + $0x488] sm:$0xff]
  %v173 = vld [vmem:[%s0 + $0x490] sm:$0xff]
  %v174 = vld [vmem:[%s0 + $0x498] sm:$0xff]
  %v175 = vld [vmem:[%s0 + $0x4a0] sm:$0xff]
  %v176 = vld [vmem:[%s0 + $0x4a8] sm:$0xff]
  %v177 = vld [vmem:[%s0 + $0x4b0] sm:$0xff]
  %v178 = vld [vmem:[%s0 + $0x4b8] sm:$0xff]
  %v179 = vld [vmem:[%s0 + $0x4c0] sm:$0xff]
  %v180 = vld [vmem:[%s0 + $0x4c8] sm:$0xff]
  %v181 = vld [vmem:[%s0 + $0x4d0] sm:$0xff]
  %v182 = vld [vmem:[%s0 + $0x4d8] sm:$0xff]
  %v183 = vxor.u32 %v27, 2147483648
  %v184 = vxor.u32 %v28, 2147483648
  %v185 = vxor.u32 %v29, 2147483648
  %v186 = vxor.u32 %v30, 2147483648
  %v187 = vxor.u32 %v31, 2147483648
  %v188 = vxor.u32 %v32, 2147483648
  %v189 = vxor.u32 %v33, 2147483648
  %v190 = vxor.u32 %v34, 2147483648
  %v191 = vxor.u32 %v35, 2147483648
  %v192 = vxor.u32 %v36, 2147483648
  %v193 = vxor.u32 %v37, 2147483648
  %v194 = vxor.u32 %v38, 2147483648
  %v195 = vxor.u32 %v39, 2147483648
  %v196 = vxor.u32 %v40, 2147483648
  %v197 = vxor.u32 %v41, 2147483648
  %v198 = vxor.u32 %v42, 2147483648
  %v199 = vxor.u32 %v43, 2147483648
  %v200 = vxor.u32 %v44, 2147483648
  %v201 = vxor.u32 %v45, 2147483648
  %v202 = vxor.u32 %v46, 2147483648
  %v203 = vxor.u32 %v47, 2147483648
  %v204 = vxor.u32 %v48, 2147483648
  %v205 = vxor.u32 %v49, 2147483648
  %v206 = vxor.u32 %v50, 2147483648
  %v207 = vxor.u32 %v51, 2147483648
  %v208 = vxor.u32 %v52, 2147483648
  %v209 = vxor.u32 %v53, 2147483648
  %v210 = vxor.u32 %v54, 2147483648
  %v211 = vxor.u32 %v55, 2147483648
  %v212 = vxor.u32 %v56, 2147483648
  %v213 = vxor.u32 %v57, 2147483648
  %v214 = vxor.u32 %v58, 2147483648
  %v215 = vxor.u32 %v59, 2147483648
  %v216 = vxor.u32 %v60, 2147483648
  %v217 = vxor.u32 %v61, 2147483648
  %v218 = vxor.u32 %v62, 2147483648
  %v219 = vxor.u32 %v63, 2147483648
  %v220 = vxor.u32 %v64, 2147483648
  %v221 = vxor.u32 %v65, 2147483648
  %v222 = vxor.u32 %v66, 2147483648
  %v223 = vxor.u32 %v67, 2147483648
  %v224 = vxor.u32 %v68, 2147483648
  %v225 = vxor.u32 %v69, 2147483648
  %v226 = vxor.u32 %v70, 2147483648
  %v227 = vxor.u32 %v71, 2147483648
  %v228 = vxor.u32 %v72, 2147483648
  %v229 = vxor.u32 %v73, 2147483648
  %v230 = vxor.u32 %v74, 2147483648
  %v231 = vxor.u32 %v75, 2147483648
  %v232 = vxor.u32 %v76, 2147483648
  %v233 = vxor.u32 %v77, 2147483648
  %v234 = vxor.u32 %v78, 2147483648
  %v235 = vxor.u32 %v79, 2147483648
  %v236 = vxor.u32 %v80, 2147483648
  %v237 = vxor.u32 %v81, 2147483648
  %v238 = vxor.u32 %v82, 2147483648
  %v239 = vxor.u32 %v83, 2147483648
  %v240 = vxor.u32 %v84, 2147483648
  %v241 = vxor.u32 %v85, 2147483648
  %v242 = vxor.u32 %v86, 2147483648
  %v243 = vxor.u32 %v87, 2147483648
  %v244 = vxor.u32 %v88, 2147483648
  %v245 = vxor.u32 %v89, 2147483648
  %v246 = vxor.u32 %v90, 2147483648
  %v247 = vxor.u32 %v91, 2147483648
  %v248 = vxor.u32 %v92, 2147483648
  %v249 = vxor.u32 %v93, 2147483648
  %v250 = vxor.u32 %v94, 2147483648
  %v251 = vxor.u32 %v95, 2147483648
  %v252 = vxor.u32 %v96, 2147483648
  %v253 = vxor.u32 %v97, 2147483648
  %v254 = vxor.u32 %v98, 2147483648
  %v255 = vxor.u32 %v99, 2147483648
  %v256 = vxor.u32 %v100, 2147483648
  %v257 = vxor.u32 %v101, 2147483648
  %v258 = vxor.u32 %v102, 2147483648
  %v259 = vxor.u32 %v103, 2147483648
  %v260 = vxor.u32 %v104, 2147483648
  %v261 = vxor.u32 %v105, 2147483648
  %v262 = vxor.u32 %v106, 2147483648
  %v263 = vxor.u32 %v107, 2147483648
  %v264 = vxor.u32 %v108, 2147483648
  %v265 = vxor.u32 %v109, 2147483648
  %v266 = vxor.u32 %v110, 2147483648
  %v267 = vxor.u32 %v111, 2147483648
  %v268 = vxor.u32 %v112, 2147483648
  %v269 = vxor.u32 %v113, 2147483648
  %v270 = vxor.u32 %v114, 2147483648
  %v271 = vxor.u32 %v115, 2147483648
  %v272 = vxor.u32 %v116, 2147483648
  %v273 = vxor.u32 %v117, 2147483648
  %v274 = vxor.u32 %v118, 2147483648
  %v275 = vxor.u32 %v119, 2147483648
  %v276 = vxor.u32 %v120, 2147483648
  %v277 = vxor.u32 %v121, 2147483648
  %v278 = vxor.u32 %v122, 2147483648
  %v279 = vxor.u32 %v123, 2147483648
  %v280 = vxor.u32 %v124, 2147483648
  %v281 = vxor.u32 %v125, 2147483648
  %v282 = vxor.u32 %v126, 2147483648
  %v283 = vxor.u32 %v127, 2147483648
  %v284 = vxor.u32 %v128, 2147483648
  %v285 = vxor.u32 %v129, 2147483648
  %v286 = vxor.u32 %v130, 2147483648
  %v287 = vxor.u32 %v131, 2147483648
  %v288 = vxor.u32 %v132, 2147483648
  %v289 = vxor.u32 %v133, 2147483648
  %v290 = vxor.u32 %v134, 2147483648
  %v291 = vxor.u32 %v135, 2147483648
  %v292 = vxor.u32 %v136, 2147483648
  %v293 = vxor.u32 %v137, 2147483648
  %v294 = vxor.u32 %v138, 2147483648
  %v295 = vxor.u32 %v139, 2147483648
  %v296 = vxor.u32 %v140, 2147483648
  %v297 = vxor.u32 %v141, 2147483648
  %v298 = vxor.u32 %v142, 2147483648
  %v299 = vxor.u32 %v143, 2147483648
  %v300 = vxor.u32 %v144, 2147483648
  %v301 = vxor.u32 %v145, 2147483648
  %v302 = vxor.u32 %v146, 2147483648
  %v303 = vxor.u32 %v147, 2147483648
  %v304 = vxor.u32 %v148, 2147483648
  %v305 = vxor.u32 %v149, 2147483648
  %v306 = vxor.u32 %v150, 2147483648
  %v307 = vxor.u32 %v151, 2147483648
  %v308 = vxor.u32 %v152, 2147483648
  %v309 = vxor.u32 %v153, 2147483648
  %v310 = vxor.u32 %v154, 2147483648
  %v311 = vxor.u32 %v155, 2147483648
  %v312 = vxor.u32 %v156, 2147483648
  %v313 = vxor.u32 %v157, 2147483648
  %v314 = vxor.u32 %v158, 2147483648
  %v315 = vxor.u32 %v159, 2147483648
  %v316 = vxor.u32 %v160, 2147483648
  %v317 = vxor.u32 %v161, 2147483648
  %v318 = vxor.u32 %v162, 2147483648
  %v319 = vxor.u32 %v163, 2147483648
  %v320 = vxor.u32 %v164, 2147483648
  %v321 = vxor.u32 %v165, 2147483648
  %v322 = vxor.u32 %v166, 2147483648
  %v323 = vxor.u32 %v167, 2147483648
  %v324 = vxor.u32 %v168, 2147483648
  %v325 = vxor.u32 %v169, 2147483648
  %v326 = vxor.u32 %v170, 2147483648
  %v327 = vxor.u32 %v171, 2147483648
  %v328 = vxor.u32 %v172, 2147483648
  %v329 = vxor.u32 %v173, 2147483648
  %v330 = vxor.u32 %v174, 2147483648
  %v331 = vxor.u32 %v175, 2147483648
  %v332 = vxor.u32 %v176, 2147483648
  %v333 = vxor.u32 %v177, 2147483648
  %v334 = vxor.u32 %v178, 2147483648
  %v335 = vxor.u32 %v179, 2147483648
  %v336 = vxor.u32 %v180, 2147483648
  %v337 = vxor.u32 %v181, 2147483648
  %v338 = vxor.u32 %v182, 2147483648
  %v339 = vmul.f32 %v183, 1.442695
  %v340 = vpow.pop %v339
  %v341 = vmul.f32 %v184, 1.442695
  %v342 = vpow.pop %v341
  %v343 = vmul.f32 %v185, 1.442695
  %v344 = vpow.pop %v343
  %v345 = vmul.f32 %v186, 1.442695
  %v346 = vpow.pop %v345
  %v347 = vmul.f32 %v187, 1.442695
  %v348 = vpow.pop %v347
  %v349 = vmul.f32 %v188, 1.442695
  %v350 = vpow.pop %v349
  %v351 = vmul.f32 %v189, 1.442695
  %v352 = vpow.pop %v351
  %v353 = vmul.f32 %v190, 1.442695
  %v354 = vpow.pop %v353
  %v355 = vmul.f32 %v191, 1.442695
  %v356 = vpow.pop %v355
  %v357 = vmul.f32 %v192, 1.442695
  %v358 = vpow.pop %v357
  %v359 = vmul.f32 %v193, 1.442695
  %v360 = vpow.pop %v359
  %v361 = vmul.f32 %v194, 1.442695
  %v362 = vpow.pop %v361
  %v363 = vmul.f32 %v195, 1.442695
  %v364 = vpow.pop %v363
  %v365 = vmul.f32 %v196, 1.442695
  %v366 = vpow.pop %v365
  %v367 = vmul.f32 %v197, 1.442695
  %v368 = vpow.pop %v367
  %v369 = vmul.f32 %v198, 1.442695
  %v370 = vpow.pop %v369
  %v371 = vmul.f32 %v199, 1.442695
  %v372 = vpow.pop %v371
  %v373 = vmul.f32 %v200, 1.442695
  %v374 = vpow.pop %v373
  %v375 = vmul.f32 %v201, 1.442695
  %v376 = vpow.pop %v375
  %v377 = vmul.f32 %v202, 1.442695
  %v378 = vpow.pop %v377
  %v379 = vmul.f32 %v203, 1.442695
  %v380 = vpow.pop %v379
  %v381 = vmul.f32 %v204, 1.442695
  %v382 = vpow.pop %v381
  %v383 = vmul.f32 %v205, 1.442695
  %v384 = vpow.pop %v383
  %v385 = vmul.f32 %v206, 1.442695
  %v386 = vpow.pop %v385
  %v387 = vmul.f32 %v207, 1.442695
  %v388 = vpow.pop %v387
  %v389 = vmul.f32 %v208, 1.442695
  %v390 = vpow.pop %v389
  %v391 = vmul.f32 %v209, 1.442695
  %v392 = vpow.pop %v391
  %v393 = vmul.f32 %v210, 1.442695
  %v394 = vpow.pop %v393
  %v395 = vmul.f32 %v211, 1.442695
  %v396 = vpow.pop %v395
  %v397 = vmul.f32 %v212, 1.442695
  %v398 = vpow.pop %v397
  %v399 = vmul.f32 %v213, 1.442695
  %v400 = vpow.pop %v399
  %v401 = vmul.f32 %v214, 1.442695
  %v402 = vpow.pop %v401
  %v403 = vmul.f32 %v215, 1.442695
  %v404 = vpow.pop %v403
  %v405 = vmul.f32 %v216, 1.442695
  %v406 = vpow.pop %v405
  %v407 = vmul.f32 %v217, 1.442695
  %v408 = vpow.pop %v407
  %v409 = vmul.f32 %v218, 1.442695
  %v410 = vpow.pop %v409
  %v411 = vmul.f32 %v219, 1.442695
  %v412 = vpow.pop %v411
  %v413 = vmul.f32 %v220, 1.442695
  %v414 = vpow.pop %v413
  %v415 = vmul.f32 %v221, 1.442695
  %v416 = vpow.pop %v415
  %v417 = vmul.f32 %v222, 1.442695
  %v418 = vpow.pop %v417
  %v419 = vmul.f32 %v223, 1.442695
  %v420 = vpow.pop %v419
  %v421 = vmul.f32 %v224, 1.442695
  %v422 = vpow.pop %v421
  %v423 = vmul.f32 %v225, 1.442695
  %v424 = vpow.pop %v423
  %v425 = vmul.f32 %v226, 1.442695
  %v426 = vpow.pop %v425
  %v427 = vmul.f32 %v227, 1.442695
  %v428 = vpow.pop %v427
  %v429 = vmul.f32 %v228, 1.442695
  %v430 = vpow.pop %v429
  %v431 = vmul.f32 %v229, 1.442695
  %v432 = vpow.pop %v431
  %v433 = vmul.f32 %v230, 1.442695
  %v434 = vpow.pop %v433
  %v435 = vmul.f32 %v231, 1.442695
  %v436 = vpow.pop %v435
  %v437 = vmul.f32 %v232, 1.442695
  %v438 = vpow.pop %v437
  %v439 = vmul.f32 %v233, 1.442695
  %v440 = vpow.pop %v439
  %v441 = vmul.f32 %v234, 1.442695
  %v442 = vpow.pop %v441
  %v443 = vmul.f32 %v235, 1.442695
  %v444 = vpow.pop %v443
  %v445 = vmul.f32 %v236, 1.442695
  %v446 = vpow.pop %v445
  %v447 = vmul.f32 %v237, 1.442695
  %v448 = vpow.pop %v447
  %v449 = vmul.f32 %v238, 1.442695
  %v450 = vpow.pop %v449
  %v451 = vmul.f32 %v239, 1.442695
  %v452 = vpow.pop %v451
  %v453 = vmul.f32 %v240, 1.442695
  %v454 = vpow.pop %v453
  %v455 = vmul.f32 %v241, 1.442695
  %v456 = vpow.pop %v455
  %v457 = vmul.f32 %v242, 1.442695
  %v458 = vpow.pop %v457
  %v459 = vmul.f32 %v243, 1.442695
  %v460 = vpow.pop %v459
  %v461 = vmul.f32 %v244, 1.442695
  %v462 = vpow.pop %v461
  %v463 = vmul.f32 %v245, 1.442695
  %v464 = vpow.pop %v463
  %v465 = vmul.f32 %v246, 1.442695
  %v466 = vpow.pop %v465
  %v467 = vmul.f32 %v247, 1.442695
  %v468 = vpow.pop %v467
  %v469 = vmul.f32 %v248, 1.442695
  %v470 = vpow.pop %v469
  %v471 = vmul.f32 %v249, 1.442695
  %v472 = vpow.pop %v471
  %v473 = vmul.f32 %v250, 1.442695
  %v474 = vpow.pop %v473
  %v475 = vmul.f32 %v251, 1.442695
  %v476 = vpow.pop %v475
  %v477 = vmul.f32 %v252, 1.442695
  %v478 = vpow.pop %v477
  %v479 = vmul.f32 %v253, 1.442695
  %v480 = vpow.pop %v479
  %v481 = vmul.f32 %v254, 1.442695
  %v482 = vpow.pop %v481
  %v483 = vmul.f32 %v255, 1.442695
  %v484 = vpow.pop %v483
  %v485 = vmul.f32 %v256, 1.442695
  %v486 = vpow.pop %v485
  %v487 = vmul.f32 %v257, 1.442695
  %v488 = vpow.pop %v487
  %v489 = vmul.f32 %v258, 1.442695
  %v490 = vpow.pop %v489
  %v491 = vmul.f32 %v259, 1.442695
  %v492 = vpow.pop %v491
  %v493 = vmul.f32 %v260, 1.442695
  %v494 = vpow.pop %v493
  %v495 = vmul.f32 %v261, 1.442695
  %v496 = vpow.pop %v495
  %v497 = vmul.f32 %v262, 1.442695
  %v498 = vpow.pop %v497
  %v499 = vmul.f32 %v263, 1.442695
  %v500 = vpow.pop %v499
  %v501 = vmul.f32 %v264, 1.442695
  %v502 = vpow.pop %v501
  %v503 = vmul.f32 %v265, 1.442695
  %v504 = vpow.pop %v503
  %v505 = vmul.f32 %v266, 1.442695
  %v506 = vpow.pop %v505
  %v507 = vmul.f32 %v267, 1.442695
  %v508 = vpow.pop %v507
  %v509 = vmul.f32 %v268, 1.442695
  %v510 = vpow.pop %v509
  %v511 = vmul.f32 %v269, 1.442695
  %v512 = vpow.pop %v511
  %v513 = vmul.f32 %v270, 1.442695
  %v514 = vpow.pop %v513
  %v515 = vmul.f32 %v271, 1.442695
  %v516 = vpow.pop %v515
  %v517 = vmul.f32 %v272, 1.442695
  %v518 = vpow.pop %v517
  %v519 = vmul.f32 %v273, 1.442695
  %v520 = vpow.pop %v519
  %v521 = vmul.f32 %v274, 1.442695
  %v522 = vpow.pop %v521
  %v523 = vmul.f32 %v275, 1.442695
  %v524 = vpow.pop %v523
  %v525 = vmul.f32 %v276, 1.442695
  %v526 = vpow.pop %v525
  %v527 = vmul.f32 %v277, 1.442695
  %v528 = vpow.pop %v527
  %v529 = vmul.f32 %v278, 1.442695
  %v530 = vpow.pop %v529
  %v531 = vmul.f32 %v279, 1.442695
  %v532 = vpow.pop %v531
  %v533 = vmul.f32 %v280, 1.442695
  %v534 = vpow.pop %v533
  %v535 = vmul.f32 %v281, 1.442695
  %v536 = vpow.pop %v535
  %v537 = vmul.f32 %v282, 1.442695
  %v538 = vpow.pop %v537
  %v539 = vmul.f32 %v283, 1.442695
  %v540 = vpow.pop %v539
  %v541 = vmul.f32 %v284, 1.442695
  %v542 = vpow.pop %v541
  %v543 = vmul.f32 %v285, 1.442695
  %v544 = vpow.pop %v543
  %v545 = vmul.f32 %v286, 1.442695
  %v546 = vpow.pop %v545
  %v547 = vmul.f32 %v287, 1.442695
  %v548 = vpow.pop %v547
  %v549 = vmul.f32 %v288, 1.442695
  %v550 = vpow.pop %v549
  %v551 = vmul.f32 %v289, 1.442695
  %v552 = vpow.pop %v551
  %v553 = vmul.f32 %v290, 1.442695
  %v554 = vpow.pop %v553
  %v555 = vmul.f32 %v291, 1.442695
  %v556 = vpow.pop %v555
  %v557 = vmul.f32 %v292, 1.442695
  %v558 = vpow.pop %v557
  %v559 = vmul.f32 %v293, 1.442695
  %v560 = vpow.pop %v559
  %v561 = vmul.f32 %v294, 1.442695
  %v562 = vpow.pop %v561
  %v563 = vmul.f32 %v295, 1.442695
  %v564 = vpow.pop %v563
  %v565 = vmul.f32 %v296, 1.442695
  %v566 = vpow.pop %v565
  %v567 = vmul.f32 %v297, 1.442695
  %v568 = vpow.pop %v567
  %v569 = vmul.f32 %v298, 1.442695
  %v570 = vpow.pop %v569
  %v571 = vmul.f32 %v299, 1.442695
  %v572 = vpow.pop %v571
  %v573 = vmul.f32 %v300, 1.442695
  %v574 = vpow.pop %v573
  %v575 = vmul.f32 %v301, 1.442695
  %v576 = vpow.pop %v575
  %v577 = vmul.f32 %v302, 1.442695
  %v578 = vpow.pop %v577
  %v579 = vmul.f32 %v303, 1.442695
  %v580 = vpow.pop %v579
  %v581 = vmul.f32 %v304, 1.442695
  %v582 = vpow.pop %v581
  %v583 = vmul.f32 %v305, 1.442695
  %v584 = vpow.pop %v583
  %v585 = vmul.f32 %v306, 1.442695
  %v586 = vpow.pop %v585
  %v587 = vmul.f32 %v307, 1.442695
  %v588 = vpow.pop %v587
  %v589 = vmul.f32 %v308, 1.442695
  %v590 = vpow.pop %v589
  %v591 = vmul.f32 %v309, 1.442695
  %v592 = vpow.pop %v591
  %v593 = vmul.f32 %v310, 1.442695
  %v594 = vpow.pop %v593
  %v595 = vmul.f32 %v311, 1.442695
  %v596 = vpow.pop %v595
  %v597 = vmul.f32 %v312, 1.442695
  %v598 = vpow.pop %v597
  %v599 = vmul.f32 %v313, 1.442695
  %v600 = vpow.pop %v599
  %v601 = vmul.f32 %v314, 1.442695
  %v602 = vpow.pop %v601
  %v603 = vmul.f32 %v315, 1.442695
  %v604 = vpow.pop %v603
  %v605 = vmul.f32 %v316, 1.442695
  %v606 = vpow.pop %v605
  %v607 = vmul.f32 %v317, 1.442695
  %v608 = vpow.pop %v607
  %v609 = vmul.f32 %v318, 1.442695
  %v610 = vpow.pop %v609
  %v611 = vmul.f32 %v319, 1.442695
  %v612 = vpow.pop %v611
  %v613 = vmul.f32 %v320, 1.442695
  %v614 = vpow.pop %v613
  %v615 = vmul.f32 %v321, 1.442695
  %v616 = vpow.pop %v615
  %v617 = vmul.f32 %v322, 1.442695
  %v618 = vpow.pop %v617
  %v619 = vmul.f32 %v323, 1.442695
  %v620 = vpow.pop %v619
  %v621 = vmul.f32 %v324, 1.442695
  %v622 = vpow.pop %v621
  %v623 = vmul.f32 %v325, 1.442695
  %v624 = vpow.pop %v623
  %v625 = vmul.f32 %v326, 1.442695
  %v626 = vpow.pop %v625
  %v627 = vmul.f32 %v327, 1.442695
  %v628 = vpow.pop %v627
  %v629 = vmul.f32 %v328, 1.442695
  %v630 = vpow.pop %v629
  %v631 = vmul.f32 %v329, 1.442695
  %v632 = vpow.pop %v631
  %v633 = vmul.f32 %v330, 1.442695
  %v634 = vpow.pop %v633
  %v635 = vmul.f32 %v331, 1.442695
  %v636 = vpow.pop %v635
  %v637 = vmul.f32 %v332, 1.442695
  %v638 = vpow.pop %v637
  %v639 = vmul.f32 %v333, 1.442695
  %v640 = vpow.pop %v639
  %v641 = vmul.f32 %v334, 1.442695
  %v642 = vpow.pop %v641
  %v643 = vmul.f32 %v335, 1.442695
  %v644 = vpow.pop %v643
  %v645 = vmul.f32 %v336, 1.442695
  %v646 = vpow.pop %v645
  %v647 = vmul.f32 %v337, 1.442695
  %v648 = vpow.pop %v647
  %v649 = vmul.f32 %v338, 1.442695
  %v650 = vpow.pop %v649
  %v651 = vadd.f32 %v340, 1.0
  %v652 = vadd.f32 %v342, 1.0
  %v653 = vadd.f32 %v344, 1.0
  %v654 = vadd.f32 %v346, 1.0
  %v655 = vadd.f32 %v348, 1.0
  %v656 = vadd.f32 %v350, 1.0
  %v657 = vadd.f32 %v352, 1.0
  %v658 = vadd.f32 %v354, 1.0
  %v659 = vadd.f32 %v356, 1.0
  %v660 = vadd.f32 %v358, 1.0
  %v661 = vadd.f32 %v360, 1.0
  %v662 = vadd.f32 %v362, 1.0
  %v663 = vadd.f32 %v364, 1.0
  %v664 = vadd.f32 %v366, 1.0
  %v665 = vadd.f32 %v368, 1.0
  %v666 = vadd.f32 %v370, 1.0
  %v667 = vadd.f32 %v372, 1.0
  %v668 = vadd.f32 %v374, 1.0
  %v669 = vadd.f32 %v376, 1.0
  %v670 = vadd.f32 %v378, 1.0
  %v671 = vadd.f32 %v380, 1.0
  %v672 = vadd.f32 %v382, 1.0
  %v673 = vadd.f32 %v384, 1.0
  %v674 = vadd.f32 %v386, 1.0
  %v675 = vadd.f32 %v388, 1.0
  %v676 = vadd.f32 %v390, 1.0
  %v677 = vadd.f32 %v392, 1.0
  %v678 = vadd.f32 %v394, 1.0
  %v679 = vadd.f32 %v396, 1.0
  %v680 = vadd.f32 %v398, 1.0
  %v681 = vadd.f32 %v400, 1.0
  %v682 = vadd.f32 %v402, 1.0
  %v683 = vadd.f32 %v404, 1.0
  %v684 = vadd.f32 %v406, 1.0
  %v685 = vadd.f32 %v408, 1.0
  %v686 = vadd.f32 %v410, 1.0
  %v687 = vadd.f32 %v412, 1.0
  %v688 = vadd.f32 %v414, 1.0
  %v689 = vadd.f32 %v416, 1.0
  %v690 = vadd.f32 %v418, 1.0
  %v691 = vadd.f32 %v420, 1.0
  %v692 = vadd.f32 %v422, 1.0
  %v693 = vadd.f32 %v424, 1.0
  %v694 = vadd.f32 %v426, 1.0
  %v695 = vadd.f32 %v428, 1.0
  %v696 = vadd.f32 %v430, 1.0
  %v697 = vadd.f32 %v432, 1.0
  %v698 = vadd.f32 %v434, 1.0
  %v699 = vadd.f32 %v436, 1.0
  %v700 = vadd.f32 %v438, 1.0
  %v701 = vadd.f32 %v440, 1.0
  %v702 = vadd.f32 %v442, 1.0
  %v703 = vadd.f32 %v444, 1.0
  %v704 = vadd.f32 %v446, 1.0
  %v705 = vadd.f32 %v448, 1.0
  %v706 = vadd.f32 %v450, 1.0
  %v707 = vadd.f32 %v452, 1.0
  %v708 = vadd.f32 %v454, 1.0
  %v709 = vadd.f32 %v456, 1.0
  %v710 = vadd.f32 %v458, 1.0
  %v711 = vadd.f32 %v460, 1.0
  %v712 = vadd.f32 %v462, 1.0
  %v713 = vadd.f32 %v464, 1.0
  %v714 = vadd.f32 %v466, 1.0
  %v715 = vadd.f32 %v468, 1.0
  %v716 = vadd.f32 %v470, 1.0
  %v717 = vadd.f32 %v472, 1.0
  %v718 = vadd.f32 %v474, 1.0
  %v719 = vadd.f32 %v476, 1.0
  %v720 = vadd.f32 %v478, 1.0
  %v721 = vadd.f32 %v480, 1.0
  %v722 = vadd.f32 %v482, 1.0
  %v723 = vadd.f32 %v484, 1.0
  %v724 = vadd.f32 %v486, 1.0
  %v725 = vadd.f32 %v488, 1.0
  %v726 = vadd.f32 %v490, 1.0
  %v727 = vadd.f32 %v492, 1.0
  %v728 = vadd.f32 %v494, 1.0
  %v729 = vadd.f32 %v496, 1.0
  %v730 = vadd.f32 %v498, 1.0
  %v731 = vadd.f32 %v500, 1.0
  %v732 = vadd.f32 %v502, 1.0
  %v733 = vadd.f32 %v504, 1.0
  %v734 = vadd.f32 %v506, 1.0
  %v735 = vadd.f32 %v508, 1.0
  %v736 = vadd.f32 %v510, 1.0
  %v737 = vadd.f32 %v512, 1.0
  %v738 = vadd.f32 %v514, 1.0
  %v739 = vadd.f32 %v516, 1.0
  %v740 = vadd.f32 %v518, 1.0
  %v741 = vadd.f32 %v520, 1.0
  %v742 = vadd.f32 %v522, 1.0
  %v743 = vadd.f32 %v524, 1.0
  %v744 = vadd.f32 %v526, 1.0
  %v745 = vadd.f32 %v528, 1.0
  %v746 = vadd.f32 %v530, 1.0
  %v747 = vadd.f32 %v532, 1.0
  %v748 = vadd.f32 %v534, 1.0
  %v749 = vadd.f32 %v536, 1.0
  %v750 = vadd.f32 %v538, 1.0
  %v751 = vadd.f32 %v540, 1.0
  %v752 = vadd.f32 %v542, 1.0
  %v753 = vadd.f32 %v544, 1.0
  %v754 = vadd.f32 %v546, 1.0
  %v755 = vadd.f32 %v548, 1.0
  %v756 = vadd.f32 %v550, 1.0
  %v757 = vadd.f32 %v552, 1.0
  %v758 = vadd.f32 %v554, 1.0
  %v759 = vadd.f32 %v556, 1.0
  %v760 = vadd.f32 %v558, 1.0
  %v761 = vadd.f32 %v560, 1.0
  %v762 = vadd.f32 %v562, 1.0
  %v763 = vadd.f32 %v564, 1.0
  %v764 = vadd.f32 %v566, 1.0
  %v765 = vadd.f32 %v568, 1.0
  %v766 = vadd.f32 %v570, 1.0
  %v767 = vadd.f32 %v572, 1.0
  %v768 = vadd.f32 %v574, 1.0
  %v769 = vadd.f32 %v576, 1.0
  %v770 = vadd.f32 %v578, 1.0
  %v771 = vadd.f32 %v580, 1.0
  %v772 = vadd.f32 %v582, 1.0
  %v773 = vadd.f32 %v584, 1.0
  %v774 = vadd.f32 %v586, 1.0
  %v775 = vadd.f32 %v588, 1.0
  %v776 = vadd.f32 %v590, 1.0
  %v777 = vadd.f32 %v592, 1.0
  %v778 = vadd.f32 %v594, 1.0
  %v779 = vadd.f32 %v596, 1.0
  %v780 = vadd.f32 %v598, 1.0
  %v781 = vadd.f32 %v600, 1.0
  %v782 = vadd.f32 %v602, 1.0
  %v783 = vadd.f32 %v604, 1.0
  %v784 = vadd.f32 %v606, 1.0
  %v785 = vadd.f32 %v608, 1.0
  %v786 = vadd.f32 %v610, 1.0
  %v787 = vadd.f32 %v612, 1.0
  %v788 = vadd.f32 %v614, 1.0
  %v789 = vadd.f32 %v616, 1.0
  %v790 = vadd.f32 %v618, 1.0
  %v791 = vadd.f32 %v620, 1.0
  %v792 = vadd.f32 %v622, 1.0
  %v793 = vadd.f32 %v624, 1.0
  %v794 = vadd.f32 %v626, 1.0
  %v795 = vadd.f32 %v628, 1.0
  %v796 = vadd.f32 %v630, 1.0
  %v797 = vadd.f32 %v632, 1.0
  %v798 = vadd.f32 %v634, 1.0
  %v799 = vadd.f32 %v636, 1.0
  %v800 = vadd.f32 %v638, 1.0
  %v801 = vadd.f32 %v640, 1.0
  %v802 = vadd.f32 %v642, 1.0
  %v803 = vadd.f32 %v644, 1.0
  %v804 = vadd.f32 %v646, 1.0
  %v805 = vadd.f32 %v648, 1.0
  %v806 = vadd.f32 %v650, 1.0
  %v807 = vrcp.pop %v651
  %v808 = vmul.f32 1.0, %v807
  %v809 = vrcp.pop %v652
  %v810 = vmul.f32 1.0, %v809
  %v811 = vrcp.pop %v653
  %v812 = vmul.f32 1.0, %v811
  %v813 = vrcp.pop %v654
  %v814 = vmul.f32 1.0, %v813
  %v815 = vrcp.pop %v655
  %v816 = vmul.f32 1.0, %v815
  %v817 = vrcp.pop %v656
  %v818 = vmul.f32 1.0, %v817
  %v819 = vrcp.pop %v657
  %v820 = vmul.f32 1.0, %v819
  %v821 = vrcp.pop %v658
  %v822 = vmul.f32 1.0, %v821
  %v823 = vrcp.pop %v659
  %v824 = vmul.f32 1.0, %v823
  %v825 = vrcp.pop %v660
  %v826 = vmul.f32 1.0, %v825
  %v827 = vrcp.pop %v661
  %v828 = vmul.f32 1.0, %v827
  %v829 = vrcp.pop %v662
  %v830 = vmul.f32 1.0, %v829
  %v831 = vrcp.pop %v663
  %v832 = vmul.f32 1.0, %v831
  %v833 = vrcp.pop %v664
  %v834 = vmul.f32 1.0, %v833
  %v835 = vrcp.pop %v665
  %v836 = vmul.f32 1.0, %v835
  %v837 = vrcp.pop %v666
  %v838 = vmul.f32 1.0, %v837
  %v839 = vrcp.pop %v667
  %v840 = vmul.f32 1.0, %v839
  %v841 = vrcp.pop %v668
  %v842 = vmul.f32 1.0, %v841
  %v843 = vrcp.pop %v669
  %v844 = vmul.f32 1.0, %v843
  %v845 = vrcp.pop %v670
  %v846 = vmul.f32 1.0, %v845
  %v847 = vrcp.pop %v671
  %v848 = vmul.f32 1.0, %v847
  %v849 = vrcp.pop %v672
  %v850 = vmul.f32 1.0, %v849
  %v851 = vrcp.pop %v673
  %v852 = vmul.f32 1.0, %v851
  %v853 = vrcp.pop %v674
  %v854 = vmul.f32 1.0, %v853
  %v855 = vrcp.pop %v675
  %v856 = vmul.f32 1.0, %v855
  %v857 = vrcp.pop %v676
  %v858 = vmul.f32 1.0, %v857
  %v859 = vrcp.pop %v677
  %v860 = vmul.f32 1.0, %v859
  %v861 = vrcp.pop %v678
  %v862 = vmul.f32 1.0, %v861
  %v863 = vrcp.pop %v679
  %v864 = vmul.f32 1.0, %v863
  %v865 = vrcp.pop %v680
  %v866 = vmul.f32 1.0, %v865
  %v867 = vrcp.pop %v681
  %v868 = vmul.f32 1.0, %v867
  %v869 = vrcp.pop %v682
  %v870 = vmul.f32 1.0, %v869
  %v871 = vrcp.pop %v683
  %v872 = vmul.f32 1.0, %v871
  %v873 = vrcp.pop %v684
  %v874 = vmul.f32 1.0, %v873
  %v875 = vrcp.pop %v685
  %v876 = vmul.f32 1.0, %v875
  %v877 = vrcp.pop %v686
  %v878 = vmul.f32 1.0, %v877
  %v879 = vrcp.pop %v687
  %v880 = vmul.f32 1.0, %v879
  %v881 = vrcp.pop %v688
  %v882 = vmul.f32 1.0, %v881
  %v883 = vrcp.pop %v689
  %v884 = vmul.f32 1.0, %v883
  %v885 = vrcp.pop %v690
  %v886 = vmul.f32 1.0, %v885
  %v887 = vrcp.pop %v691
  %v888 = vmul.f32 1.0, %v887
  %v889 = vrcp.pop %v692
  %v890 = vmul.f32 1.0, %v889
  %v891 = vrcp.pop %v693
  %v892 = vmul.f32 1.0, %v891
  %v893 = vrcp.pop %v694
  %v894 = vmul.f32 1.0, %v893
  %v895 = vrcp.pop %v695
  %v896 = vmul.f32 1.0, %v895
  %v897 = vrcp.pop %v696
  %v898 = vmul.f32 1.0, %v897
  %v899 = vrcp.pop %v697
  %v900 = vmul.f32 1.0, %v899
  %v901 = vrcp.pop %v698
  %v902 = vmul.f32 1.0, %v901
  %v903 = vrcp.pop %v699
  %v904 = vmul.f32 1.0, %v903
  %v905 = vrcp.pop %v700
  %v906 = vmul.f32 1.0, %v905
  %v907 = vrcp.pop %v701
  %v908 = vmul.f32 1.0, %v907
  %v909 = vrcp.pop %v702
  %v910 = vmul.f32 1.0, %v909
  %v911 = vrcp.pop %v703
  %v912 = vmul.f32 1.0, %v911
  %v913 = vrcp.pop %v704
  %v914 = vmul.f32 1.0, %v913
  %v915 = vrcp.pop %v705
  %v916 = vmul.f32 1.0, %v915
  %v917 = vrcp.pop %v706
  %v918 = vmul.f32 1.0, %v917
  %v919 = vrcp.pop %v707
  %v920 = vmul.f32 1.0, %v919
  %v921 = vrcp.pop %v708
  %v922 = vmul.f32 1.0, %v921
  %v923 = vrcp.pop %v709
  %v924 = vmul.f32 1.0, %v923
  %v925 = vrcp.pop %v710
  %v926 = vmul.f32 1.0, %v925
  %v927 = vrcp.pop %v711
  %v928 = vmul.f32 1.0, %v927
  %v929 = vrcp.pop %v712
  %v930 = vmul.f32 1.0, %v929
  %v931 = vrcp.pop %v713
  %v932 = vmul.f32 1.0, %v931
  %v933 = vrcp.pop %v714
  %v934 = vmul.f32 1.0, %v933
  %v935 = vrcp.pop %v715
  %v936 = vmul.f32 1.0, %v935
  %v937 = vrcp.pop %v716
  %v938 = vmul.f32 1.0, %v937
  %v939 = vrcp.pop %v717
  %v940 = vmul.f32 1.0, %v939
  %v941 = vrcp.pop %v718
  %v942 = vmul.f32 1.0, %v941
  %v943 = vrcp.pop %v719
  %v944 = vmul.f32 1.0, %v943
  %v945 = vrcp.pop %v720
  %v946 = vmul.f32 1.0, %v945
  %v947 = vrcp.pop %v721
  %v948 = vmul.f32 1.0, %v947
  %v949 = vrcp.pop %v722
  %v950 = vmul.f32 1.0, %v949
  %v951 = vrcp.pop %v723
  %v952 = vmul.f32 1.0, %v951
  %v953 = vrcp.pop %v724
  %v954 = vmul.f32 1.0, %v953
  %v955 = vrcp.pop %v725
  %v956 = vmul.f32 1.0, %v955
  %v957 = vrcp.pop %v726
  %v958 = vmul.f32 1.0, %v957
  %v959 = vrcp.pop %v727
  %v960 = vmul.f32 1.0, %v959
  %v961 = vrcp.pop %v728
  %v962 = vmul.f32 1.0, %v961
  %v963 = vrcp.pop %v729
  %v964 = vmul.f32 1.0, %v963
  %v965 = vrcp.pop %v730
  %v966 = vmul.f32 1.0, %v965
  %v967 = vrcp.pop %v731
  %v968 = vmul.f32 1.0, %v967
  %v969 = vrcp.pop %v732
  %v970 = vmul.f32 1.0, %v969
  %v971 = vrcp.pop %v733
  %v972 = vmul.f32 1.0, %v971
  %v973 = vrcp.pop %v734
  %v974 = vmul.f32 1.0, %v973
  %v975 = vrcp.pop %v735
  %v976 = vmul.f32 1.0, %v975
  %v977 = vrcp.pop %v736
  %v978 = vmul.f32 1.0, %v977
  %v979 = vrcp.pop %v737
  %v980 = vmul.f32 1.0, %v979
  %v981 = vrcp.pop %v738
  %v982 = vmul.f32 1.0, %v981
  %v983 = vrcp.pop %v739
  %v984 = vmul.f32 1.0, %v983
  %v985 = vrcp.pop %v740
  %v986 = vmul.f32 1.0, %v985
  %v987 = vrcp.pop %v741
  %v988 = vmul.f32 1.0, %v987
  %v989 = vrcp.pop %v742
  %v990 = vmul.f32 1.0, %v989
  %v991 = vrcp.pop %v743
  %v992 = vmul.f32 1.0, %v991
  %v993 = vrcp.pop %v744
  %v994 = vmul.f32 1.0, %v993
  %v995 = vrcp.pop %v745
  %v996 = vmul.f32 1.0, %v995
  %v997 = vrcp.pop %v746
  %v998 = vmul.f32 1.0, %v997
  %v999 = vrcp.pop %v747
  %v1000 = vmul.f32 1.0, %v999
  %v1001 = vrcp.pop %v748
  %v1002 = vmul.f32 1.0, %v1001
  %v1003 = vrcp.pop %v749
  %v1004 = vmul.f32 1.0, %v1003
  %v1005 = vrcp.pop %v750
  %v1006 = vmul.f32 1.0, %v1005
  %v1007 = vrcp.pop %v751
  %v1008 = vmul.f32 1.0, %v1007
  %v1009 = vrcp.pop %v752
  %v1010 = vmul.f32 1.0, %v1009
  %v1011 = vrcp.pop %v753
  %v1012 = vmul.f32 1.0, %v1011
  %v1013 = vrcp.pop %v754
  %v1014 = vmul.f32 1.0, %v1013
  %v1015 = vrcp.pop %v755
  %v1016 = vmul.f32 1.0, %v1015
  %v1017 = vrcp.pop %v756
  %v1018 = vmul.f32 1.0, %v1017
  %v1019 = vrcp.pop %v757
  %v1020 = vmul.f32 1.0, %v1019
  %v1021 = vrcp.pop %v758
  %v1022 = vmul.f32 1.0, %v1021
  %v1023 = vrcp.pop %v759
  %v1024 = vmul.f32 1.0, %v1023
  %v1025 = vrcp.pop %v760
  %v1026 = vmul.f32 1.0, %v1025
  %v1027 = vrcp.pop %v761
  %v1028 = vmul.f32 1.0, %v1027
  %v1029 = vrcp.pop %v762
  %v1030 = vmul.f32 1.0, %v1029
  %v1031 = vrcp.pop %v763
  %v1032 = vmul.f32 1.0, %v1031
  %v1033 = vrcp.pop %v764
  %v1034 = vmul.f32 1.0, %v1033
  %v1035 = vrcp.pop %v765
  %v1036 = vmul.f32 1.0, %v1035
  %v1037 = vrcp.pop %v766
  %v1038 = vmul.f32 1.0, %v1037
  %v1039 = vrcp.pop %v767
  %v1040 = vmul.f32 1.0, %v1039
  %v1041 = vrcp.pop %v768
  %v1042 = vmul.f32 1.0, %v1041
  %v1043 = vrcp.pop %v769
  %v1044 = vmul.f32 1.0, %v1043
  %v1045 = vrcp.pop %v770
  %v1046 = vmul.f32 1.0, %v1045
  %v1047 = vrcp.pop %v771
  %v1048 = vmul.f32 1.0, %v1047
  %v1049 = vrcp.pop %v772
  %v1050 = vmul.f32 1.0, %v1049
  %v1051 = vrcp.pop %v773
  %v1052 = vmul.f32 1.0, %v1051
  %v1053 = vrcp.pop %v774
  %v1054 = vmul.f32 1.0, %v1053
  %v1055 = vrcp.pop %v775
  %v1056 = vmul.f32 1.0, %v1055
  %v1057 = vrcp.pop %v776
  %v1058 = vmul.f32 1.0, %v1057
  %v1059 = vrcp.pop %v777
  %v1060 = vmul.f32 1.0, %v1059
  %v1061 = vrcp.pop %v778
  %v1062 = vmul.f32 1.0, %v1061
  %v1063 = vrcp.pop %v779
  %v1064 = vmul.f32 1.0, %v1063
  %v1065 = vrcp.pop %v780
  %v1066 = vmul.f32 1.0, %v1065
  %v1067 = vrcp.pop %v781
  %v1068 = vmul.f32 1.0, %v1067
  %v1069 = vrcp.pop %v782
  %v1070 = vmul.f32 1.0, %v1069
  %v1071 = vrcp.pop %v783
  %v1072 = vmul.f32 1.0, %v1071
  %v1073 = vrcp.pop %v784
  %v1074 = vmul.f32 1.0, %v1073
  %v1075 = vrcp.pop %v785
  %v1076 = vmul.f32 1.0, %v1075
  %v1077 = vrcp.pop %v786
  %v1078 = vmul.f32 1.0, %v1077
  %v1079 = vrcp.pop %v787
  %v1080 = vmul.f32 1.0, %v1079
  %v1081 = vrcp.pop %v788
  %v1082 = vmul.f32 1.0, %v1081
  %v1083 = vrcp.pop %v789
  %v1084 = vmul.f32 1.0, %v1083
  %v1085 = vrcp.pop %v790
  %v1086 = vmul.f32 1.0, %v1085
  %v1087 = vrcp.pop %v791
  %v1088 = vmul.f32 1.0, %v1087
  %v1089 = vrcp.pop %v792
  %v1090 = vmul.f32 1.0, %v1089
  %v1091 = vrcp.pop %v793
  %v1092 = vmul.f32 1.0, %v1091
  %v1093 = vrcp.pop %v794
  %v1094 = vmul.f32 1.0, %v1093
  %v1095 = vrcp.pop %v795
  %v1096 = vmul.f32 1.0, %v1095
  %v1097 = vrcp.pop %v796
  %v1098 = vmul.f32 1.0, %v1097
  %v1099 = vrcp.pop %v797
  %v1100 = vmul.f32 1.0, %v1099
  %v1101 = vrcp.pop %v798
  %v1102 = vmul.f32 1.0, %v1101
  %v1103 = vrcp.pop %v799
  %v1104 = vmul.f32 1.0, %v1103
  %v1105 = vrcp.pop %v800
  %v1106 = vmul.f32 1.0, %v1105
  %v1107 = vrcp.pop %v801
  %v1108 = vmul.f32 1.0, %v1107
  %v1109 = vrcp.pop %v802
  %v1110 = vmul.f32 1.0, %v1109
  %v1111 = vrcp.pop %v803
  %v1112 = vmul.f32 1.0, %v1111
  %v1113 = vrcp.pop %v804
  %v1114 = vmul.f32 1.0, %v1113
  %v1115 = vrcp.pop %v805
  %v1116 = vmul.f32 1.0, %v1115
  %v1117 = vrcp.pop %v806
  %v1118 = vmul.f32 1.0, %v1117
  %v1119 = vld [vmem:[%s1] sm:$0xff]
  %v1120 = vld [vmem:[%s1 + $0x8] sm:$0xff]
  %v1121 = vld [vmem:[%s1 + $0x10] sm:$0xff]
  %v1122 = vld [vmem:[%s1 + $0x18] sm:$0xff]
  %v1123 = vld [vmem:[%s1 + $0x20] sm:$0xff]
  %v1124 = vld [vmem:[%s1 + $0x28] sm:$0xff]
  %v1125 = vld [vmem:[%s1 + $0x30] sm:$0xff]
  %v1126 = vld [vmem:[%s1 + $0x38] sm:$0xff]
  %v1127 = vld [vmem:[%s1 + $0x40] sm:$0xff]
  %v1128 = vld [vmem:[%s1 + $0x48] sm:$0xff]
  %v1129 = vld [vmem:[%s1 + $0x50] sm:$0xff]
  %v1130 = vld [vmem:[%s1 + $0x58] sm:$0xff]
  %v1131 = vld [vmem:[%s1 + $0x60] sm:$0xff]
  %v1132 = vld [vmem:[%s1 + $0x68] sm:$0xff]
  %v1133 = vld [vmem:[%s1 + $0x70] sm:$0xff]
  %v1134 = vld [vmem:[%s1 + $0x78] sm:$0xff]
  %v1135 = vld [vmem:[%s1 + $0x80] sm:$0xff]
  %v1136 = vld [vmem:[%s1 + $0x88] sm:$0xff]
  %v1137 = vld [vmem:[%s1 + $0x90] sm:$0xff]
  %v1138 = vld [vmem:[%s1 + $0x98] sm:$0xff]
  %v1139 = vld [vmem:[%s1 + $0xa0] sm:$0xff]
  %v1140 = vld [vmem:[%s1 + $0xa8] sm:$0xff]
  %v1141 = vld [vmem:[%s1 + $0xb0] sm:$0xff]
  %v1142 = vld [vmem:[%s1 + $0xb8] sm:$0xff]
  %v1143 = vld [vmem:[%s1 + $0xc0] sm:$0xff]
  %v1144 = vld [vmem:[%s1 + $0xc8] sm:$0xff]
  %v1145 = vld [vmem:[%s1 + $0xd0] sm:$0xff]
  %v1146 = vld [vmem:[%s1 + $0xd8] sm:$0xff]
  %v1147 = vld [vmem:[%s1 + $0xe0] sm:$0xff]
  %v1148 = vld [vmem:[%s1 + $0xe8] sm:$0xff]
  %v1149 = vld [vmem:[%s1 + $0xf0] sm:$0xff]
  %v1150 = vld [vmem:[%s1 + $0xf8] sm:$0xff]
  %v1151 = vld [vmem:[%s1 + $0x100] sm:$0xff]
  %v1152 = vld [vmem:[%s1 + $0x108] sm:$0xff]
  %v1153 = vld [vmem:[%s1 + $0x110] sm:$0xff]
  %v1154 = vld [vmem:[%s1 + $0x118] sm:$0xff]
  %v1155 = vld [vmem:[%s1 + $0x120] sm:$0xff]
  %v1156 = vld [vmem:[%s1 + $0x128] sm:$0xff]
  %v1157 = vld [vmem:[%s1 + $0x130] sm:$0xff]
  %v1158 = vld [vmem:[%s1 + $0x138] sm:$0xff]
  %v1159 = vld [vmem:[%s1 + $0x140] sm:$0xff]
  %v1160 = vld [vmem:[%s1 + $0x148] sm:$0xff]
  %v1161 = vld [vmem:[%s1 + $0x150] sm:$0xff]
  %v1162 = vld [vmem:[%s1 + $0x158] sm:$0xff]
  %v1163 = vld [vmem:[%s1 + $0x160] sm:$0xff]
  %v1164 = vld [vmem:[%s1 + $0x168] sm:$0xff]
  %v1165 = vld [vmem:[%s1 + $0x170] sm:$0xff]
  %v1166 = vld [vmem:[%s1 + $0x178] sm:$0xff]
  %v1167 = vld [vmem:[%s1 + $0x180] sm:$0xff]
  %v1168 = vld [vmem:[%s1 + $0x188] sm:$0xff]
  %v1169 = vld [vmem:[%s1 + $0x190] sm:$0xff]
  %v1170 = vld [vmem:[%s1 + $0x198] sm:$0xff]
  %v1171 = vld [vmem:[%s1 + $0x1a0] sm:$0xff]
  %v1172 = vld [vmem:[%s1 + $0x1a8] sm:$0xff]
  %v1173 = vld [vmem:[%s1 + $0x1b0] sm:$0xff]
  %v1174 = vld [vmem:[%s1 + $0x1b8] sm:$0xff]
  %v1175 = vld [vmem:[%s1 + $0x1c0] sm:$0xff]
  %v1176 = vld [vmem:[%s1 + $0x1c8] sm:$0xff]
  %v1177 = vld [vmem:[%s1 + $0x1d0] sm:$0xff]
  %v1178 = vld [vmem:[%s1 + $0x1d8] sm:$0xff]
  %v1179 = vld [vmem:[%s1 + $0x1e0] sm:$0xff]
  %v1180 = vld [vmem:[%s1 + $0x1e8] sm:$0xff]
  %v1181 = vld [vmem:[%s1 + $0x1f0] sm:$0xff]
  %v1182 = vld [vmem:[%s1 + $0x1f8] sm:$0xff]
  %v1183 = vld [vmem:[%s1 + $0x200] sm:$0xff]
  %v1184 = vld [vmem:[%s1 + $0x208] sm:$0xff]
  %v1185 = vld [vmem:[%s1 + $0x210] sm:$0xff]
  %v1186 = vld [vmem:[%s1 + $0x218] sm:$0xff]
  %v1187 = vld [vmem:[%s1 + $0x220] sm:$0xff]
  %v1188 = vld [vmem:[%s1 + $0x228] sm:$0xff]
  %v1189 = vld [vmem:[%s1 + $0x230] sm:$0xff]
  %v1190 = vld [vmem:[%s1 + $0x238] sm:$0xff]
  %v1191 = vld [vmem:[%s1 + $0x240] sm:$0xff]
  %v1192 = vld [vmem:[%s1 + $0x248] sm:$0xff]
  %v1193 = vld [vmem:[%s1 + $0x250] sm:$0xff]
  %v1194 = vld [vmem:[%s1 + $0x258] sm:$0xff]
  %v1195 = vld [vmem:[%s1 + $0x260] sm:$0xff]
  %v1196 = vld [vmem:[%s1 + $0x268] sm:$0xff]
  %v1197 = vld [vmem:[%s1 + $0x270] sm:$0xff]
  %v1198 = vld [vmem:[%s1 + $0x278] sm:$0xff]
  %v1199 = vld [vmem:[%s1 + $0x280] sm:$0xff]
  %v1200 = vld [vmem:[%s1 + $0x288] sm:$0xff]
  %v1201 = vld [vmem:[%s1 + $0x290] sm:$0xff]
  %v1202 = vld [vmem:[%s1 + $0x298] sm:$0xff]
  %v1203 = vld [vmem:[%s1 + $0x2a0] sm:$0xff]
  %v1204 = vld [vmem:[%s1 + $0x2a8] sm:$0xff]
  %v1205 = vld [vmem:[%s1 + $0x2b0] sm:$0xff]
  %v1206 = vld [vmem:[%s1 + $0x2b8] sm:$0xff]
  %v1207 = vld [vmem:[%s1 + $0x2c0] sm:$0xff]
  %v1208 = vld [vmem:[%s1 + $0x2c8] sm:$0xff]
  %v1209 = vld [vmem:[%s1 + $0x2d0] sm:$0xff]
  %v1210 = vld [vmem:[%s1 + $0x2d8] sm:$0xff]
  %v1211 = vld [vmem:[%s1 + $0x2e0] sm:$0xff]
  %v1212 = vld [vmem:[%s1 + $0x2e8] sm:$0xff]
  %v1213 = vld [vmem:[%s1 + $0x2f0] sm:$0xff]
  %v1214 = vld [vmem:[%s1 + $0x2f8] sm:$0xff]
  %v1215 = vld [vmem:[%s1 + $0x300] sm:$0xff]
  %v1216 = vld [vmem:[%s1 + $0x308] sm:$0xff]
  %v1217 = vld [vmem:[%s1 + $0x310] sm:$0xff]
  %v1218 = vld [vmem:[%s1 + $0x318] sm:$0xff]
  %v1219 = vld [vmem:[%s1 + $0x320] sm:$0xff]
  %v1220 = vld [vmem:[%s1 + $0x328] sm:$0xff]
  %v1221 = vld [vmem:[%s1 + $0x330] sm:$0xff]
  %v1222 = vld [vmem:[%s1 + $0x338] sm:$0xff]
  %v1223 = vld [vmem:[%s1 + $0x340] sm:$0xff]
  %v1224 = vld [vmem:[%s1 + $0x348] sm:$0xff]
  %v1225 = vld [vmem:[%s1 + $0x350] sm:$0xff]
  %v1226 = vld [vmem:[%s1 + $0x358] sm:$0xff]
  %v1227 = vld [vmem:[%s1 + $0x360] sm:$0xff]
  %v1228 = vld [vmem:[%s1 + $0x368] sm:$0xff]
  %v1229 = vld [vmem:[%s1 + $0x370] sm:$0xff]
  %v1230 = vld [vmem:[%s1 + $0x378] sm:$0xff]
  %v1231 = vld [vmem:[%s1 + $0x380] sm:$0xff]
  %v1232 = vld [vmem:[%s1 + $0x388] sm:$0xff]
  %v1233 = vld [vmem:[%s1 + $0x390] sm:$0xff]
  %v1234 = vld [vmem:[%s1 + $0x398] sm:$0xff]
  %v1235 = vld [vmem:[%s1 + $0x3a0] sm:$0xff]
  %v1236 = vld [vmem:[%s1 + $0x3a8] sm:$0xff]
  %v1237 = vld [vmem:[%s1 + $0x3b0] sm:$0xff]
  %v1238 = vld [vmem:[%s1 + $0x3b8] sm:$0xff]
  %v1239 = vld [vmem:[%s1 + $0x3c0] sm:$0xff]
  %v1240 = vld [vmem:[%s1 + $0x3c8] sm:$0xff]
  %v1241 = vld [vmem:[%s1 + $0x3d0] sm:$0xff]
  %v1242 = vld [vmem:[%s1 + $0x3d8] sm:$0xff]
  %v1243 = vld [vmem:[%s1 + $0x3e0] sm:$0xff]
  %v1244 = vld [vmem:[%s1 + $0x3e8] sm:$0xff]
  %v1245 = vld [vmem:[%s1 + $0x3f0] sm:$0xff]
  %v1246 = vld [vmem:[%s1 + $0x3f8] sm:$0xff]
  %v1247 = vld [vmem:[%s1 + $0x400] sm:$0xff]
  %v1248 = vld [vmem:[%s1 + $0x408] sm:$0xff]
  %v1249 = vld [vmem:[%s1 + $0x410] sm:$0xff]
  %v1250 = vld [vmem:[%s1 + $0x418] sm:$0xff]
  %v1251 = vld [vmem:[%s1 + $0x420] sm:$0xff]
  %v1252 = vld [vmem:[%s1 + $0x428] sm:$0xff]
  %v1253 = vld [vmem:[%s1 + $0x430] sm:$0xff]
  %v1254 = vld [vmem:[%s1 + $0x438] sm:$0xff]
  %v1255 = vld [vmem:[%s1 + $0x440] sm:$0xff]
  %v1256 = vld [vmem:[%s1 + $0x448] sm:$0xff]
  %v1257 = vld [vmem:[%s1 + $0x450] sm:$0xff]
  %v1258 = vld [vmem:[%s1 + $0x458] sm:$0xff]
  %v1259 = vld [vmem:[%s1 + $0x460] sm:$0xff]
  %v1260 = vld [vmem:[%s1 + $0x468] sm:$0xff]
  %v1261 = vld [vmem:[%s1 + $0x470] sm:$0xff]
  %v1262 = vld [vmem:[%s1 + $0x478] sm:$0xff]
  %v1263 = vld [vmem:[%s1 + $0x480] sm:$0xff]
  %v1264 = vld [vmem:[%s1 + $0x488] sm:$0xff]
  %v1265 = vld [vmem:[%s1 + $0x490] sm:$0xff]
  %v1266 = vld [vmem:[%s1 + $0x498] sm:$0xff]
  %v1267 = vld [vmem:[%s1 + $0x4a0] sm:$0xff]
  %v1268 = vld [vmem:[%s1 + $0x4a8] sm:$0xff]
  %v1269 = vld [vmem:[%s1 + $0x4b0] sm:$0xff]
  %v1270 = vld [vmem:[%s1 + $0x4b8] sm:$0xff]
  %v1271 = vld [vmem:[%s1 + $0x4c0] sm:$0xff]
  %v1272 = vld [vmem:[%s1 + $0x4c8] sm:$0xff]
  %v1273 = vld [vmem:[%s1 + $0x4d0] sm:$0xff]
  %v1274 = vld [vmem:[%s1 + $0x4d8] sm:$0xff]
  %1276 = vset.pattern.permute.xlu0 0
  %1277 = vperm.xlu0 %1276, %v808
  %v1278 = vpop.permute.xlu0 %1277
  %1281 = vset.pattern.permute.xlu0 0
  %1282 = vperm.xlu0 %1281, %v810
  %v1283 = vpop.permute.xlu0 %1282
  %1286 = vset.pattern.permute.xlu0 0
  %1287 = vperm.xlu0 %1286, %v812
  %v1288 = vpop.permute.xlu0 %1287
  %1291 = vset.pattern.permute.xlu0 0
  %1292 = vperm.xlu0 %1291, %v814
  %v1293 = vpop.permute.xlu0 %1292
  %1296 = vset.pattern.permute.xlu0 0
  %1297 = vperm.xlu0 %1296, %v816
  %v1298 = vpop.permute.xlu0 %1297
  %1301 = vset.pattern.permute.xlu0 0
  %1302 = vperm.xlu0 %1301, %v818
  %v1303 = vpop.permute.xlu0 %1302
  %1306 = vset.pattern.permute.xlu0 0
  %1307 = vperm.xlu0 %1306, %v820
  %v1308 = vpop.permute.xlu0 %1307
  %1311 = vset.pattern.permute.xlu0 0
  %1312 = vperm.xlu0 %1311, %v822
  %v1313 = vpop.permute.xlu0 %1312
  %1316 = vset.pattern.permute.xlu0 0
  %1317 = vperm.xlu0 %1316, %v824
  %v1318 = vpop.permute.xlu0 %1317
  %1321 = vset.pattern.permute.xlu0 0
  %1322 = vperm.xlu0 %1321, %v826
  %v1323 = vpop.permute.xlu0 %1322
  %1326 = vset.pattern.permute.xlu0 0
  %1327 = vperm.xlu0 %1326, %v828
  %v1328 = vpop.permute.xlu0 %1327
  %1331 = vset.pattern.permute.xlu0 0
  %1332 = vperm.xlu0 %1331, %v830
  %v1333 = vpop.permute.xlu0 %1332
  %1336 = vset.pattern.permute.xlu0 0
  %1337 = vperm.xlu0 %1336, %v832
  %v1338 = vpop.permute.xlu0 %1337
  %1341 = vset.pattern.permute.xlu0 0
  %1342 = vperm.xlu0 %1341, %v834
  %v1343 = vpop.permute.xlu0 %1342
  %1346 = vset.pattern.permute.xlu0 0
  %1347 = vperm.xlu0 %1346, %v836
  %v1348 = vpop.permute.xlu0 %1347
  %1351 = vset.pattern.permute.xlu0 0
  %1352 = vperm.xlu0 %1351, %v838
  %v1353 = vpop.permute.xlu0 %1352
  %1356 = vset.pattern.permute.xlu0 0
  %1357 = vperm.xlu0 %1356, %v840
  %v1358 = vpop.permute.xlu0 %1357
  %1361 = vset.pattern.permute.xlu0 0
  %1362 = vperm.xlu0 %1361, %v842
  %v1363 = vpop.permute.xlu0 %1362
  %1366 = vset.pattern.permute.xlu0 0
  %1367 = vperm.xlu0 %1366, %v844
  %v1368 = vpop.permute.xlu0 %1367
  %1371 = vset.pattern.permute.xlu0 0
  %1372 = vperm.xlu0 %1371, %v846
  %v1373 = vpop.permute.xlu0 %1372
  %1376 = vset.pattern.permute.xlu0 0
  %1377 = vperm.xlu0 %1376, %v848
  %v1378 = vpop.permute.xlu0 %1377
  %1381 = vset.pattern.permute.xlu0 0
  %1382 = vperm.xlu0 %1381, %v850
  %v1383 = vpop.permute.xlu0 %1382
  %1386 = vset.pattern.permute.xlu0 0
  %1387 = vperm.xlu0 %1386, %v852
  %v1388 = vpop.permute.xlu0 %1387
  %1391 = vset.pattern.permute.xlu0 0
  %1392 = vperm.xlu0 %1391, %v854
  %v1393 = vpop.permute.xlu0 %1392
  %1396 = vset.pattern.permute.xlu0 0
  %1397 = vperm.xlu0 %1396, %v856
  %v1398 = vpop.permute.xlu0 %1397
  %1401 = vset.pattern.permute.xlu0 0
  %1402 = vperm.xlu0 %1401, %v858
  %v1403 = vpop.permute.xlu0 %1402
  %1406 = vset.pattern.permute.xlu0 0
  %1407 = vperm.xlu0 %1406, %v860
  %v1408 = vpop.permute.xlu0 %1407
  %1411 = vset.pattern.permute.xlu0 0
  %1412 = vperm.xlu0 %1411, %v862
  %v1413 = vpop.permute.xlu0 %1412
  %1416 = vset.pattern.permute.xlu0 0
  %1417 = vperm.xlu0 %1416, %v864
  %v1418 = vpop.permute.xlu0 %1417
  %1421 = vset.pattern.permute.xlu0 0
  %1422 = vperm.xlu0 %1421, %v866
  %v1423 = vpop.permute.xlu0 %1422
  %1426 = vset.pattern.permute.xlu0 0
  %1427 = vperm.xlu0 %1426, %v868
  %v1428 = vpop.permute.xlu0 %1427
  %1431 = vset.pattern.permute.xlu0 0
  %1432 = vperm.xlu0 %1431, %v870
  %v1433 = vpop.permute.xlu0 %1432
  %1436 = vset.pattern.permute.xlu0 0
  %1437 = vperm.xlu0 %1436, %v872
  %v1438 = vpop.permute.xlu0 %1437
  %1441 = vset.pattern.permute.xlu0 0
  %1442 = vperm.xlu0 %1441, %v874
  %v1443 = vpop.permute.xlu0 %1442
  %1446 = vset.pattern.permute.xlu0 0
  %1447 = vperm.xlu0 %1446, %v876
  %v1448 = vpop.permute.xlu0 %1447
  %1451 = vset.pattern.permute.xlu0 0
  %1452 = vperm.xlu0 %1451, %v878
  %v1453 = vpop.permute.xlu0 %1452
  %1456 = vset.pattern.permute.xlu0 0
  %1457 = vperm.xlu0 %1456, %v880
  %v1458 = vpop.permute.xlu0 %1457
  %1461 = vset.pattern.permute.xlu0 0
  %1462 = vperm.xlu0 %1461, %v882
  %v1463 = vpop.permute.xlu0 %1462
  %1466 = vset.pattern.permute.xlu0 0
  %1467 = vperm.xlu0 %1466, %v884
  %v1468 = vpop.permute.xlu0 %1467
  %1471 = vset.pattern.permute.xlu0 0
  %1472 = vperm.xlu0 %1471, %v886
  %v1473 = vpop.permute.xlu0 %1472
  %1476 = vset.pattern.permute.xlu0 0
  %1477 = vperm.xlu0 %1476, %v888
  %v1478 = vpop.permute.xlu0 %1477
  %1481 = vset.pattern.permute.xlu0 0
  %1482 = vperm.xlu0 %1481, %v890
  %v1483 = vpop.permute.xlu0 %1482
  %1486 = vset.pattern.permute.xlu0 0
  %1487 = vperm.xlu0 %1486, %v892
  %v1488 = vpop.permute.xlu0 %1487
  %1491 = vset.pattern.permute.xlu0 0
  %1492 = vperm.xlu0 %1491, %v894
  %v1493 = vpop.permute.xlu0 %1492
  %1496 = vset.pattern.permute.xlu0 0
  %1497 = vperm.xlu0 %1496, %v896
  %v1498 = vpop.permute.xlu0 %1497
  %1501 = vset.pattern.permute.xlu0 0
  %1502 = vperm.xlu0 %1501, %v898
  %v1503 = vpop.permute.xlu0 %1502
  %1506 = vset.pattern.permute.xlu0 0
  %1507 = vperm.xlu0 %1506, %v900
  %v1508 = vpop.permute.xlu0 %1507
  %1511 = vset.pattern.permute.xlu0 0
  %1512 = vperm.xlu0 %1511, %v902
  %v1513 = vpop.permute.xlu0 %1512
  %1516 = vset.pattern.permute.xlu0 0
  %1517 = vperm.xlu0 %1516, %v904
  %v1518 = vpop.permute.xlu0 %1517
  %1521 = vset.pattern.permute.xlu0 0
  %1522 = vperm.xlu0 %1521, %v906
  %v1523 = vpop.permute.xlu0 %1522
  %1526 = vset.pattern.permute.xlu0 0
  %1527 = vperm.xlu0 %1526, %v908
  %v1528 = vpop.permute.xlu0 %1527
  %1531 = vset.pattern.permute.xlu0 0
  %1532 = vperm.xlu0 %1531, %v910
  %v1533 = vpop.permute.xlu0 %1532
  %1536 = vset.pattern.permute.xlu0 0
  %1537 = vperm.xlu0 %1536, %v912
  %v1538 = vpop.permute.xlu0 %1537
  %1541 = vset.pattern.permute.xlu0 0
  %1542 = vperm.xlu0 %1541, %v914
  %v1543 = vpop.permute.xlu0 %1542
  %1546 = vset.pattern.permute.xlu0 0
  %1547 = vperm.xlu0 %1546, %v916
  %v1548 = vpop.permute.xlu0 %1547
  %1551 = vset.pattern.permute.xlu0 0
  %1552 = vperm.xlu0 %1551, %v918
  %v1553 = vpop.permute.xlu0 %1552
  %1556 = vset.pattern.permute.xlu0 0
  %1557 = vperm.xlu0 %1556, %v920
  %v1558 = vpop.permute.xlu0 %1557
  %1561 = vset.pattern.permute.xlu0 0
  %1562 = vperm.xlu0 %1561, %v922
  %v1563 = vpop.permute.xlu0 %1562
  %1566 = vset.pattern.permute.xlu0 0
  %1567 = vperm.xlu0 %1566, %v924
  %v1568 = vpop.permute.xlu0 %1567
  %1571 = vset.pattern.permute.xlu0 0
  %1572 = vperm.xlu0 %1571, %v926
  %v1573 = vpop.permute.xlu0 %1572
  %1576 = vset.pattern.permute.xlu0 0
  %1577 = vperm.xlu0 %1576, %v928
  %v1578 = vpop.permute.xlu0 %1577
  %1581 = vset.pattern.permute.xlu0 0
  %1582 = vperm.xlu0 %1581, %v930
  %v1583 = vpop.permute.xlu0 %1582
  %1586 = vset.pattern.permute.xlu0 0
  %1587 = vperm.xlu0 %1586, %v932
  %v1588 = vpop.permute.xlu0 %1587
  %1591 = vset.pattern.permute.xlu0 0
  %1592 = vperm.xlu0 %1591, %v934
  %v1593 = vpop.permute.xlu0 %1592
  %1596 = vset.pattern.permute.xlu0 0
  %1597 = vperm.xlu0 %1596, %v936
  %v1598 = vpop.permute.xlu0 %1597
  %1601 = vset.pattern.permute.xlu0 0
  %1602 = vperm.xlu0 %1601, %v938
  %v1603 = vpop.permute.xlu0 %1602
  %1606 = vset.pattern.permute.xlu0 0
  %1607 = vperm.xlu0 %1606, %v940
  %v1608 = vpop.permute.xlu0 %1607
  %1611 = vset.pattern.permute.xlu0 0
  %1612 = vperm.xlu0 %1611, %v942
  %v1613 = vpop.permute.xlu0 %1612
  %1616 = vset.pattern.permute.xlu0 0
  %1617 = vperm.xlu0 %1616, %v944
  %v1618 = vpop.permute.xlu0 %1617
  %1621 = vset.pattern.permute.xlu0 0
  %1622 = vperm.xlu0 %1621, %v946
  %v1623 = vpop.permute.xlu0 %1622
  %1626 = vset.pattern.permute.xlu0 0
  %1627 = vperm.xlu0 %1626, %v948
  %v1628 = vpop.permute.xlu0 %1627
  %1631 = vset.pattern.permute.xlu0 0
  %1632 = vperm.xlu0 %1631, %v950
  %v1633 = vpop.permute.xlu0 %1632
  %1636 = vset.pattern.permute.xlu0 0
  %1637 = vperm.xlu0 %1636, %v952
  %v1638 = vpop.permute.xlu0 %1637
  %1641 = vset.pattern.permute.xlu0 0
  %1642 = vperm.xlu0 %1641, %v954
  %v1643 = vpop.permute.xlu0 %1642
  %1646 = vset.pattern.permute.xlu0 0
  %1647 = vperm.xlu0 %1646, %v956
  %v1648 = vpop.permute.xlu0 %1647
  %1651 = vset.pattern.permute.xlu0 0
  %1652 = vperm.xlu0 %1651, %v958
  %v1653 = vpop.permute.xlu0 %1652
  %1656 = vset.pattern.permute.xlu0 0
  %1657 = vperm.xlu0 %1656, %v960
  %v1658 = vpop.permute.xlu0 %1657
  %1661 = vset.pattern.permute.xlu0 0
  %1662 = vperm.xlu0 %1661, %v962
  %v1663 = vpop.permute.xlu0 %1662
  %1666 = vset.pattern.permute.xlu0 0
  %1667 = vperm.xlu0 %1666, %v964
  %v1668 = vpop.permute.xlu0 %1667
  %1671 = vset.pattern.permute.xlu0 0
  %1672 = vperm.xlu0 %1671, %v966
  %v1673 = vpop.permute.xlu0 %1672
  %1676 = vset.pattern.permute.xlu0 0
  %1677 = vperm.xlu0 %1676, %v968
  %v1678 = vpop.permute.xlu0 %1677
  %1681 = vset.pattern.permute.xlu0 0
  %1682 = vperm.xlu0 %1681, %v970
  %v1683 = vpop.permute.xlu0 %1682
  %1686 = vset.pattern.permute.xlu0 0
  %1687 = vperm.xlu0 %1686, %v972
  %v1688 = vpop.permute.xlu0 %1687
  %1691 = vset.pattern.permute.xlu0 0
  %1692 = vperm.xlu0 %1691, %v974
  %v1693 = vpop.permute.xlu0 %1692
  %1696 = vset.pattern.permute.xlu0 0
  %1697 = vperm.xlu0 %1696, %v976
  %v1698 = vpop.permute.xlu0 %1697
  %1701 = vset.pattern.permute.xlu0 0
  %1702 = vperm.xlu0 %1701, %v978
  %v1703 = vpop.permute.xlu0 %1702
  %1706 = vset.pattern.permute.xlu0 0
  %1707 = vperm.xlu0 %1706, %v980
  %v1708 = vpop.permute.xlu0 %1707
  %1711 = vset.pattern.permute.xlu0 0
  %1712 = vperm.xlu0 %1711, %v982
  %v1713 = vpop.permute.xlu0 %1712
  %1716 = vset.pattern.permute.xlu0 0
  %1717 = vperm.xlu0 %1716, %v984
  %v1718 = vpop.permute.xlu0 %1717
  %1721 = vset.pattern.permute.xlu0 0
  %1722 = vperm.xlu0 %1721, %v986
  %v1723 = vpop.permute.xlu0 %1722
  %1726 = vset.pattern.permute.xlu0 0
  %1727 = vperm.xlu0 %1726, %v988
  %v1728 = vpop.permute.xlu0 %1727
  %1731 = vset.pattern.permute.xlu0 0
  %1732 = vperm.xlu0 %1731, %v990
  %v1733 = vpop.permute.xlu0 %1732
  %1736 = vset.pattern.permute.xlu0 0
  %1737 = vperm.xlu0 %1736, %v992
  %v1738 = vpop.permute.xlu0 %1737
  %1741 = vset.pattern.permute.xlu0 0
  %1742 = vperm.xlu0 %1741, %v994
  %v1743 = vpop.permute.xlu0 %1742
  %1746 = vset.pattern.permute.xlu0 0
  %1747 = vperm.xlu0 %1746, %v996
  %v1748 = vpop.permute.xlu0 %1747
  %1751 = vset.pattern.permute.xlu0 0
  %1752 = vperm.xlu0 %1751, %v998
  %v1753 = vpop.permute.xlu0 %1752
  %1756 = vset.pattern.permute.xlu0 0
  %1757 = vperm.xlu0 %1756, %v1000
  %v1758 = vpop.permute.xlu0 %1757
  %1761 = vset.pattern.permute.xlu0 0
  %1762 = vperm.xlu0 %1761, %v1002
  %v1763 = vpop.permute.xlu0 %1762
  %1766 = vset.pattern.permute.xlu0 0
  %1767 = vperm.xlu0 %1766, %v1004
  %v1768 = vpop.permute.xlu0 %1767
  %1771 = vset.pattern.permute.xlu0 0
  %1772 = vperm.xlu0 %1771, %v1006
  %v1773 = vpop.permute.xlu0 %1772
  %1776 = vset.pattern.permute.xlu0 0
  %1777 = vperm.xlu0 %1776, %v1008
  %v1778 = vpop.permute.xlu0 %1777
  %1781 = vset.pattern.permute.xlu0 0
  %1782 = vperm.xlu0 %1781, %v1010
  %v1783 = vpop.permute.xlu0 %1782
  %1786 = vset.pattern.permute.xlu0 0
  %1787 = vperm.xlu0 %1786, %v1012
  %v1788 = vpop.permute.xlu0 %1787
  %1791 = vset.pattern.permute.xlu0 0
  %1792 = vperm.xlu0 %1791, %v1014
  %v1793 = vpop.permute.xlu0 %1792
  %1796 = vset.pattern.permute.xlu0 0
  %1797 = vperm.xlu0 %1796, %v1016
  %v1798 = vpop.permute.xlu0 %1797
  %1801 = vset.pattern.permute.xlu0 0
  %1802 = vperm.xlu0 %1801, %v1018
  %v1803 = vpop.permute.xlu0 %1802
  %1806 = vset.pattern.permute.xlu0 0
  %1807 = vperm.xlu0 %1806, %v1020
  %v1808 = vpop.permute.xlu0 %1807
  %1811 = vset.pattern.permute.xlu0 0
  %1812 = vperm.xlu0 %1811, %v1022
  %v1813 = vpop.permute.xlu0 %1812
  %1816 = vset.pattern.permute.xlu0 0
  %1817 = vperm.xlu0 %1816, %v1024
  %v1818 = vpop.permute.xlu0 %1817
  %1821 = vset.pattern.permute.xlu0 0
  %1822 = vperm.xlu0 %1821, %v1026
  %v1823 = vpop.permute.xlu0 %1822
  %1826 = vset.pattern.permute.xlu0 0
  %1827 = vperm.xlu0 %1826, %v1028
  %v1828 = vpop.permute.xlu0 %1827
  %1831 = vset.pattern.permute.xlu0 0
  %1832 = vperm.xlu0 %1831, %v1030
  %v1833 = vpop.permute.xlu0 %1832
  %1836 = vset.pattern.permute.xlu0 0
  %1837 = vperm.xlu0 %1836, %v1032
  %v1838 = vpop.permute.xlu0 %1837
  %1841 = vset.pattern.permute.xlu0 0
  %1842 = vperm.xlu0 %1841, %v1034
  %v1843 = vpop.permute.xlu0 %1842
  %1846 = vset.pattern.permute.xlu0 0
  %1847 = vperm.xlu0 %1846, %v1036
  %v1848 = vpop.permute.xlu0 %1847
  %1851 = vset.pattern.permute.xlu0 0
  %1852 = vperm.xlu0 %1851, %v1038
  %v1853 = vpop.permute.xlu0 %1852
  %1856 = vset.pattern.permute.xlu0 0
  %1857 = vperm.xlu0 %1856, %v1040
  %v1858 = vpop.permute.xlu0 %1857
  %1861 = vset.pattern.permute.xlu0 0
  %1862 = vperm.xlu0 %1861, %v1042
  %v1863 = vpop.permute.xlu0 %1862
  %1866 = vset.pattern.permute.xlu0 0
  %1867 = vperm.xlu0 %1866, %v1044
  %v1868 = vpop.permute.xlu0 %1867
  %1871 = vset.pattern.permute.xlu0 0
  %1872 = vperm.xlu0 %1871, %v1046
  %v1873 = vpop.permute.xlu0 %1872
  %1876 = vset.pattern.permute.xlu0 0
  %1877 = vperm.xlu0 %1876, %v1048
  %v1878 = vpop.permute.xlu0 %1877
  %1881 = vset.pattern.permute.xlu0 0
  %1882 = vperm.xlu0 %1881, %v1050
  %v1883 = vpop.permute.xlu0 %1882
  %1886 = vset.pattern.permute.xlu0 0
  %1887 = vperm.xlu0 %1886, %v1052
  %v1888 = vpop.permute.xlu0 %1887
  %1891 = vset.pattern.permute.xlu0 0
  %1892 = vperm.xlu0 %1891, %v1054
  %v1893 = vpop.permute.xlu0 %1892
  %1896 = vset.pattern.permute.xlu0 0
  %1897 = vperm.xlu0 %1896, %v1056
  %v1898 = vpop.permute.xlu0 %1897
  %1901 = vset.pattern.permute.xlu0 0
  %1902 = vperm.xlu0 %1901, %v1058
  %v1903 = vpop.permute.xlu0 %1902
  %1906 = vset.pattern.permute.xlu0 0
  %1907 = vperm.xlu0 %1906, %v1060
  %v1908 = vpop.permute.xlu0 %1907
  %1911 = vset.pattern.permute.xlu0 0
  %1912 = vperm.xlu0 %1911, %v1062
  %v1913 = vpop.permute.xlu0 %1912
  %1916 = vset.pattern.permute.xlu0 0
  %1917 = vperm.xlu0 %1916, %v1064
  %v1918 = vpop.permute.xlu0 %1917
  %1921 = vset.pattern.permute.xlu0 0
  %1922 = vperm.xlu0 %1921, %v1066
  %v1923 = vpop.permute.xlu0 %1922
  %1926 = vset.pattern.permute.xlu0 0
  %1927 = vperm.xlu0 %1926, %v1068
  %v1928 = vpop.permute.xlu0 %1927
  %1931 = vset.pattern.permute.xlu0 0
  %1932 = vperm.xlu0 %1931, %v1070
  %v1933 = vpop.permute.xlu0 %1932
  %1936 = vset.pattern.permute.xlu0 0
  %1937 = vperm.xlu0 %1936, %v1072
  %v1938 = vpop.permute.xlu0 %1937
  %1941 = vset.pattern.permute.xlu0 0
  %1942 = vperm.xlu0 %1941, %v1074
  %v1943 = vpop.permute.xlu0 %1942
  %1946 = vset.pattern.permute.xlu0 0
  %1947 = vperm.xlu0 %1946, %v1076
  %v1948 = vpop.permute.xlu0 %1947
  %1951 = vset.pattern.permute.xlu0 0
  %1952 = vperm.xlu0 %1951, %v1078
  %v1953 = vpop.permute.xlu0 %1952
  %1956 = vset.pattern.permute.xlu0 0
  %1957 = vperm.xlu0 %1956, %v1080
  %v1958 = vpop.permute.xlu0 %1957
  %1961 = vset.pattern.permute.xlu0 0
  %1962 = vperm.xlu0 %1961, %v1082
  %v1963 = vpop.permute.xlu0 %1962
  %1966 = vset.pattern.permute.xlu0 0
  %1967 = vperm.xlu0 %1966, %v1084
  %v1968 = vpop.permute.xlu0 %1967
  %1971 = vset.pattern.permute.xlu0 0
  %1972 = vperm.xlu0 %1971, %v1086
  %v1973 = vpop.permute.xlu0 %1972
  %1976 = vset.pattern.permute.xlu0 0
  %1977 = vperm.xlu0 %1976, %v1088
  %v1978 = vpop.permute.xlu0 %1977
  %1981 = vset.pattern.permute.xlu0 0
  %1982 = vperm.xlu0 %1981, %v1090
  %v1983 = vpop.permute.xlu0 %1982
  %1986 = vset.pattern.permute.xlu0 0
  %1987 = vperm.xlu0 %1986, %v1092
  %v1988 = vpop.permute.xlu0 %1987
  %1991 = vset.pattern.permute.xlu0 0
  %1992 = vperm.xlu0 %1991, %v1094
  %v1993 = vpop.permute.xlu0 %1992
  %1996 = vset.pattern.permute.xlu0 0
  %1997 = vperm.xlu0 %1996, %v1096
  %v1998 = vpop.permute.xlu0 %1997
  %2001 = vset.pattern.permute.xlu0 0
  %2002 = vperm.xlu0 %2001, %v1098
  %v2003 = vpop.permute.xlu0 %2002
  %2006 = vset.pattern.permute.xlu0 0
  %2007 = vperm.xlu0 %2006, %v1100
  %v2008 = vpop.permute.xlu0 %2007
  %2011 = vset.pattern.permute.xlu0 0
  %2012 = vperm.xlu0 %2011, %v1102
  %v2013 = vpop.permute.xlu0 %2012
  %2016 = vset.pattern.permute.xlu0 0
  %2017 = vperm.xlu0 %2016, %v1104
  %v2018 = vpop.permute.xlu0 %2017
  %2021 = vset.pattern.permute.xlu0 0
  %2022 = vperm.xlu0 %2021, %v1106
  %v2023 = vpop.permute.xlu0 %2022
  %2026 = vset.pattern.permute.xlu0 0
  %2027 = vperm.xlu0 %2026, %v1108
  %v2028 = vpop.permute.xlu0 %2027
  %2031 = vset.pattern.permute.xlu0 0
  %2032 = vperm.xlu0 %2031, %v1110
  %v2033 = vpop.permute.xlu0 %2032
  %2036 = vset.pattern.permute.xlu0 0
  %2037 = vperm.xlu0 %2036, %v1112
  %v2038 = vpop.permute.xlu0 %2037
  %2041 = vset.pattern.permute.xlu0 0
  %2042 = vperm.xlu0 %2041, %v1114
  %v2043 = vpop.permute.xlu0 %2042
  %2046 = vset.pattern.permute.xlu0 0
  %2047 = vperm.xlu0 %2046, %v1116
  %v2048 = vpop.permute.xlu0 %2047
  %2051 = vset.pattern.permute.xlu0 0
  %2052 = vperm.xlu0 %2051, %v1118
  %v2053 = vpop.permute.xlu0 %2052
  %v2055 = vmul.f32 %v1119, %v1278
  %v2056 = vmul.f32 %v1120, %v1283
  %v2057 = vmul.f32 %v1121, %v1288
  %v2058 = vmul.f32 %v1122, %v1293
  %v2059 = vmul.f32 %v1123, %v1298
  %v2060 = vmul.f32 %v1124, %v1303
  %v2061 = vmul.f32 %v1125, %v1308
  %v2062 = vmul.f32 %v1126, %v1313
  %v2063 = vmul.f32 %v1127, %v1318
  %v2064 = vmul.f32 %v1128, %v1323
  %v2065 = vmul.f32 %v1129, %v1328
  %v2066 = vmul.f32 %v1130, %v1333
  %v2067 = vmul.f32 %v1131, %v1338
  %v2068 = vmul.f32 %v1132, %v1343
  %v2069 = vmul.f32 %v1133, %v1348
  %v2070 = vmul.f32 %v1134, %v1353
  %v2071 = vmul.f32 %v1135, %v1358
  %v2072 = vmul.f32 %v1136, %v1363
  %v2073 = vmul.f32 %v1137, %v1368
  %v2074 = vmul.f32 %v1138, %v1373
  %v2075 = vmul.f32 %v1139, %v1378
  %v2076 = vmul.f32 %v1140, %v1383
  %v2077 = vmul.f32 %v1141, %v1388
  %v2078 = vmul.f32 %v1142, %v1393
  %v2079 = vmul.f32 %v1143, %v1398
  %v2080 = vmul.f32 %v1144, %v1403
  %v2081 = vmul.f32 %v1145, %v1408
  %v2082 = vmul.f32 %v1146, %v1413
  %v2083 = vmul.f32 %v1147, %v1418
  %v2084 = vmul.f32 %v1148, %v1423
  %v2085 = vmul.f32 %v1149, %v1428
  %v2086 = vmul.f32 %v1150, %v1433
  %v2087 = vmul.f32 %v1151, %v1438
  %v2088 = vmul.f32 %v1152, %v1443
  %v2089 = vmul.f32 %v1153, %v1448
  %v2090 = vmul.f32 %v1154, %v1453
  %v2091 = vmul.f32 %v1155, %v1458
  %v2092 = vmul.f32 %v1156, %v1463
  %v2093 = vmul.f32 %v1157, %v1468
  %v2094 = vmul.f32 %v1158, %v1473
  %v2095 = vmul.f32 %v1159, %v1478
  %v2096 = vmul.f32 %v1160, %v1483
  %v2097 = vmul.f32 %v1161, %v1488
  %v2098 = vmul.f32 %v1162, %v1493
  %v2099 = vmul.f32 %v1163, %v1498
  %v2100 = vmul.f32 %v1164, %v1503
  %v2101 = vmul.f32 %v1165, %v1508
  %v2102 = vmul.f32 %v1166, %v1513
  %v2103 = vmul.f32 %v1167, %v1518
  %v2104 = vmul.f32 %v1168, %v1523
  %v2105 = vmul.f32 %v1169, %v1528
  %v2106 = vmul.f32 %v1170, %v1533
  %v2107 = vmul.f32 %v1171, %v1538
  %v2108 = vmul.f32 %v1172, %v1543
  %v2109 = vmul.f32 %v1173, %v1548
  %v2110 = vmul.f32 %v1174, %v1553
  %v2111 = vmul.f32 %v1175, %v1558
  %v2112 = vmul.f32 %v1176, %v1563
  %v2113 = vmul.f32 %v1177, %v1568
  %v2114 = vmul.f32 %v1178, %v1573
  %v2115 = vmul.f32 %v1179, %v1578
  %v2116 = vmul.f32 %v1180, %v1583
  %v2117 = vmul.f32 %v1181, %v1588
  %v2118 = vmul.f32 %v1182, %v1593
  %v2119 = vmul.f32 %v1183, %v1598
  %v2120 = vmul.f32 %v1184, %v1603
  %v2121 = vmul.f32 %v1185, %v1608
  %v2122 = vmul.f32 %v1186, %v1613
  %v2123 = vmul.f32 %v1187, %v1618
  %v2124 = vmul.f32 %v1188, %v1623
  %v2125 = vmul.f32 %v1189, %v1628
  %v2126 = vmul.f32 %v1190, %v1633
  %v2127 = vmul.f32 %v1191, %v1638
  %v2128 = vmul.f32 %v1192, %v1643
  %v2129 = vmul.f32 %v1193, %v1648
  %v2130 = vmul.f32 %v1194, %v1653
  %v2131 = vmul.f32 %v1195, %v1658
  %v2132 = vmul.f32 %v1196, %v1663
  %v2133 = vmul.f32 %v1197, %v1668
  %v2134 = vmul.f32 %v1198, %v1673
  %v2135 = vmul.f32 %v1199, %v1678
  %v2136 = vmul.f32 %v1200, %v1683
  %v2137 = vmul.f32 %v1201, %v1688
  %v2138 = vmul.f32 %v1202, %v1693
  %v2139 = vmul.f32 %v1203, %v1698
  %v2140 = vmul.f32 %v1204, %v1703
  %v2141 = vmul.f32 %v1205, %v1708
  %v2142 = vmul.f32 %v1206, %v1713
  %v2143 = vmul.f32 %v1207, %v1718
  %v2144 = vmul.f32 %v1208, %v1723
  %v2145 = vmul.f32 %v1209, %v1728
  %v2146 = vmul.f32 %v1210, %v1733
  %v2147 = vmul.f32 %v1211, %v1738
  %v2148 = vmul.f32 %v1212, %v1743
  %v2149 = vmul.f32 %v1213, %v1748
  %v2150 = vmul.f32 %v1214, %v1753
  %v2151 = vmul.f32 %v1215, %v1758
  %v2152 = vmul.f32 %v1216, %v1763
  %v2153 = vmul.f32 %v1217, %v1768
  %v2154 = vmul.f32 %v1218, %v1773
  %v2155 = vmul.f32 %v1219, %v1778
  %v2156 = vmul.f32 %v1220, %v1783
  %v2157 = vmul.f32 %v1221, %v1788
  %v2158 = vmul.f32 %v1222, %v1793
  %v2159 = vmul.f32 %v1223, %v1798
  %v2160 = vmul.f32 %v1224, %v1803
  %v2161 = vmul.f32 %v1225, %v1808
  %v2162 = vmul.f32 %v1226, %v1813
  %v2163 = vmul.f32 %v1227, %v1818
  %v2164 = vmul.f32 %v1228, %v1823
  %v2165 = vmul.f32 %v1229, %v1828
  %v2166 = vmul.f32 %v1230, %v1833
  %v2167 = vmul.f32 %v1231, %v1838
  %v2168 = vmul.f32 %v1232, %v1843
  %v2169 = vmul.f32 %v1233, %v1848
  %v2170 = vmul.f32 %v1234, %v1853
  %v2171 = vmul.f32 %v1235, %v1858
  %v2172 = vmul.f32 %v1236, %v1863
  %v2173 = vmul.f32 %v1237, %v1868
  %v2174 = vmul.f32 %v1238, %v1873
  %v2175 = vmul.f32 %v1239, %v1878
  %v2176 = vmul.f32 %v1240, %v1883
  %v2177 = vmul.f32 %v1241, %v1888
  %v2178 = vmul.f32 %v1242, %v1893
  %v2179 = vmul.f32 %v1243, %v1898
  %v2180 = vmul.f32 %v1244, %v1903
  %v2181 = vmul.f32 %v1245, %v1908
  %v2182 = vmul.f32 %v1246, %v1913
  %v2183 = vmul.f32 %v1247, %v1918
  %v2184 = vmul.f32 %v1248, %v1923
  %v2185 = vmul.f32 %v1249, %v1928
  %v2186 = vmul.f32 %v1250, %v1933
  %v2187 = vmul.f32 %v1251, %v1938
  %v2188 = vmul.f32 %v1252, %v1943
  %v2189 = vmul.f32 %v1253, %v1948
  %v2190 = vmul.f32 %v1254, %v1953
  %v2191 = vmul.f32 %v1255, %v1958
  %v2192 = vmul.f32 %v1256, %v1963
  %v2193 = vmul.f32 %v1257, %v1968
  %v2194 = vmul.f32 %v1258, %v1973
  %v2195 = vmul.f32 %v1259, %v1978
  %v2196 = vmul.f32 %v1260, %v1983
  %v2197 = vmul.f32 %v1261, %v1988
  %v2198 = vmul.f32 %v1262, %v1993
  %v2199 = vmul.f32 %v1263, %v1998
  %v2200 = vmul.f32 %v1264, %v2003
  %v2201 = vmul.f32 %v1265, %v2008
  %v2202 = vmul.f32 %v1266, %v2013
  %v2203 = vmul.f32 %v1267, %v2018
  %v2204 = vmul.f32 %v1268, %v2023
  %v2205 = vmul.f32 %v1269, %v2028
  %v2206 = vmul.f32 %v1270, %v2033
  %v2207 = vmul.f32 %v1271, %v2038
  %v2208 = vmul.f32 %v1272, %v2043
  %v2209 = vmul.f32 %v1273, %v2048
  %v2210 = vmul.f32 %v1274, %v2053
  %v2211 = vld [vmem:[%s3] sm:$0xff]
  %v2212 = vld [vmem:[%s3 + $0x8] sm:$0xff]
  %v2213 = vld [vmem:[%s3 + $0x10] sm:$0xff]
  %v2214 = vld [vmem:[%s3 + $0x18] sm:$0xff]
  %v2215 = vld [vmem:[%s3 + $0x20] sm:$0xff]
  %v2216 = vld [vmem:[%s3 + $0x28] sm:$0xff]
  %v2217 = vld [vmem:[%s3 + $0x30] sm:$0xff]
  %v2218 = vld [vmem:[%s3 + $0x38] sm:$0xff]
  %v2219 = vld [vmem:[%s3 + $0x40] sm:$0xff]
  %v2220 = vld [vmem:[%s3 + $0x48] sm:$0xff]
  %v2221 = vld [vmem:[%s3 + $0x50] sm:$0xff]
  %v2222 = vld [vmem:[%s3 + $0x58] sm:$0xff]
  %v2223 = vld [vmem:[%s3 + $0x60] sm:$0xff]
  %v2224 = vld [vmem:[%s3 + $0x68] sm:$0xff]
  %v2225 = vld [vmem:[%s3 + $0x70] sm:$0xff]
  %v2226 = vld [vmem:[%s3 + $0x78] sm:$0xff]
  %v2227 = vld [vmem:[%s3 + $0x80] sm:$0xff]
  %v2228 = vld [vmem:[%s3 + $0x88] sm:$0xff]
  %v2229 = vld [vmem:[%s3 + $0x90] sm:$0xff]
  %v2230 = vld [vmem:[%s3 + $0x98] sm:$0xff]
  %v2231 = vld [vmem:[%s3 + $0xa0] sm:$0xff]
  %v2232 = vld [vmem:[%s3 + $0xa8] sm:$0xff]
  %v2233 = vld [vmem:[%s3 + $0xb0] sm:$0xff]
  %v2234 = vld [vmem:[%s3 + $0xb8] sm:$0xff]
  %v2235 = vld [vmem:[%s3 + $0xc0] sm:$0xff]
  %v2236 = vld [vmem:[%s3 + $0xc8] sm:$0xff]
  %v2237 = vld [vmem:[%s3 + $0xd0] sm:$0xff]
  %v2238 = vld [vmem:[%s3 + $0xd8] sm:$0xff]
  %v2239 = vld [vmem:[%s3 + $0xe0] sm:$0xff]
  %v2240 = vld [vmem:[%s3 + $0xe8] sm:$0xff]
  %v2241 = vld [vmem:[%s3 + $0xf0] sm:$0xff]
  %v2242 = vld [vmem:[%s3 + $0xf8] sm:$0xff]
  %v2243 = vld [vmem:[%s3 + $0x100] sm:$0xff]
  %v2244 = vld [vmem:[%s3 + $0x108] sm:$0xff]
  %v2245 = vld [vmem:[%s3 + $0x110] sm:$0xff]
  %v2246 = vld [vmem:[%s3 + $0x118] sm:$0xff]
  %v2247 = vld [vmem:[%s3 + $0x120] sm:$0xff]
  %v2248 = vld [vmem:[%s3 + $0x128] sm:$0xff]
  %v2249 = vld [vmem:[%s3 + $0x130] sm:$0xff]
  %v2250 = vld [vmem:[%s3 + $0x138] sm:$0xff]
  %v2251 = vld [vmem:[%s3 + $0x140] sm:$0xff]
  %v2252 = vld [vmem:[%s3 + $0x148] sm:$0xff]
  %v2253 = vld [vmem:[%s3 + $0x150] sm:$0xff]
  %v2254 = vld [vmem:[%s3 + $0x158] sm:$0xff]
  %v2255 = vld [vmem:[%s3 + $0x160] sm:$0xff]
  %v2256 = vld [vmem:[%s3 + $0x168] sm:$0xff]
  %v2257 = vld [vmem:[%s3 + $0x170] sm:$0xff]
  %v2258 = vld [vmem:[%s3 + $0x178] sm:$0xff]
  %v2259 = vld [vmem:[%s3 + $0x180] sm:$0xff]
  %v2260 = vld [vmem:[%s3 + $0x188] sm:$0xff]
  %v2261 = vld [vmem:[%s3 + $0x190] sm:$0xff]
  %v2262 = vld [vmem:[%s3 + $0x198] sm:$0xff]
  %v2263 = vld [vmem:[%s3 + $0x1a0] sm:$0xff]
  %v2264 = vld [vmem:[%s3 + $0x1a8] sm:$0xff]
  %v2265 = vld [vmem:[%s3 + $0x1b0] sm:$0xff]
  %v2266 = vld [vmem:[%s3 + $0x1b8] sm:$0xff]
  %v2267 = vld [vmem:[%s3 + $0x1c0] sm:$0xff]
  %v2268 = vld [vmem:[%s3 + $0x1c8] sm:$0xff]
  %v2269 = vld [vmem:[%s3 + $0x1d0] sm:$0xff]
  %v2270 = vld [vmem:[%s3 + $0x1d8] sm:$0xff]
  %v2271 = vld [vmem:[%s3 + $0x1e0] sm:$0xff]
  %v2272 = vld [vmem:[%s3 + $0x1e8] sm:$0xff]
  %v2273 = vld [vmem:[%s3 + $0x1f0] sm:$0xff]
  %v2274 = vld [vmem:[%s3 + $0x1f8] sm:$0xff]
  %v2275 = vld [vmem:[%s3 + $0x200] sm:$0xff]
  %v2276 = vld [vmem:[%s3 + $0x208] sm:$0xff]
  %v2277 = vld [vmem:[%s3 + $0x210] sm:$0xff]
  %v2278 = vld [vmem:[%s3 + $0x218] sm:$0xff]
  %v2279 = vld [vmem:[%s3 + $0x220] sm:$0xff]
  %v2280 = vld [vmem:[%s3 + $0x228] sm:$0xff]
  %v2281 = vld [vmem:[%s3 + $0x230] sm:$0xff]
  %v2282 = vld [vmem:[%s3 + $0x238] sm:$0xff]
  %v2283 = vld [vmem:[%s3 + $0x240] sm:$0xff]
  %v2284 = vld [vmem:[%s3 + $0x248] sm:$0xff]
  %v2285 = vld [vmem:[%s3 + $0x250] sm:$0xff]
  %v2286 = vld [vmem:[%s3 + $0x258] sm:$0xff]
  %v2287 = vld [vmem:[%s3 + $0x260] sm:$0xff]
  %v2288 = vld [vmem:[%s3 + $0x268] sm:$0xff]
  %v2289 = vld [vmem:[%s3 + $0x270] sm:$0xff]
  %v2290 = vld [vmem:[%s3 + $0x278] sm:$0xff]
  %v2291 = vld [vmem:[%s3 + $0x280] sm:$0xff]
  %v2292 = vld [vmem:[%s3 + $0x288] sm:$0xff]
  %v2293 = vld [vmem:[%s3 + $0x290] sm:$0xff]
  %v2294 = vld [vmem:[%s3 + $0x298] sm:$0xff]
  %v2295 = vld [vmem:[%s3 + $0x2a0] sm:$0xff]
  %v2296 = vld [vmem:[%s3 + $0x2a8] sm:$0xff]
  %v2297 = vld [vmem:[%s3 + $0x2b0] sm:$0xff]
  %v2298 = vld [vmem:[%s3 + $0x2b8] sm:$0xff]
  %v2299 = vld [vmem:[%s3 + $0x2c0] sm:$0xff]
  %v2300 = vld [vmem:[%s3 + $0x2c8] sm:$0xff]
  %v2301 = vld [vmem:[%s3 + $0x2d0] sm:$0xff]
  %v2302 = vld [vmem:[%s3 + $0x2d8] sm:$0xff]
  %v2303 = vld [vmem:[%s3 + $0x2e0] sm:$0xff]
  %v2304 = vld [vmem:[%s3 + $0x2e8] sm:$0xff]
  %v2305 = vld [vmem:[%s3 + $0x2f0] sm:$0xff]
  %v2306 = vld [vmem:[%s3 + $0x2f8] sm:$0xff]
  %v2307 = vld [vmem:[%s3 + $0x300] sm:$0xff]
  %v2308 = vld [vmem:[%s3 + $0x308] sm:$0xff]
  %v2309 = vld [vmem:[%s3 + $0x310] sm:$0xff]
  %v2310 = vld [vmem:[%s3 + $0x318] sm:$0xff]
  %v2311 = vld [vmem:[%s3 + $0x320] sm:$0xff]
  %v2312 = vld [vmem:[%s3 + $0x328] sm:$0xff]
  %v2313 = vld [vmem:[%s3 + $0x330] sm:$0xff]
  %v2314 = vld [vmem:[%s3 + $0x338] sm:$0xff]
  %v2315 = vld [vmem:[%s3 + $0x340] sm:$0xff]
  %v2316 = vld [vmem:[%s3 + $0x348] sm:$0xff]
  %v2317 = vld [vmem:[%s3 + $0x350] sm:$0xff]
  %v2318 = vld [vmem:[%s3 + $0x358] sm:$0xff]
  %v2319 = vld [vmem:[%s3 + $0x360] sm:$0xff]
  %v2320 = vld [vmem:[%s3 + $0x368] sm:$0xff]
  %v2321 = vld [vmem:[%s3 + $0x370] sm:$0xff]
  %v2322 = vld [vmem:[%s3 + $0x378] sm:$0xff]
  %v2323 = vld [vmem:[%s3 + $0x380] sm:$0xff]
  %v2324 = vld [vmem:[%s3 + $0x388] sm:$0xff]
  %v2325 = vld [vmem:[%s3 + $0x390] sm:$0xff]
  %v2326 = vld [vmem:[%s3 + $0x398] sm:$0xff]
  %v2327 = vld [vmem:[%s3 + $0x3a0] sm:$0xff]
  %v2328 = vld [vmem:[%s3 + $0x3a8] sm:$0xff]
  %v2329 = vld [vmem:[%s3 + $0x3b0] sm:$0xff]
  %v2330 = vld [vmem:[%s3 + $0x3b8] sm:$0xff]
  %v2331 = vld [vmem:[%s3 + $0x3c0] sm:$0xff]
  %v2332 = vld [vmem:[%s3 + $0x3c8] sm:$0xff]
  %v2333 = vld [vmem:[%s3 + $0x3d0] sm:$0xff]
  %v2334 = vld [vmem:[%s3 + $0x3d8] sm:$0xff]
  %v2335 = vld [vmem:[%s3 + $0x3e0] sm:$0xff]
  %v2336 = vld [vmem:[%s3 + $0x3e8] sm:$0xff]
  %v2337 = vld [vmem:[%s3 + $0x3f0] sm:$0xff]
  %v2338 = vld [vmem:[%s3 + $0x3f8] sm:$0xff]
  %v2339 = vld [vmem:[%s3 + $0x400] sm:$0xff]
  %v2340 = vld [vmem:[%s3 + $0x408] sm:$0xff]
  %v2341 = vpack.c.bf16 %v2056, %v2055
  %v2342 = vpack.c.bf16 %v2058, %v2057
  %v2343 = vpack.c.bf16 %v2060, %v2059
  %v2344 = vpack.c.bf16 %v2062, %v2061
  %v2345 = vpack.c.bf16 %v2064, %v2063
  %v2346 = vpack.c.bf16 %v2066, %v2065
  %v2347 = vpack.c.bf16 %v2068, %v2067
  %v2348 = vpack.c.bf16 %v2070, %v2069
  %v2349 = vpack.c.bf16 %v2072, %v2071
  %v2350 = vpack.c.bf16 %v2074, %v2073
  %v2351 = vpack.c.bf16 %v2076, %v2075
  %v2352 = vpack.c.bf16 %v2078, %v2077
  %v2353 = vpack.c.bf16 %v2080, %v2079
  %v2354 = vpack.c.bf16 %v2082, %v2081
  %v2355 = vpack.c.bf16 %v2084, %v2083
  %v2356 = vpack.c.bf16 %v2086, %v2085
  %v2357 = vpack.c.bf16 %v2088, %v2087
  %v2358 = vpack.c.bf16 %v2090, %v2089
  %v2359 = vpack.c.bf16 %v2092, %v2091
  %v2360 = vpack.c.bf16 %v2094, %v2093
  %v2361 = vpack.c.bf16 %v2096, %v2095
  %v2362 = vpack.c.bf16 %v2098, %v2097
  %v2363 = vpack.c.bf16 %v2100, %v2099
  %v2364 = vpack.c.bf16 %v2102, %v2101
  %v2365 = vpack.c.bf16 %v2104, %v2103
  %v2366 = vpack.c.bf16 %v2106, %v2105
  %v2367 = vpack.c.bf16 %v2108, %v2107
  %v2368 = vpack.c.bf16 %v2110, %v2109
  %v2369 = vpack.c.bf16 %v2112, %v2111
  %v2370 = vpack.c.bf16 %v2114, %v2113
  %v2371 = vpack.c.bf16 %v2116, %v2115
  %v2372 = vpack.c.bf16 %v2118, %v2117
  %v2373 = vpack.c.bf16 %v2120, %v2119
  %v2374 = vpack.c.bf16 %v2122, %v2121
  %v2375 = vpack.c.bf16 %v2124, %v2123
  %v2376 = vpack.c.bf16 %v2126, %v2125
  %v2377 = vpack.c.bf16 %v2128, %v2127
  %v2378 = vpack.c.bf16 %v2130, %v2129
  %v2379 = vpack.c.bf16 %v2132, %v2131
  %v2380 = vpack.c.bf16 %v2134, %v2133
  %v2381 = vpack.c.bf16 %v2136, %v2135
  %v2382 = vpack.c.bf16 %v2138, %v2137
  %v2383 = vpack.c.bf16 %v2140, %v2139
  %v2384 = vpack.c.bf16 %v2142, %v2141
  %v2385 = vpack.c.bf16 %v2144, %v2143
  %v2386 = vpack.c.bf16 %v2146, %v2145
  %v2387 = vpack.c.bf16 %v2148, %v2147
  %v2388 = vpack.c.bf16 %v2150, %v2149
  %v2389 = vpack.c.bf16 %v2152, %v2151
  %v2390 = vpack.c.bf16 %v2154, %v2153
  %v2391 = vpack.c.bf16 %v2156, %v2155
  %v2392 = vpack.c.bf16 %v2158, %v2157
  %v2393 = vpack.c.bf16 %v2160, %v2159
  %v2394 = vpack.c.bf16 %v2162, %v2161
  %v2395 = vpack.c.bf16 %v2164, %v2163
  %v2396 = vpack.c.bf16 %v2166, %v2165
  %v2397 = vpack.c.bf16 %v2168, %v2167
  %v2398 = vpack.c.bf16 %v2170, %v2169
  %v2399 = vpack.c.bf16 %v2172, %v2171
  %v2400 = vpack.c.bf16 %v2174, %v2173
  %v2401 = vpack.c.bf16 %v2176, %v2175
  %v2402 = vpack.c.bf16 %v2178, %v2177
  %v2403 = vpack.c.bf16 %v2180, %v2179
  %v2404 = vpack.c.bf16 %v2182, %v2181
  %v2405 = vpack.c.bf16 %v2184, %v2183
  %v2406 = vpack.c.bf16 %v2186, %v2185
  %v2407 = vpack.c.bf16 %v2188, %v2187
  %v2408 = vpack.c.bf16 %v2190, %v2189
  %v2409 = vpack.c.bf16 %v2192, %v2191
  %v2410 = vpack.c.bf16 %v2194, %v2193
  %v2411 = vpack.c.bf16 %v2196, %v2195
  %v2412 = vpack.c.bf16 %v2198, %v2197
  %v2413 = vpack.c.bf16 %v2200, %v2199
  %v2414 = vpack.c.bf16 %v2202, %v2201
  %v2415 = vpack.c.bf16 %v2204, %v2203
  %v2416 = vpack.c.bf16 %v2206, %v2205
  %v2417 = vpack.c.bf16 %v2208, %v2207
  %v2418 = vpack.c.bf16 %v2210, %v2209
  %v2549 = vunpack.c.l.b16 %v2211
  %v2550 = vunpack.c.h.b16 %v2211
  %v2551 = vunpack.c.l.b16 %v2212
  %v2552 = vunpack.c.h.b16 %v2212
  %v2553 = vunpack.c.l.b16 %v2213
  %v2554 = vunpack.c.h.b16 %v2213
  %v2555 = vunpack.c.l.b16 %v2214
  %v2556 = vunpack.c.h.b16 %v2214
  %v2557 = vunpack.c.l.b16 %v2215
  %v2558 = vunpack.c.h.b16 %v2215
  %v2559 = vunpack.c.l.b16 %v2216
  %v2560 = vunpack.c.h.b16 %v2216
  %v2561 = vunpack.c.l.b16 %v2217
  %v2562 = vunpack.c.h.b16 %v2217
  %v2563 = vunpack.c.l.b16 %v2218
  %v2564 = vunpack.c.h.b16 %v2218
  %v2565 = vunpack.c.l.b16 %v2219
  %v2566 = vunpack.c.h.b16 %v2219
  %v2567 = vunpack.c.l.b16 %v2220
  %v2568 = vunpack.c.h.b16 %v2220
  %v2569 = vunpack.c.l.b16 %v2221
  %v2570 = vunpack.c.h.b16 %v2221
  %v2571 = vunpack.c.l.b16 %v2222
  %v2572 = vunpack.c.h.b16 %v2222
  %v2573 = vunpack.c.l.b16 %v2223
  %v2574 = vunpack.c.h.b16 %v2223
  %v2575 = vunpack.c.l.b16 %v2224
  %v2576 = vunpack.c.h.b16 %v2224
  %v2577 = vunpack.c.l.b16 %v2225
  %v2578 = vunpack.c.h.b16 %v2225
  %v2579 = vunpack.c.l.b16 %v2226
  %v2580 = vunpack.c.h.b16 %v2226
  %v2581 = vunpack.c.l.b16 %v2227
  %v2582 = vunpack.c.h.b16 %v2227
  %v2583 = vunpack.c.l.b16 %v2228
  %v2584 = vunpack.c.h.b16 %v2228
  %v2585 = vunpack.c.l.b16 %v2229
  %v2586 = vunpack.c.h.b16 %v2229
  %v2587 = vunpack.c.l.b16 %v2230
  %v2588 = vunpack.c.h.b16 %v2230
  %v2589 = vunpack.c.l.b16 %v2231
  %v2590 = vunpack.c.h.b16 %v2231
  %v2591 = vunpack.c.l.b16 %v2232
  %v2592 = vunpack.c.h.b16 %v2232
  %v2593 = vunpack.c.l.b16 %v2233
  %v2594 = vunpack.c.h.b16 %v2233
  %v2595 = vunpack.c.l.b16 %v2234
  %v2596 = vunpack.c.h.b16 %v2234
  %v2597 = vunpack.c.l.b16 %v2235
  %v2598 = vunpack.c.h.b16 %v2235
  %v2599 = vunpack.c.l.b16 %v2236
  %v2600 = vunpack.c.h.b16 %v2236
  %v2601 = vunpack.c.l.b16 %v2237
  %v2602 = vunpack.c.h.b16 %v2237
  %v2603 = vunpack.c.l.b16 %v2238
  %v2604 = vunpack.c.h.b16 %v2238
  %v2605 = vunpack.c.l.b16 %v2239
  %v2606 = vunpack.c.h.b16 %v2239
  %v2607 = vunpack.c.l.b16 %v2240
  %v2608 = vunpack.c.h.b16 %v2240
  %v2609 = vunpack.c.l.b16 %v2241
  %v2610 = vunpack.c.h.b16 %v2241
  %v2611 = vunpack.c.l.b16 %v2242
  %v2612 = vunpack.c.h.b16 %v2242
  %v2613 = vunpack.c.l.b16 %v2243
  %v2614 = vunpack.c.h.b16 %v2243
  %v2615 = vunpack.c.l.b16 %v2244
  %v2616 = vunpack.c.h.b16 %v2244
  %v2617 = vunpack.c.l.b16 %v2245
  %v2618 = vunpack.c.h.b16 %v2245
  %v2619 = vunpack.c.l.b16 %v2246
  %v2620 = vunpack.c.h.b16 %v2246
  %v2621 = vunpack.c.l.b16 %v2247
  %v2622 = vunpack.c.h.b16 %v2247
  %v2623 = vunpack.c.l.b16 %v2248
  %v2624 = vunpack.c.h.b16 %v2248
  %v2625 = vunpack.c.l.b16 %v2249
  %v2626 = vunpack.c.h.b16 %v2249
  %v2627 = vunpack.c.l.b16 %v2250
  %v2628 = vunpack.c.h.b16 %v2250
  %v2629 = vunpack.c.l.b16 %v2251
  %v2630 = vunpack.c.h.b16 %v2251
  %v2631 = vunpack.c.l.b16 %v2252
  %v2632 = vunpack.c.h.b16 %v2252
  %v2633 = vunpack.c.l.b16 %v2253
  %v2634 = vunpack.c.h.b16 %v2253
  %v2635 = vunpack.c.l.b16 %v2254
  %v2636 = vunpack.c.h.b16 %v2254
  %v2637 = vunpack.c.l.b16 %v2255
  %v2638 = vunpack.c.h.b16 %v2255
  %v2639 = vunpack.c.l.b16 %v2256
  %v2640 = vunpack.c.h.b16 %v2256
  %v2641 = vunpack.c.l.b16 %v2257
  %v2642 = vunpack.c.h.b16 %v2257
  %v2643 = vunpack.c.l.b16 %v2258
  %v2644 = vunpack.c.h.b16 %v2258
  %v2645 = vunpack.c.l.b16 %v2259
  %v2646 = vunpack.c.h.b16 %v2259
  %v2647 = vunpack.c.l.b16 %v2260
  %v2648 = vunpack.c.h.b16 %v2260
  %v2649 = vunpack.c.l.b16 %v2261
  %v2650 = vunpack.c.h.b16 %v2261
  %v2651 = vunpack.c.l.b16 %v2262
  %v2652 = vunpack.c.h.b16 %v2262
  %v2653 = vunpack.c.l.b16 %v2263
  %v2654 = vunpack.c.h.b16 %v2263
  %v2655 = vunpack.c.l.b16 %v2264
  %v2656 = vunpack.c.h.b16 %v2264
  %v2657 = vunpack.c.l.b16 %v2265
  %v2658 = vunpack.c.h.b16 %v2265
  %v2659 = vunpack.c.l.b16 %v2266
  %v2660 = vunpack.c.h.b16 %v2266
  %v2661 = vunpack.c.l.b16 %v2267
  %v2662 = vunpack.c.h.b16 %v2267
  %v2663 = vunpack.c.l.b16 %v2268
  %v2664 = vunpack.c.h.b16 %v2268
  %v2665 = vunpack.c.l.b16 %v2269
  %v2666 = vunpack.c.h.b16 %v2269
  %v2667 = vunpack.c.l.b16 %v2270
  %v2668 = vunpack.c.h.b16 %v2270
  %v2669 = vunpack.c.l.b16 %v2271
  %v2670 = vunpack.c.h.b16 %v2271
  %v2671 = vunpack.c.l.b16 %v2272
  %v2672 = vunpack.c.h.b16 %v2272
  %v2673 = vunpack.c.l.b16 %v2273
  %v2674 = vunpack.c.h.b16 %v2273
  %v2675 = vunpack.c.l.b16 %v2274
  %v2676 = vunpack.c.h.b16 %v2274
  %v2677 = vunpack.c.l.b16 %v2275
  %v2678 = vunpack.c.h.b16 %v2275
  %v2679 = vunpack.c.l.b16 %v2276
  %v2680 = vunpack.c.h.b16 %v2276
  %v2681 = vunpack.c.l.b16 %v2277
  %v2682 = vunpack.c.h.b16 %v2277
  %v2683 = vunpack.c.l.b16 %v2278
  %v2684 = vunpack.c.h.b16 %v2278
  %v2685 = vunpack.c.l.b16 %v2279
  %v2686 = vunpack.c.h.b16 %v2279
  %v2687 = vunpack.c.l.b16 %v2280
  %v2688 = vunpack.c.h.b16 %v2280
  %v2689 = vunpack.c.l.b16 %v2281
  %v2690 = vunpack.c.h.b16 %v2281
  %v2691 = vunpack.c.l.b16 %v2282
  %v2692 = vunpack.c.h.b16 %v2282
  %v2693 = vunpack.c.l.b16 %v2283
  %v2694 = vunpack.c.h.b16 %v2283
  %v2695 = vunpack.c.l.b16 %v2284
  %v2696 = vunpack.c.h.b16 %v2284
  %v2697 = vunpack.c.l.b16 %v2285
  %v2698 = vunpack.c.h.b16 %v2285
  %v2699 = vunpack.c.l.b16 %v2286
  %v2700 = vunpack.c.h.b16 %v2286
  %v2701 = vunpack.c.l.b16 %v2287
  %v2702 = vunpack.c.h.b16 %v2287
  %v2703 = vunpack.c.l.b16 %v2288
  %v2704 = vunpack.c.h.b16 %v2288
  %v2705 = vunpack.c.l.b16 %v2289
  %v2706 = vunpack.c.h.b16 %v2289
  %v2707 = vunpack.c.l.b16 %v2290
  %v2708 = vunpack.c.h.b16 %v2290
  %v2709 = vunpack.c.l.b16 %v2291
  %v2710 = vunpack.c.h.b16 %v2291
  %v2711 = vunpack.c.l.b16 %v2292
  %v2712 = vunpack.c.h.b16 %v2292
  %v2713 = vunpack.c.l.b16 %v2293
  %v2714 = vunpack.c.h.b16 %v2293
  %v2715 = vunpack.c.l.b16 %v2294
  %v2716 = vunpack.c.h.b16 %v2294
  %v2717 = vunpack.c.l.b16 %v2295
  %v2718 = vunpack.c.h.b16 %v2295
  %v2719 = vunpack.c.l.b16 %v2296
  %v2720 = vunpack.c.h.b16 %v2296
  %v2721 = vunpack.c.l.b16 %v2297
  %v2722 = vunpack.c.h.b16 %v2297
  %v2723 = vunpack.c.l.b16 %v2298
  %v2724 = vunpack.c.h.b16 %v2298
  %v2725 = vunpack.c.l.b16 %v2299
  %v2726 = vunpack.c.h.b16 %v2299
  %v2727 = vunpack.c.l.b16 %v2300
  %v2728 = vunpack.c.h.b16 %v2300
  %v2729 = vunpack.c.l.b16 %v2301
  %v2730 = vunpack.c.h.b16 %v2301
  %v2731 = vunpack.c.l.b16 %v2302
  %v2732 = vunpack.c.h.b16 %v2302
  %v2733 = vunpack.c.l.b16 %v2303
  %v2734 = vunpack.c.h.b16 %v2303
  %v2735 = vunpack.c.l.b16 %v2304
  %v2736 = vunpack.c.h.b16 %v2304
  %v2737 = vunpack.c.l.b16 %v2305
  %v2738 = vunpack.c.h.b16 %v2305
  %v2739 = vunpack.c.l.b16 %v2306
  %v2740 = vunpack.c.h.b16 %v2306
  %v2741 = vunpack.c.l.b16 %v2307
  %v2742 = vunpack.c.h.b16 %v2307
  %v2743 = vunpack.c.l.b16 %v2308
  %v2744 = vunpack.c.h.b16 %v2308
  %v2745 = vunpack.c.l.b16 %v2309
  %v2746 = vunpack.c.h.b16 %v2309
  %v2747 = vunpack.c.l.b16 %v2310
  %v2748 = vunpack.c.h.b16 %v2310
  %v2749 = vunpack.c.l.b16 %v2311
  %v2750 = vunpack.c.h.b16 %v2311
  %v2751 = vunpack.c.l.b16 %v2312
  %v2752 = vunpack.c.h.b16 %v2312
  %v2753 = vunpack.c.l.b16 %v2313
  %v2754 = vunpack.c.h.b16 %v2313
  %v2755 = vunpack.c.l.b16 %v2314
  %v2756 = vunpack.c.h.b16 %v2314
  %v2757 = vunpack.c.l.b16 %v2315
  %v2758 = vunpack.c.h.b16 %v2315
  %v2759 = vunpack.c.l.b16 %v2316
  %v2760 = vunpack.c.h.b16 %v2316
  %v2761 = vunpack.c.l.b16 %v2317
  %v2762 = vunpack.c.h.b16 %v2317
  %v2763 = vunpack.c.l.b16 %v2318
  %v2764 = vunpack.c.h.b16 %v2318
  %v2765 = vunpack.c.l.b16 %v2319
  %v2766 = vunpack.c.h.b16 %v2319
  %v2767 = vunpack.c.l.b16 %v2320
  %v2768 = vunpack.c.h.b16 %v2320
  %v2769 = vunpack.c.l.b16 %v2321
  %v2770 = vunpack.c.h.b16 %v2321
  %v2771 = vunpack.c.l.b16 %v2322
  %v2772 = vunpack.c.h.b16 %v2322
  %v2773 = vunpack.c.l.b16 %v2323
  %v2774 = vunpack.c.h.b16 %v2323
  %v2775 = vunpack.c.l.b16 %v2324
  %v2776 = vunpack.c.h.b16 %v2324
  %v2777 = vunpack.c.l.b16 %v2325
  %v2778 = vunpack.c.h.b16 %v2325
  %v2779 = vunpack.c.l.b16 %v2326
  %v2780 = vunpack.c.h.b16 %v2326
  %v2781 = vunpack.c.l.b16 %v2327
  %v2782 = vunpack.c.h.b16 %v2327
  %v2783 = vunpack.c.l.b16 %v2328
  %v2784 = vunpack.c.h.b16 %v2328
  %v2785 = vunpack.c.l.b16 %v2329
  %v2786 = vunpack.c.h.b16 %v2329
  %v2787 = vunpack.c.l.b16 %v2330
  %v2788 = vunpack.c.h.b16 %v2330
  %v2789 = vunpack.c.l.b16 %v2331
  %v2790 = vunpack.c.h.b16 %v2331
  %v2791 = vunpack.c.l.b16 %v2332
  %v2792 = vunpack.c.h.b16 %v2332
  %v2793 = vunpack.c.l.b16 %v2333
  %v2794 = vunpack.c.h.b16 %v2333
  %v2795 = vunpack.c.l.b16 %v2334
  %v2796 = vunpack.c.h.b16 %v2334
  %v2797 = vunpack.c.l.b16 %v2335
  %v2798 = vunpack.c.h.b16 %v2335
  %v2799 = vunpack.c.l.b16 %v2336
  %v2800 = vunpack.c.h.b16 %v2336
  %v2801 = vunpack.c.l.b16 %v2337
  %v2802 = vunpack.c.h.b16 %v2337
  %v2803 = vunpack.c.l.b16 %v2338
  %v2804 = vunpack.c.h.b16 %v2338
  %v2805 = vunpack.c.l.b16 %v2339
  %v2806 = vunpack.c.h.b16 %v2339
  %v2807 = vunpack.c.l.b16 %v2340
  %v2808 = vunpack.c.h.b16 %v2340
  %v2809 = vpack.c.b16 %v2559, %v2549
  %v2810 = vpack.c.b16 %v2560, %v2550
  %v2811 = vpack.c.b16 %v2561, %v2551
  %v2812 = vpack.c.b16 %v2562, %v2552
  %v2813 = vpack.c.b16 %v2563, %v2553
  %v2814 = vpack.c.b16 %v2564, %v2554
  %v2815 = vpack.c.b16 %v2565, %v2555
  %v2816 = vpack.c.b16 %v2566, %v2556
  %v2817 = vpack.c.b16 %v2567, %v2557
  %v2818 = vpack.c.b16 %v2568, %v2558
  %v2819 = vpack.c.b16 %v2579, %v2569
  %v2820 = vpack.c.b16 %v2580, %v2570
  %v2821 = vpack.c.b16 %v2581, %v2571
  %v2822 = vpack.c.b16 %v2582, %v2572
  %v2823 = vpack.c.b16 %v2583, %v2573
  %v2824 = vpack.c.b16 %v2584, %v2574
  %v2825 = vpack.c.b16 %v2585, %v2575
  %v2826 = vpack.c.b16 %v2586, %v2576
  %v2827 = vpack.c.b16 %v2587, %v2577
  %v2828 = vpack.c.b16 %v2588, %v2578
  %v2829 = vpack.c.b16 %v2599, %v2589
  %v2830 = vpack.c.b16 %v2600, %v2590
  %v2831 = vpack.c.b16 %v2601, %v2591
  %v2832 = vpack.c.b16 %v2602, %v2592
  %v2833 = vpack.c.b16 %v2603, %v2593
  %v2834 = vpack.c.b16 %v2604, %v2594
  %v2835 = vpack.c.b16 %v2605, %v2595
  %v2836 = vpack.c.b16 %v2606, %v2596
  %v2837 = vpack.c.b16 %v2607, %v2597
  %v2838 = vpack.c.b16 %v2608, %v2598
  %v2839 = vpack.c.b16 %v2619, %v2609
  %v2840 = vpack.c.b16 %v2620, %v2610
  %v2841 = vpack.c.b16 %v2621, %v2611
  %v2842 = vpack.c.b16 %v2622, %v2612
  %v2843 = vpack.c.b16 %v2623, %v2613
  %v2844 = vpack.c.b16 %v2624, %v2614
  %v2845 = vpack.c.b16 %v2625, %v2615
  %v2846 = vpack.c.b16 %v2626, %v2616
  %v2847 = vpack.c.b16 %v2627, %v2617
  %v2848 = vpack.c.b16 %v2628, %v2618
  %v2849 = vpack.c.b16 %v2639, %v2629
  %v2850 = vpack.c.b16 %v2640, %v2630
  %v2851 = vpack.c.b16 %v2641, %v2631
  %v2852 = vpack.c.b16 %v2642, %v2632
  %v2853 = vpack.c.b16 %v2643, %v2633
  %v2854 = vpack.c.b16 %v2644, %v2634
  %v2855 = vpack.c.b16 %v2645, %v2635
  %v2856 = vpack.c.b16 %v2646, %v2636
  %v2857 = vpack.c.b16 %v2647, %v2637
  %v2858 = vpack.c.b16 %v2648, %v2638
  %v2859 = vpack.c.b16 %v2659, %v2649
  %v2860 = vpack.c.b16 %v2660, %v2650
  %v2861 = vpack.c.b16 %v2661, %v2651
  %v2862 = vpack.c.b16 %v2662, %v2652
  %v2863 = vpack.c.b16 %v2663, %v2653
  %v2864 = vpack.c.b16 %v2664, %v2654
  %v2865 = vpack.c.b16 %v2665, %v2655
  %v2866 = vpack.c.b16 %v2666, %v2656
  %v2867 = vpack.c.b16 %v2667, %v2657
  %v2868 = vpack.c.b16 %v2668, %v2658
  %v2869 = vpack.c.b16 %v2679, %v2669
  %v2870 = vpack.c.b16 %v2680, %v2670
  %v2871 = vpack.c.b16 %v2681, %v2671
  %v2872 = vpack.c.b16 %v2682, %v2672
  %v2873 = vpack.c.b16 %v2683, %v2673
  %v2874 = vpack.c.b16 %v2684, %v2674
  %v2875 = vpack.c.b16 %v2685, %v2675
  %v2876 = vpack.c.b16 %v2686, %v2676
  %v2877 = vpack.c.b16 %v2687, %v2677
  %v2878 = vpack.c.b16 %v2688, %v2678
  %v2879 = vpack.c.b16 %v2699, %v2689
  %v2880 = vpack.c.b16 %v2700, %v2690
  %v2881 = vpack.c.b16 %v2701, %v2691
  %v2882 = vpack.c.b16 %v2702, %v2692
  %v2883 = vpack.c.b16 %v2703, %v2693
  %v2884 = vpack.c.b16 %v2704, %v2694
  %v2885 = vpack.c.b16 %v2705, %v2695
  %v2886 = vpack.c.b16 %v2706, %v2696
  %v2887 = vpack.c.b16 %v2707, %v2697
  %v2888 = vpack.c.b16 %v2708, %v2698
  %v2889 = vpack.c.b16 %v2719, %v2709
  %v2890 = vpack.c.b16 %v2720, %v2710
  %v2891 = vpack.c.b16 %v2721, %v2711
  %v2892 = vpack.c.b16 %v2722, %v2712
  %v2893 = vpack.c.b16 %v2723, %v2713
  %v2894 = vpack.c.b16 %v2724, %v2714
  %v2895 = vpack.c.b16 %v2725, %v2715
  %v2896 = vpack.c.b16 %v2726, %v2716
  %v2897 = vpack.c.b16 %v2727, %v2717
  %v2898 = vpack.c.b16 %v2728, %v2718
  %v2899 = vpack.c.b16 %v2739, %v2729
  %v2900 = vpack.c.b16 %v2740, %v2730
  %v2901 = vpack.c.b16 %v2741, %v2731
  %v2902 = vpack.c.b16 %v2742, %v2732
  %v2903 = vpack.c.b16 %v2743, %v2733
  %v2904 = vpack.c.b16 %v2744, %v2734
  %v2905 = vpack.c.b16 %v2745, %v2735
  %v2906 = vpack.c.b16 %v2746, %v2736
  %v2907 = vpack.c.b16 %v2747, %v2737
  %v2908 = vpack.c.b16 %v2748, %v2738
  %v2909 = vpack.c.b16 %v2759, %v2749
  %v2910 = vpack.c.b16 %v2760, %v2750
  %v2911 = vpack.c.b16 %v2761, %v2751
  %v2912 = vpack.c.b16 %v2762, %v2752
  %v2913 = vpack.c.b16 %v2763, %v2753
  %v2914 = vpack.c.b16 %v2764, %v2754
  %v2915 = vpack.c.b16 %v2765, %v2755
  %v2916 = vpack.c.b16 %v2766, %v2756
  %v2917 = vpack.c.b16 %v2767, %v2757
  %v2918 = vpack.c.b16 %v2768, %v2758
  %v2919 = vpack.c.b16 %v2779, %v2769
  %v2920 = vpack.c.b16 %v2780, %v2770
  %v2921 = vpack.c.b16 %v2781, %v2771
  %v2922 = vpack.c.b16 %v2782, %v2772
  %v2923 = vpack.c.b16 %v2783, %v2773
  %v2924 = vpack.c.b16 %v2784, %v2774
  %v2925 = vpack.c.b16 %v2785, %v2775
  %v2926 = vpack.c.b16 %v2786, %v2776
  %v2927 = vpack.c.b16 %v2787, %v2777
  %v2928 = vpack.c.b16 %v2788, %v2778
  %v2929 = vpack.c.b16 %v2799, %v2789
  %v2930 = vpack.c.b16 %v2800, %v2790
  %v2931 = vpack.c.b16 %v2801, %v2791
  %v2932 = vpack.c.b16 %v2802, %v2792
  %v2933 = vpack.c.b16 %v2803, %v2793
  %v2934 = vpack.c.b16 %v2804, %v2794
  %v2935 = vpack.c.b16 %v2805, %v2795
  %v2936 = vpack.c.b16 %v2806, %v2796
  %v2937 = vpack.c.b16 %v2807, %v2797
  %v2938 = vpack.c.b16 %v2808, %v2798
  %vm3056 = vcmask 785408
  %v3058 = vsel %vm3056, %v2818, 0
  %v3061 = vsel %vm3056, %v2828, 0
  %v3064 = vsel %vm3056, %v2838, 0
  %v3067 = vsel %vm3056, %v2848, 0
  %v3070 = vsel %vm3056, %v2858, 0
  %v3073 = vsel %vm3056, %v2868, 0
  %v3076 = vsel %vm3056, %v2878, 0
  %v3079 = vsel %vm3056, %v2888, 0
  %v3082 = vsel %vm3056, %v2898, 0
  %v3085 = vsel %vm3056, %v2908, 0
  %v3088 = vsel %vm3056, %v2918, 0
  %v3091 = vsel %vm3056, %v2928, 0
  %v3094 = vsel %vm3056, %v2938, 0
  %3096 = vmatprep.subr.bf16.mxu0 0
  %3097 = vmatpush1.bf16.msra.mxu0 %v2341
  %3098 = vmatprep.subr.bf16.mxu0 0
  %3099 = vmatpush1.bf16.msra.mxu0 %v2342
  %3100 = vmatprep.subr.bf16.mxu0 0
  %3101 = vmatpush1.bf16.msra.mxu0 %v2343
  %3102 = vmatprep.subr.bf16.mxu0 0
  %3103 = vmatpush1.bf16.msra.mxu0 %v2344
  %3104 = vmatprep.subr.bf16.mxu0 0
  %3105 = vmatpush1.bf16.msra.mxu0 %v2345
  %3106 = vmatprep.subr.bf16.mxu0 0
  %3107 = vmatpush1.bf16.msra.mxu0 %v2346
  %3108 = vmatprep.subr.bf16.mxu0 0
  %3109 = vmatpush1.bf16.msra.mxu0 %v2347
  %3110 = vmatprep.subr.bf16.mxu0 0
  %3111 = vmatpush1.bf16.msra.mxu0 %v2348
  %3112 = vmatprep.subr.bf16.mxu0 0
  %3113 = vmatpush1.bf16.msra.mxu0 %v2349
  %3114 = vmatprep.subr.bf16.mxu0 0
  %3115 = vmatpush1.bf16.msra.mxu0 %v2350
  %3116 = vmatprep.subr.bf16.mxu0 0
  %3117 = vmatpush1.bf16.msra.mxu0 %v2351
  %3118 = vmatprep.subr.bf16.mxu0 0
  %3119 = vmatpush1.bf16.msra.mxu0 %v2352
  %3120 = vmatprep.subr.bf16.mxu0 0
  %3121 = vmatpush1.bf16.msra.mxu0 %v2353
  %3122 = vmatprep.subr.bf16.mxu0 0
  %3123 = vmatpush1.bf16.msra.mxu0 %v2354
  %3124 = vmatprep.subr.bf16.mxu0 0
  %3125 = vmatpush1.bf16.msra.mxu0 %v2355
  %3126 = vmatprep.subr.bf16.mxu0 0
  %3127 = vmatpush1.bf16.msra.mxu0 %v2356
  %3128 = vmatprep.mubr.bf16.mxu0 %v2810
  %3129 = vmatmul.mubr.bf16.gmra.mrb[0].mxu0 %v2809
  %v3130 = vpop.f32.mrb[0].mxu0
  %v3131 = vadd.f32 0.0, %v3130
  %v3132 = vpop.f32.mrb[0].mxu0
  %v3133 = vpop.f32.mrb[0].mxu0
  %v3134 = vadd.f32 0.0, %v3133
  %v3135 = vpop.f32.mrb[0].mxu0
  %3136 = vmatprep.mubr.bf16.mxu0 %v2820
  %3137 = vmatmul.mubr.bf16.gmra.mrb[0].mxu0 %v2819
  %v3138 = vpop.f32.mrb[0].mxu0
  %v3139 = vadd.f32 0.0, %v3138
  %v3140 = vpop.f32.mrb[0].mxu0
  %v3141 = vpop.f32.mrb[0].mxu0
  %v3142 = vadd.f32 0.0, %v3141
  %v3143 = vpop.f32.mrb[0].mxu0
  %3144 = vmatprep.mubr.bf16.mxu0 %v2830
  %3145 = vmatmul.mubr.bf16.gmra.mrb[0].mxu0 %v2829
  %v3146 = vpop.f32.mrb[0].mxu0
  %v3147 = vadd.f32 0.0, %v3146
  %v3148 = vpop.f32.mrb[0].mxu0
  %v3149 = vpop.f32.mrb[0].mxu0
  %v3150 = vadd.f32 0.0, %v3149
  %v3151 = vpop.f32.mrb[0].mxu0
  %3152 = vmatprep.mubr.bf16.mxu0 %v2840
  %3153 = vmatmul.mubr.bf16.gmra.mrb[0].mxu0 %v2839
  %v3154 = vpop.f32.mrb[0].mxu0
  %v3155 = vadd.f32 0.0, %v3154
  %v3156 = vpop.f32.mrb[0].mxu0
  %v3157 = vpop.f32.mrb[0].mxu0
  %v3158 = vadd.f32 0.0, %v3157
  %v3159 = vpop.f32.mrb[0].mxu0
  %3160 = vmatprep.mubr.bf16.mxu0 %v2850
  %3161 = vmatmul.mubr.bf16.gmra.mrb[0].mxu0 %v2849
  %v3162 = vpop.f32.mrb[0].mxu0
  %v3163 = vadd.f32 0.0, %v3162
  %v3164 = vpop.f32.mrb[0].mxu0
  %v3165 = vpop.f32.mrb[0].mxu0
  %v3166 = vadd.f32 0.0, %v3165
  %v3167 = vpop.f32.mrb[0].mxu0
  %3168 = vmatprep.mubr.bf16.mxu0 %v2860
  %3169 = vmatmul.mubr.bf16.gmra.mrb[0].mxu0 %v2859
  %v3170 = vpop.f32.mrb[0].mxu0
  %v3171 = vadd.f32 0.0, %v3170
  %v3172 = vpop.f32.mrb[0].mxu0
  %v3173 = vpop.f32.mrb[0].mxu0
  %v3174 = vadd.f32 0.0, %v3173
  %v3175 = vpop.f32.mrb[0].mxu0
  %3176 = vmatprep.mubr.bf16.mxu0 %v2870
  %3177 = vmatmul.mubr.bf16.gmra.mrb[0].mxu0 %v2869
  %v3178 = vpop.f32.mrb[0].mxu0
  %v3179 = vadd.f32 0.0, %v3178
  %v3180 = vpop.f32.mrb[0].mxu0
  %v3181 = vpop.f32.mrb[0].mxu0
  %v3182 = vadd.f32 0.0, %v3181
  %v3183 = vpop.f32.mrb[0].mxu0
  %3184 = vmatprep.mubr.bf16.mxu0 %v2880
  %3185 = vmatmul.mubr.bf16.gmra.mrb[0].mxu0 %v2879
  %v3186 = vpop.f32.mrb[0].mxu0
  %v3187 = vadd.f32 0.0, %v3186
  %v3188 = vpop.f32.mrb[0].mxu0
  %v3189 = vpop.f32.mrb[0].mxu0
  %v3190 = vadd.f32 0.0, %v3189
  %v3191 = vpop.f32.mrb[0].mxu0
  %3192 = vmatprep.mubr.bf16.mxu0 %v2890
  %3193 = vmatmul.mubr.bf16.gmra.mrb[0].mxu0 %v2889
  %v3194 = vpop.f32.mrb[0].mxu0
  %v3195 = vadd.f32 0.0, %v3194
  %v3196 = vpop.f32.mrb[0].mxu0
  %v3197 = vpop.f32.mrb[0].mxu0
  %v3198 = vadd.f32 0.0, %v3197
  %v3199 = vpop.f32.mrb[0].mxu0
  %3200 = vmatprep.mubr.bf16.mxu0 %v2900
  %3201 = vmatmul.mubr.bf16.gmra.mrb[0].mxu0 %v2899
  %v3202 = vpop.f32.mrb[0].mxu0
  %v3203 = vadd.f32 0.0, %v3202
  %v3204 = vpop.f32.mrb[0].mxu0
  %v3205 = vpop.f32.mrb[0].mxu0
  %v3206 = vadd.f32 0.0, %v3205
  %v3207 = vpop.f32.mrb[0].mxu0
  %3208 = vmatprep.mubr.bf16.mxu0 %v2910
  %3209 = vmatmul.mubr.bf16.gmra.mrb[0].mxu0 %v2909
  %v3210 = vpop.f32.mrb[0].mxu0
  %v3211 = vadd.f32 0.0, %v3210
  %v3212 = vpop.f32.mrb[0].mxu0
  %v3213 = vpop.f32.mrb[0].mxu0
  %v3214 = vadd.f32 0.0, %v3213
  %v3215 = vpop.f32.mrb[0].mxu0
  %3216 = vmatprep.mubr.bf16.mxu0 %v2920
  %3217 = vmatmul.mubr.bf16.gmra.mrb[0].mxu0 %v2919
  %v3218 = vpop.f32.mrb[0].mxu0
  %v3219 = vadd.f32 0.0, %v3218
  %v3220 = vpop.f32.mrb[0].mxu0
  %v3221 = vpop.f32.mrb[0].mxu0
  %v3222 = vadd.f32 0.0, %v3221
  %v3223 = vpop.f32.mrb[0].mxu0
  %3224 = vmatprep.mubr.bf16.mxu0 %v2930
  %3225 = vmatmul.mubr.bf16.gmra.mrb[0].mxu0 %v2929
  %v3226 = vpop.f32.mrb[0].mxu0
  %v3227 = vadd.f32 0.0, %v3226
  %v3228 = vpop.f32.mrb[0].mxu0
  %v3229 = vpop.f32.mrb[0].mxu0
  %v3230 = vadd.f32 0.0, %v3229
  %v3231 = vpop.f32.mrb[0].mxu0
  %3232 = vdwg.mxu0
  %3233 = vmatprep.subr.bf16.mxu0 0
  %3234 = vmatpush1.bf16.msra.mxu0 %v2357
  %3235 = vmatprep.subr.bf16.mxu0 0
  %3236 = vmatpush1.bf16.msra.mxu0 %v2358
  %3237 = vmatprep.subr.bf16.mxu0 0
  %3238 = vmatpush1.bf16.msra.mxu0 %v2359
  %3239 = vmatprep.subr.bf16.mxu0 0
  %3240 = vmatpush1.bf16.msra.mxu0 %v2360
  %3241 = vmatprep.subr.bf16.mxu0 0
  %3242 = vmatpush1.bf16.msra.mxu0 %v2361
  %3243 = vmatprep.subr.bf16.mxu0 0
  %3244 = vmatpush1.bf16.msra.mxu0 %v2362
  %3245 = vmatprep.subr.bf16.mxu0 0
  %3246 = vmatpush1.bf16.msra.mxu0 %v2363
  %3247 = vmatprep.subr.bf16.mxu0 0
  %3248 = vmatpush1.bf16.msra.mxu0 %v2364
  %3249 = vmatprep.subr.bf16.mxu0 0
  %3250 = vmatpush1.bf16.msra.mxu0 %v2365
  %3251 = vmatprep.subr.bf16.mxu0 0
  %3252 = vmatpush1.bf16.msra.mxu0 %v2366
  %3253 = vmatprep.subr.bf16.mxu0 0
  %3254 = vmatpush1.bf16.msra.mxu0 %v2367
  %3255 = vmatprep.subr.bf16.mxu0 0
  %3256 = vmatpush1.bf16.msra.mxu0 %v2368
  %3257 = vmatprep.subr.bf16.mxu0 0
  %3258 = vmatpush1.bf16.msra.mxu0 %v2369
  %3259 = vmatprep.subr.bf16.mxu0 0
  %3260 = vmatpush1.bf16.msra.mxu0 %v2370
  %3261 = vmatprep.subr.bf16.mxu0 0
  %3262 = vmatpush1.bf16.msra.mxu0 %v2371
  %3263 = vmatprep.subr.bf16.mxu0 0
  %3264 = vmatpush1.bf16.msra.mxu0 %v2372
  %3265 = vmatprep.mubr.bf16.mxu0 %v2812
  %3266 = vmatmul.mubr.bf16.gmra.mrb[0].mxu0 %v2811
  %v3267 = vpop.f32.mrb[0].mxu0
  %v3268 = vadd.f32 %v3131, %v3267
  %v3269 = vpop.f32.mrb[0].mxu0
  %v3270 = vpop.f32.mrb[0].mxu0
  %v3271 = vadd.f32 %v3134, %v3270
  %v3272 = vpop.f32.mrb[0].mxu0
  %3273 = vmatprep.mubr.bf16.mxu0 %v2822
  %3274 = vmatmul.mubr.bf16.gmra.mrb[0].mxu0 %v2821
  %v3275 = vpop.f32.mrb[0].mxu0
  %v3276 = vadd.f32 %v3139, %v3275
  %v3277 = vpop.f32.mrb[0].mxu0
  %v3278 = vpop.f32.mrb[0].mxu0
  %v3279 = vadd.f32 %v3142, %v3278
  %v3280 = vpop.f32.mrb[0].mxu0
  %3281 = vmatprep.mubr.bf16.mxu0 %v2832
  %3282 = vmatmul.mubr.bf16.gmra.mrb[0].mxu0 %v2831
  %v3283 = vpop.f32.mrb[0].mxu0
  %v3284 = vadd.f32 %v3147, %v3283
  %v3285 = vpop.f32.mrb[0].mxu0
  %v3286 = vpop.f32.mrb[0].mxu0
  %v3287 = vadd.f32 %v3150, %v3286
  %v3288 = vpop.f32.mrb[0].mxu0
  %3289 = vmatprep.mubr.bf16.mxu0 %v2842
  %3290 = vmatmul.mubr.bf16.gmra.mrb[0].mxu0 %v2841
  %v3291 = vpop.f32.mrb[0].mxu0
  %v3292 = vadd.f32 %v3155, %v3291
  %v3293 = vpop.f32.mrb[0].mxu0
  %v3294 = vpop.f32.mrb[0].mxu0
  %v3295 = vadd.f32 %v3158, %v3294
  %v3296 = vpop.f32.mrb[0].mxu0
  %3297 = vmatprep.mubr.bf16.mxu0 %v2852
  %3298 = vmatmul.mubr.bf16.gmra.mrb[0].mxu0 %v2851
  %v3299 = vpop.f32.mrb[0].mxu0
  %v3300 = vadd.f32 %v3163, %v3299
  %v3301 = vpop.f32.mrb[0].mxu0
  %v3302 = vpop.f32.mrb[0].mxu0
  %v3303 = vadd.f32 %v3166, %v3302
  %v3304 = vpop.f32.mrb[0].mxu0
  %3305 = vmatprep.mubr.bf16.mxu0 %v2862
  %3306 = vmatmul.mubr.bf16.gmra.mrb[0].mxu0 %v2861
  %v3307 = vpop.f32.mrb[0].mxu0
  %v3308 = vadd.f32 %v3171, %v3307
  %v3309 = vpop.f32.mrb[0].mxu0
  %v3310 = vpop.f32.mrb[0].mxu0
  %v3311 = vadd.f32 %v3174, %v3310
  %v3312 = vpop.f32.mrb[0].mxu0
  %3313 = vmatprep.mubr.bf16.mxu0 %v2872
  %3314 = vmatmul.mubr.bf16.gmra.mrb[0].mxu0 %v2871
  %v3315 = vpop.f32.mrb[0].mxu0
  %v3316 = vadd.f32 %v3179, %v3315
  %v3317 = vpop.f32.mrb[0].mxu0
  %v3318 = vpop.f32.mrb[0].mxu0
  %v3319 = vadd.f32 %v3182, %v3318
  %v3320 = vpop.f32.mrb[0].mxu0
  %3321 = vmatprep.mubr.bf16.mxu0 %v2882
  %3322 = vmatmul.mubr.bf16.gmra.mrb[0].mxu0 %v2881
  %v3323 = vpop.f32.mrb[0].mxu0
  %v3324 = vadd.f32 %v3187, %v3323
  %v3325 = vpop.f32.mrb[0].mxu0
  %v3326 = vpop.f32.mrb[0].mxu0
  %v3327 = vadd.f32 %v3190, %v3326
  %v3328 = vpop.f32.mrb[0].mxu0
  %3329 = vmatprep.mubr.bf16.mxu0 %v2892
  %3330 = vmatmul.mubr.bf16.gmra.mrb[0].mxu0 %v2891
  %v3331 = vpop.f32.mrb[0].mxu0
  %v3332 = vadd.f32 %v3195, %v3331
  %v3333 = vpop.f32.mrb[0].mxu0
  %v3334 = vpop.f32.mrb[0].mxu0
  %v3335 = vadd.f32 %v3198, %v3334
  %v3336 = vpop.f32.mrb[0].mxu0
  %3337 = vmatprep.mubr.bf16.mxu0 %v2902
  %3338 = vmatmul.mubr.bf16.gmra.mrb[0].mxu0 %v2901
  %v3339 = vpop.f32.mrb[0].mxu0
  %v3340 = vadd.f32 %v3203, %v3339
  %v3341 = vpop.f32.mrb[0].mxu0
  %v3342 = vpop.f32.mrb[0].mxu0
  %v3343 = vadd.f32 %v3206, %v3342
  %v3344 = vpop.f32.mrb[0].mxu0
  %3345 = vmatprep.mubr.bf16.mxu0 %v2912
  %3346 = vmatmul.mubr.bf16.gmra.mrb[0].mxu0 %v2911
  %v3347 = vpop.f32.mrb[0].mxu0
  %v3348 = vadd.f32 %v3211, %v3347
  %v3349 = vpop.f32.mrb[0].mxu0
  %v3350 = vpop.f32.mrb[0].mxu0
  %v3351 = vadd.f32 %v3214, %v3350
  %v3352 = vpop.f32.mrb[0].mxu0
  %3353 = vmatprep.mubr.bf16.mxu0 %v2922
  %3354 = vmatmul.mubr.bf16.gmra.mrb[0].mxu0 %v2921
  %v3355 = vpop.f32.mrb[0].mxu0
  %v3356 = vadd.f32 %v3219, %v3355
  %v3357 = vpop.f32.mrb[0].mxu0
  %v3358 = vpop.f32.mrb[0].mxu0
  %v3359 = vadd.f32 %v3222, %v3358
  %v3360 = vpop.f32.mrb[0].mxu0
  %3361 = vmatprep.mubr.bf16.mxu0 %v2932
  %3362 = vmatmul.mubr.bf16.gmra.mrb[0].mxu0 %v2931
  %v3363 = vpop.f32.mrb[0].mxu0
  %v3364 = vadd.f32 %v3227, %v3363
  %v3365 = vpop.f32.mrb[0].mxu0
  %v3366 = vpop.f32.mrb[0].mxu0
  %v3367 = vadd.f32 %v3230, %v3366
  %v3368 = vpop.f32.mrb[0].mxu0
  %3369 = vdwg.mxu0
  %3370 = vmatprep.subr.bf16.mxu0 0
  %3371 = vmatpush1.bf16.msra.mxu0 %v2373
  %3372 = vmatprep.subr.bf16.mxu0 0
  %3373 = vmatpush1.bf16.msra.mxu0 %v2374
  %3374 = vmatprep.subr.bf16.mxu0 0
  %3375 = vmatpush1.bf16.msra.mxu0 %v2375
  %3376 = vmatprep.subr.bf16.mxu0 0
  %3377 = vmatpush1.bf16.msra.mxu0 %v2376
  %3378 = vmatprep.subr.bf16.mxu0 0
  %3379 = vmatpush1.bf16.msra.mxu0 %v2377
  %3380 = vmatprep.subr.bf16.mxu0 0
  %3381 = vmatpush1.bf16.msra.mxu0 %v2378
  %3382 = vmatprep.subr.bf16.mxu0 0
  %3383 = vmatpush1.bf16.msra.mxu0 %v2379
  %3384 = vmatprep.subr.bf16.mxu0 0
  %3385 = vmatpush1.bf16.msra.mxu0 %v2380
  %3386 = vmatprep.subr.bf16.mxu0 0
  %3387 = vmatpush1.bf16.msra.mxu0 %v2381
  %3388 = vmatprep.subr.bf16.mxu0 0
  %3389 = vmatpush1.bf16.msra.mxu0 %v2382
  %3390 = vmatprep.subr.bf16.mxu0 0
  %3391 = vmatpush1.bf16.msra.mxu0 %v2383
  %3392 = vmatprep.subr.bf16.mxu0 0
  %3393 = vmatpush1.bf16.msra.mxu0 %v2384
  %3394 = vmatprep.subr.bf16.mxu0 0
  %3395 = vmatpush1.bf16.msra.mxu0 %v2385
  %3396 = vmatprep.subr.bf16.mxu0 0
  %3397 = vmatpush1.bf16.msra.mxu0 %v2386
  %3398 = vmatprep.subr.bf16.mxu0 0
  %3399 = vmatpush1.bf16.msra.mxu0 %v2387
  %3400 = vmatprep.subr.bf16.mxu0 0
  %3401 = vmatpush1.bf16.msra.mxu0 %v2388
  %3402 = vmatprep.mubr.bf16.mxu0 %v2814
  %3403 = vmatmul.mubr.bf16.gmra.mrb[0].mxu0 %v2813
  %v3404 = vpop.f32.mrb[0].mxu0
  %v3405 = vadd.f32 %v3268, %v3404
  %v3406 = vpop.f32.mrb[0].mxu0
  %v3407 = vpop.f32.mrb[0].mxu0
  %v3408 = vadd.f32 %v3271, %v3407
  %v3409 = vpop.f32.mrb[0].mxu0
  %3410 = vmatprep.mubr.bf16.mxu0 %v2824
  %3411 = vmatmul.mubr.bf16.gmra.mrb[0].mxu0 %v2823
  %v3412 = vpop.f32.mrb[0].mxu0
  %v3413 = vadd.f32 %v3276, %v3412
  %v3414 = vpop.f32.mrb[0].mxu0
  %v3415 = vpop.f32.mrb[0].mxu0
  %v3416 = vadd.f32 %v3279, %v3415
  %v3417 = vpop.f32.mrb[0].mxu0
  %3418 = vmatprep.mubr.bf16.mxu0 %v2834
  %3419 = vmatmul.mubr.bf16.gmra.mrb[0].mxu0 %v2833
  %v3420 = vpop.f32.mrb[0].mxu0
  %v3421 = vadd.f32 %v3284, %v3420
  %v3422 = vpop.f32.mrb[0].mxu0
  %v3423 = vpop.f32.mrb[0].mxu0
  %v3424 = vadd.f32 %v3287, %v3423
  %v3425 = vpop.f32.mrb[0].mxu0
  %3426 = vmatprep.mubr.bf16.mxu0 %v2844
  %3427 = vmatmul.mubr.bf16.gmra.mrb[0].mxu0 %v2843
  %v3428 = vpop.f32.mrb[0].mxu0
  %v3429 = vadd.f32 %v3292, %v3428
  %v3430 = vpop.f32.mrb[0].mxu0
  %v3431 = vpop.f32.mrb[0].mxu0
  %v3432 = vadd.f32 %v3295, %v3431
  %v3433 = vpop.f32.mrb[0].mxu0
  %3434 = vmatprep.mubr.bf16.mxu0 %v2854
  %3435 = vmatmul.mubr.bf16.gmra.mrb[0].mxu0 %v2853
  %v3436 = vpop.f32.mrb[0].mxu0
  %v3437 = vadd.f32 %v3300, %v3436
  %v3438 = vpop.f32.mrb[0].mxu0
  %v3439 = vpop.f32.mrb[0].mxu0
  %v3440 = vadd.f32 %v3303, %v3439
  %v3441 = vpop.f32.mrb[0].mxu0
  %3442 = vmatprep.mubr.bf16.mxu0 %v2864
  %3443 = vmatmul.mubr.bf16.gmra.mrb[0].mxu0 %v2863
  %v3444 = vpop.f32.mrb[0].mxu0
  %v3445 = vadd.f32 %v3308, %v3444
  %v3446 = vpop.f32.mrb[0].mxu0
  %v3447 = vpop.f32.mrb[0].mxu0
  %v3448 = vadd.f32 %v3311, %v3447
  %v3449 = vpop.f32.mrb[0].mxu0
  %3450 = vmatprep.mubr.bf16.mxu0 %v2874
  %3451 = vmatmul.mubr.bf16.gmra.mrb[0].mxu0 %v2873
  %v3452 = vpop.f32.mrb[0].mxu0
  %v3453 = vadd.f32 %v3316, %v3452
  %v3454 = vpop.f32.mrb[0].mxu0
  %v3455 = vpop.f32.mrb[0].mxu0
  %v3456 = vadd.f32 %v3319, %v3455
  %v3457 = vpop.f32.mrb[0].mxu0
  %3458 = vmatprep.mubr.bf16.mxu0 %v2884
  %3459 = vmatmul.mubr.bf16.gmra.mrb[0].mxu0 %v2883
  %v3460 = vpop.f32.mrb[0].mxu0
  %v3461 = vadd.f32 %v3324, %v3460
  %v3462 = vpop.f32.mrb[0].mxu0
  %v3463 = vpop.f32.mrb[0].mxu0
  %v3464 = vadd.f32 %v3327, %v3463
  %v3465 = vpop.f32.mrb[0].mxu0
  %3466 = vmatprep.mubr.bf16.mxu0 %v2894
  %3467 = vmatmul.mubr.bf16.gmra.mrb[0].mxu0 %v2893
  %v3468 = vpop.f32.mrb[0].mxu0
  %v3469 = vadd.f32 %v3332, %v3468
  %v3470 = vpop.f32.mrb[0].mxu0
  %v3471 = vpop.f32.mrb[0].mxu0
  %v3472 = vadd.f32 %v3335, %v3471
  %v3473 = vpop.f32.mrb[0].mxu0
  %3474 = vmatprep.mubr.bf16.mxu0 %v2904
  %3475 = vmatmul.mubr.bf16.gmra.mrb[0].mxu0 %v2903
  %v3476 = vpop.f32.mrb[0].mxu0
  %v3477 = vadd.f32 %v3340, %v3476
  %v3478 = vpop.f32.mrb[0].mxu0
  %v3479 = vpop.f32.mrb[0].mxu0
  %v3480 = vadd.f32 %v3343, %v3479
  %v3481 = vpop.f32.mrb[0].mxu0
  %3482 = vmatprep.mubr.bf16.mxu0 %v2914
  %3483 = vmatmul.mubr.bf16.gmra.mrb[0].mxu0 %v2913
  %v3484 = vpop.f32.mrb[0].mxu0
  %v3485 = vadd.f32 %v3348, %v3484
  %v3486 = vpop.f32.mrb[0].mxu0
  %v3487 = vpop.f32.mrb[0].mxu0
  %v3488 = vadd.f32 %v3351, %v3487
  %v3489 = vpop.f32.mrb[0].mxu0
  %3490 = vmatprep.mubr.bf16.mxu0 %v2924
  %3491 = vmatmul.mubr.bf16.gmra.mrb[0].mxu0 %v2923
  %v3492 = vpop.f32.mrb[0].mxu0
  %v3493 = vadd.f32 %v3356, %v3492
  %v3494 = vpop.f32.mrb[0].mxu0
  %v3495 = vpop.f32.mrb[0].mxu0
  %v3496 = vadd.f32 %v3359, %v3495
  %v3497 = vpop.f32.mrb[0].mxu0
  %3498 = vmatprep.mubr.bf16.mxu0 %v2934
  %3499 = vmatmul.mubr.bf16.gmra.mrb[0].mxu0 %v2933
  %v3500 = vpop.f32.mrb[0].mxu0
  %v3501 = vadd.f32 %v3364, %v3500
  %v3502 = vpop.f32.mrb[0].mxu0
  %v3503 = vpop.f32.mrb[0].mxu0
  %v3504 = vadd.f32 %v3367, %v3503
  %v3505 = vpop.f32.mrb[0].mxu0
  %3506 = vdwg.mxu0
  %3507 = vmatprep.subr.bf16.mxu0 0
  %3508 = vmatpush1.bf16.msra.mxu0 %v2389
  %3509 = vmatprep.subr.bf16.mxu0 0
  %3510 = vmatpush1.bf16.msra.mxu0 %v2390
  %3511 = vmatprep.subr.bf16.mxu0 0
  %3512 = vmatpush1.bf16.msra.mxu0 %v2391
  %3513 = vmatprep.subr.bf16.mxu0 0
  %3514 = vmatpush1.bf16.msra.mxu0 %v2392
  %3515 = vmatprep.subr.bf16.mxu0 0
  %3516 = vmatpush1.bf16.msra.mxu0 %v2393
  %3517 = vmatprep.subr.bf16.mxu0 0
  %3518 = vmatpush1.bf16.msra.mxu0 %v2394
  %3519 = vmatprep.subr.bf16.mxu0 0
  %3520 = vmatpush1.bf16.msra.mxu0 %v2395
  %3521 = vmatprep.subr.bf16.mxu0 0
  %3522 = vmatpush1.bf16.msra.mxu0 %v2396
  %3523 = vmatprep.subr.bf16.mxu0 0
  %3524 = vmatpush1.bf16.msra.mxu0 %v2397
  %3525 = vmatprep.subr.bf16.mxu0 0
  %3526 = vmatpush1.bf16.msra.mxu0 %v2398
  %3527 = vmatprep.subr.bf16.mxu0 0
  %3528 = vmatpush1.bf16.msra.mxu0 %v2399
  %3529 = vmatprep.subr.bf16.mxu0 0
  %3530 = vmatpush1.bf16.msra.mxu0 %v2400
  %3531 = vmatprep.subr.bf16.mxu0 0
  %3532 = vmatpush1.bf16.msra.mxu0 %v2401
  %3533 = vmatprep.subr.bf16.mxu0 0
  %3534 = vmatpush1.bf16.msra.mxu0 %v2402
  %3535 = vmatprep.subr.bf16.mxu0 0
  %3536 = vmatpush1.bf16.msra.mxu0 %v2403
  %3537 = vmatprep.subr.bf16.mxu0 0
  %3538 = vmatpush1.bf16.msra.mxu0 %v2404
  %3539 = vmatprep.mubr.bf16.mxu0 %v2816
  %3540 = vmatmul.mubr.bf16.gmra.mrb[0].mxu0 %v2815
  %v3541 = vpop.f32.mrb[0].mxu0
  %v3542 = vadd.f32 %v3405, %v3541
  %v3543 = vpop.f32.mrb[0].mxu0
  %v3544 = vpop.f32.mrb[0].mxu0
  %v3545 = vadd.f32 %v3408, %v3544
  %v3546 = vpop.f32.mrb[0].mxu0
  %3547 = vmatprep.mubr.bf16.mxu0 %v2826
  %3548 = vmatmul.mubr.bf16.gmra.mrb[0].mxu0 %v2825
  %v3549 = vpop.f32.mrb[0].mxu0
  %v3550 = vadd.f32 %v3413, %v3549
  %v3551 = vpop.f32.mrb[0].mxu0
  %v3552 = vpop.f32.mrb[0].mxu0
  %v3553 = vadd.f32 %v3416, %v3552
  %v3554 = vpop.f32.mrb[0].mxu0
  %3555 = vmatprep.mubr.bf16.mxu0 %v2836
  %3556 = vmatmul.mubr.bf16.gmra.mrb[0].mxu0 %v2835
  %v3557 = vpop.f32.mrb[0].mxu0
  %v3558 = vadd.f32 %v3421, %v3557
  %v3559 = vpop.f32.mrb[0].mxu0
  %v3560 = vpop.f32.mrb[0].mxu0
  %v3561 = vadd.f32 %v3424, %v3560
  %v3562 = vpop.f32.mrb[0].mxu0
  %3563 = vmatprep.mubr.bf16.mxu0 %v2846
  %3564 = vmatmul.mubr.bf16.gmra.mrb[0].mxu0 %v2845
  %v3565 = vpop.f32.mrb[0].mxu0
  %v3566 = vadd.f32 %v3429, %v3565
  %v3567 = vpop.f32.mrb[0].mxu0
  %v3568 = vpop.f32.mrb[0].mxu0
  %v3569 = vadd.f32 %v3432, %v3568
  %v3570 = vpop.f32.mrb[0].mxu0
  %3571 = vmatprep.mubr.bf16.mxu0 %v2856
  %3572 = vmatmul.mubr.bf16.gmra.mrb[0].mxu0 %v2855
  %v3573 = vpop.f32.mrb[0].mxu0
  %v3574 = vadd.f32 %v3437, %v3573
  %v3575 = vpop.f32.mrb[0].mxu0
  %v3576 = vpop.f32.mrb[0].mxu0
  %v3577 = vadd.f32 %v3440, %v3576
  %v3578 = vpop.f32.mrb[0].mxu0
  %3579 = vmatprep.mubr.bf16.mxu0 %v2866
  %3580 = vmatmul.mubr.bf16.gmra.mrb[0].mxu0 %v2865
  %v3581 = vpop.f32.mrb[0].mxu0
  %v3582 = vadd.f32 %v3445, %v3581
  %v3583 = vpop.f32.mrb[0].mxu0
  %v3584 = vpop.f32.mrb[0].mxu0
  %v3585 = vadd.f32 %v3448, %v3584
  %v3586 = vpop.f32.mrb[0].mxu0
  %3587 = vmatprep.mubr.bf16.mxu0 %v2876
  %3588 = vmatmul.mubr.bf16.gmra.mrb[0].mxu0 %v2875
  %v3589 = vpop.f32.mrb[0].mxu0
  %v3590 = vadd.f32 %v3453, %v3589
  %v3591 = vpop.f32.mrb[0].mxu0
  %v3592 = vpop.f32.mrb[0].mxu0
  %v3593 = vadd.f32 %v3456, %v3592
  %v3594 = vpop.f32.mrb[0].mxu0
  %3595 = vmatprep.mubr.bf16.mxu0 %v2886
  %3596 = vmatmul.mubr.bf16.gmra.mrb[0].mxu0 %v2885
  %v3597 = vpop.f32.mrb[0].mxu0
  %v3598 = vadd.f32 %v3461, %v3597
  %v3599 = vpop.f32.mrb[0].mxu0
  %v3600 = vpop.f32.mrb[0].mxu0
  %v3601 = vadd.f32 %v3464, %v3600
  %v3602 = vpop.f32.mrb[0].mxu0
  %3603 = vmatprep.mubr.bf16.mxu0 %v2896
  %3604 = vmatmul.mubr.bf16.gmra.mrb[0].mxu0 %v2895
  %v3605 = vpop.f32.mrb[0].mxu0
  %v3606 = vadd.f32 %v3469, %v3605
  %v3607 = vpop.f32.mrb[0].mxu0
  %v3608 = vpop.f32.mrb[0].mxu0
  %v3609 = vadd.f32 %v3472, %v3608
  %v3610 = vpop.f32.mrb[0].mxu0
  %3611 = vmatprep.mubr.bf16.mxu0 %v2906
  %3612 = vmatmul.mubr.bf16.gmra.mrb[0].mxu0 %v2905
  %v3613 = vpop.f32.mrb[0].mxu0
  %v3614 = vadd.f32 %v3477, %v3613
  %v3615 = vpop.f32.mrb[0].mxu0
  %v3616 = vpop.f32.mrb[0].mxu0
  %v3617 = vadd.f32 %v3480, %v3616
  %v3618 = vpop.f32.mrb[0].mxu0
  %3619 = vmatprep.mubr.bf16.mxu0 %v2916
  %3620 = vmatmul.mubr.bf16.gmra.mrb[0].mxu0 %v2915
  %v3621 = vpop.f32.mrb[0].mxu0
  %v3622 = vadd.f32 %v3485, %v3621
  %v3623 = vpop.f32.mrb[0].mxu0
  %v3624 = vpop.f32.mrb[0].mxu0
  %v3625 = vadd.f32 %v3488, %v3624
  %v3626 = vpop.f32.mrb[0].mxu0
  %3627 = vmatprep.mubr.bf16.mxu0 %v2926
  %3628 = vmatmul.mubr.bf16.gmra.mrb[0].mxu0 %v2925
  %v3629 = vpop.f32.mrb[0].mxu0
  %v3630 = vadd.f32 %v3493, %v3629
  %v3631 = vpop.f32.mrb[0].mxu0
  %v3632 = vpop.f32.mrb[0].mxu0
  %v3633 = vadd.f32 %v3496, %v3632
  %v3634 = vpop.f32.mrb[0].mxu0
  %3635 = vmatprep.mubr.bf16.mxu0 %v2936
  %3636 = vmatmul.mubr.bf16.gmra.mrb[0].mxu0 %v2935
  %v3637 = vpop.f32.mrb[0].mxu0
  %v3638 = vadd.f32 %v3501, %v3637
  %v3639 = vpop.f32.mrb[0].mxu0
  %v3640 = vpop.f32.mrb[0].mxu0
  %v3641 = vadd.f32 %v3504, %v3640
  %v3642 = vpop.f32.mrb[0].mxu0
  %3643 = vdwg.mxu0
  %3644 = vmatprep.subr.bf16.mxu0 0
  %3645 = vmatpush1.bf16.msra.mxu0 %v2405
  %3646 = vmatprep.subr.bf16.mxu0 0
  %3647 = vmatpush1.bf16.msra.mxu0 %v2406
  %3648 = vmatprep.subr.bf16.mxu0 0
  %3649 = vmatpush1.bf16.msra.mxu0 %v2407
  %3650 = vmatprep.subr.bf16.mxu0 0
  %3651 = vmatpush1.bf16.msra.mxu0 %v2408
  %3652 = vmatprep.subr.bf16.mxu0 0
  %3653 = vmatpush1.bf16.msra.mxu0 %v2409
  %3654 = vmatprep.subr.bf16.mxu0 0
  %3655 = vmatpush1.bf16.msra.mxu0 %v2410
  %3656 = vmatprep.subr.bf16.mxu0 0
  %3657 = vmatpush1.bf16.msra.mxu0 %v2411
  %3658 = vmatprep.subr.bf16.mxu0 0
  %3659 = vmatpush1.bf16.msra.mxu0 %v2412
  %3660 = vmatprep.subr.bf16.mxu0 0
  %3661 = vmatpush1.bf16.msra.mxu0 %v2413
  %3662 = vmatprep.subr.bf16.mxu0 0
  %3663 = vmatpush1.bf16.msra.mxu0 %v2414
  %3664 = vmatprep.subr.bf16.mxu0 0
  %3665 = vmatpush1.bf16.msra.mxu0 %v2415
  %3666 = vmatprep.subr.bf16.mxu0 0
  %3667 = vmatpush1.bf16.msra.mxu0 %v2416
  %3668 = vmatprep.subr.bf16.mxu0 0
  %3669 = vmatpush1.bf16.msra.mxu0 %v2417
  %3670 = vmatprep.subr.bf16.mxu0 0
  %3671 = vmatpush1.bf16.msra.mxu0 %v2418
  %3672 = vmatprep.subr.bf16.mxu0 0
  %3673 = vmatpush1.bf16.msra.mxu0 0
  %3674 = vmatprep.subr.bf16.mxu0 0
  %3675 = vmatpush1.bf16.msra.mxu0 0
  %3676 = vmatprep.mubr.bf16.mxu0 %v3058
  %3677 = vmatmul.mubr.bf16.gmra.mrb[0].mxu0 %v2817
  %v3678 = vpop.f32.mrb[0].mxu0
  %v3679 = vadd.f32 %v3542, %v3678
  %v3680 = vpop.f32.mrb[0].mxu0
  %v3681 = vpop.f32.mrb[0].mxu0
  %v3682 = vadd.f32 %v3545, %v3681
  %v3683 = vpop.f32.mrb[0].mxu0
  %3684 = vmatprep.mubr.bf16.mxu0 %v3061
  %3685 = vmatmul.mubr.bf16.gmra.mrb[0].mxu0 %v2827
  %v3686 = vpop.f32.mrb[0].mxu0
  %v3687 = vadd.f32 %v3550, %v3686
  %v3688 = vpop.f32.mrb[0].mxu0
  %v3689 = vpop.f32.mrb[0].mxu0
  %v3690 = vadd.f32 %v3553, %v3689
  %v3691 = vpop.f32.mrb[0].mxu0
  %3692 = vmatprep.mubr.bf16.mxu0 %v3064
  %3693 = vmatmul.mubr.bf16.gmra.mrb[0].mxu0 %v2837
  %v3694 = vpop.f32.mrb[0].mxu0
  %v3695 = vadd.f32 %v3558, %v3694
  %v3696 = vpop.f32.mrb[0].mxu0
  %v3697 = vpop.f32.mrb[0].mxu0
  %v3698 = vadd.f32 %v3561, %v3697
  %v3699 = vpop.f32.mrb[0].mxu0
  %3700 = vmatprep.mubr.bf16.mxu0 %v3067
  %3701 = vmatmul.mubr.bf16.gmra.mrb[0].mxu0 %v2847
  %v3702 = vpop.f32.mrb[0].mxu0
  %v3703 = vadd.f32 %v3566, %v3702
  %v3704 = vpop.f32.mrb[0].mxu0
  %v3705 = vpop.f32.mrb[0].mxu0
  %v3706 = vadd.f32 %v3569, %v3705
  %v3707 = vpop.f32.mrb[0].mxu0
  %3708 = vmatprep.mubr.bf16.mxu0 %v3070
  %3709 = vmatmul.mubr.bf16.gmra.mrb[0].mxu0 %v2857
  %v3710 = vpop.f32.mrb[0].mxu0
  %v3711 = vadd.f32 %v3574, %v3710
  %v3712 = vpop.f32.mrb[0].mxu0
  %v3713 = vpop.f32.mrb[0].mxu0
  %v3714 = vadd.f32 %v3577, %v3713
  %v3715 = vpop.f32.mrb[0].mxu0
  %3716 = vmatprep.mubr.bf16.mxu0 %v3073
  %3717 = vmatmul.mubr.bf16.gmra.mrb[0].mxu0 %v2867
  %v3718 = vpop.f32.mrb[0].mxu0
  %v3719 = vadd.f32 %v3582, %v3718
  %v3720 = vpop.f32.mrb[0].mxu0
  %v3721 = vpop.f32.mrb[0].mxu0
  %v3722 = vadd.f32 %v3585, %v3721
  %v3723 = vpop.f32.mrb[0].mxu0
  %3724 = vmatprep.mubr.bf16.mxu0 %v3076
  %3725 = vmatmul.mubr.bf16.gmra.mrb[0].mxu0 %v2877
  %v3726 = vpop.f32.mrb[0].mxu0
  %v3727 = vadd.f32 %v3590, %v3726
  %v3728 = vpop.f32.mrb[0].mxu0
  %v3729 = vpop.f32.mrb[0].mxu0
  %v3730 = vadd.f32 %v3593, %v3729
  %v3731 = vpop.f32.mrb[0].mxu0
  %3732 = vmatprep.mubr.bf16.mxu0 %v3079
  %3733 = vmatmul.mubr.bf16.gmra.mrb[0].mxu0 %v2887
  %v3734 = vpop.f32.mrb[0].mxu0
  %v3735 = vadd.f32 %v3598, %v3734
  %v3736 = vpop.f32.mrb[0].mxu0
  %v3737 = vpop.f32.mrb[0].mxu0
  %v3738 = vadd.f32 %v3601, %v3737
  %v3739 = vpop.f32.mrb[0].mxu0
  %3740 = vmatprep.mubr.bf16.mxu0 %v3082
  %3741 = vmatmul.mubr.bf16.gmra.mrb[0].mxu0 %v2897
  %v3742 = vpop.f32.mrb[0].mxu0
  %v3743 = vadd.f32 %v3606, %v3742
  %v3744 = vpop.f32.mrb[0].mxu0
  %v3745 = vpop.f32.mrb[0].mxu0
  %v3746 = vadd.f32 %v3609, %v3745
  %v3747 = vpop.f32.mrb[0].mxu0
  %3748 = vmatprep.mubr.bf16.mxu0 %v3085
  %3749 = vmatmul.mubr.bf16.gmra.mrb[0].mxu0 %v2907
  %v3750 = vpop.f32.mrb[0].mxu0
  %v3751 = vadd.f32 %v3614, %v3750
  %v3752 = vpop.f32.mrb[0].mxu0
  %v3753 = vpop.f32.mrb[0].mxu0
  %v3754 = vadd.f32 %v3617, %v3753
  %v3755 = vpop.f32.mrb[0].mxu0
  %3756 = vmatprep.mubr.bf16.mxu0 %v3088
  %3757 = vmatmul.mubr.bf16.gmra.mrb[0].mxu0 %v2917
  %v3758 = vpop.f32.mrb[0].mxu0
  %v3759 = vadd.f32 %v3622, %v3758
  %v3760 = vpop.f32.mrb[0].mxu0
  %v3761 = vpop.f32.mrb[0].mxu0
  %v3762 = vadd.f32 %v3625, %v3761
  %v3763 = vpop.f32.mrb[0].mxu0
  %3764 = vmatprep.mubr.bf16.mxu0 %v3091
  %3765 = vmatmul.mubr.bf16.gmra.mrb[0].mxu0 %v2927
  %v3766 = vpop.f32.mrb[0].mxu0
  %v3767 = vadd.f32 %v3630, %v3766
  %v3768 = vpop.f32.mrb[0].mxu0
  %v3769 = vpop.f32.mrb[0].mxu0
  %v3770 = vadd.f32 %v3633, %v3769
  %v3771 = vpop.f32.mrb[0].mxu0
  %3772 = vmatprep.mubr.bf16.mxu0 %v3094
  %3773 = vmatmul.mubr.bf16.gmra.mrb[0].mxu0 %v2937
  %v3774 = vpop.f32.mrb[0].mxu0
  %v3775 = vadd.f32 %v3638, %v3774
  %v3776 = vpop.f32.mrb[0].mxu0
  %v3777 = vpop.f32.mrb[0].mxu0
  %v3778 = vadd.f32 %v3641, %v3777
  %v3779 = vpop.f32.mrb[0].mxu0
  %3780 = vdwg.mxu0
  %vm3781 = vcmask 400384
  %v3782 = vsel %vm3781, %v3679, 0.0
  %3783 = vadd.xlane.f32.xlu0 %v3782
  %v3784 = vpop.xlane.xlu0 %3783
  %v3785 = vsel %vm3781, %v3682, 0.0
  %3786 = vadd.xlane.f32.xlu0 %v3785
  %v3787 = vpop.xlane.xlu0 %3786
  %v3788 = vsel %vm3781, %v3687, 0.0
  %3789 = vadd.xlane.f32.xlu0 %v3788
  %v3790 = vpop.xlane.xlu0 %3789
  %v3791 = vsel %vm3781, %v3690, 0.0
  %3792 = vadd.xlane.f32.xlu0 %v3791
  %v3793 = vpop.xlane.xlu0 %3792
  %v3794 = vsel %vm3781, %v3695, 0.0
  %3795 = vadd.xlane.f32.xlu0 %v3794
  %v3796 = vpop.xlane.xlu0 %3795
  %v3797 = vsel %vm3781, %v3698, 0.0
  %3798 = vadd.xlane.f32.xlu0 %v3797
  %v3799 = vpop.xlane.xlu0 %3798
  %v3800 = vsel %vm3781, %v3703, 0.0
  %3801 = vadd.xlane.f32.xlu0 %v3800
  %v3802 = vpop.xlane.xlu0 %3801
  %v3803 = vsel %vm3781, %v3706, 0.0
  %3804 = vadd.xlane.f32.xlu0 %v3803
  %v3805 = vpop.xlane.xlu0 %3804
  %v3806 = vsel %vm3781, %v3711, 0.0
  %3807 = vadd.xlane.f32.xlu0 %v3806
  %v3808 = vpop.xlane.xlu0 %3807
  %v3809 = vsel %vm3781, %v3714, 0.0
  %3810 = vadd.xlane.f32.xlu0 %v3809
  %v3811 = vpop.xlane.xlu0 %3810
  %v3812 = vsel %vm3781, %v3719, 0.0
  %3813 = vadd.xlane.f32.xlu0 %v3812
  %v3814 = vpop.xlane.xlu0 %3813
  %v3815 = vsel %vm3781, %v3722, 0.0
  %3816 = vadd.xlane.f32.xlu0 %v3815
  %v3817 = vpop.xlane.xlu0 %3816
  %v3818 = vsel %vm3781, %v3727, 0.0
  %3819 = vadd.xlane.f32.xlu0 %v3818
  %v3820 = vpop.xlane.xlu0 %3819
  %v3821 = vsel %vm3781, %v3730, 0.0
  %3822 = vadd.xlane.f32.xlu0 %v3821
  %v3823 = vpop.xlane.xlu0 %3822
  %v3824 = vsel %vm3781, %v3735, 0.0
  %3825 = vadd.xlane.f32.xlu0 %v3824
  %v3826 = vpop.xlane.xlu0 %3825
  %v3827 = vsel %vm3781, %v3738, 0.0
  %3828 = vadd.xlane.f32.xlu0 %v3827
  %v3829 = vpop.xlane.xlu0 %3828
  %v3830 = vsel %vm3781, %v3743, 0.0
  %3831 = vadd.xlane.f32.xlu0 %v3830
  %v3832 = vpop.xlane.xlu0 %3831
  %v3833 = vsel %vm3781, %v3746, 0.0
  %3834 = vadd.xlane.f32.xlu0 %v3833
  %v3835 = vpop.xlane.xlu0 %3834
  %v3836 = vsel %vm3781, %v3751, 0.0
  %3837 = vadd.xlane.f32.xlu0 %v3836
  %v3838 = vpop.xlane.xlu0 %3837
  %v3839 = vsel %vm3781, %v3754, 0.0
  %3840 = vadd.xlane.f32.xlu0 %v3839
  %v3841 = vpop.xlane.xlu0 %3840
  %v3842 = vsel %vm3781, %v3759, 0.0
  %3843 = vadd.xlane.f32.xlu0 %v3842
  %v3844 = vpop.xlane.xlu0 %3843
  %v3845 = vsel %vm3781, %v3762, 0.0
  %3846 = vadd.xlane.f32.xlu0 %v3845
  %v3847 = vpop.xlane.xlu0 %3846
  %v3848 = vsel %vm3781, %v3767, 0.0
  %3849 = vadd.xlane.f32.xlu0 %v3848
  %v3850 = vpop.xlane.xlu0 %3849
  %v3851 = vsel %vm3781, %v3770, 0.0
  %3852 = vadd.xlane.f32.xlu0 %v3851
  %v3853 = vpop.xlane.xlu0 %3852
  %v3854 = vsel %vm3781, %v3775, 0.0
  %3855 = vadd.xlane.f32.xlu0 %v3854
  %v3856 = vpop.xlane.xlu0 %3855
  %v3857 = vsel %vm3781, %v3778, 0.0
  %3858 = vadd.xlane.f32.xlu0 %v3857
  %v3859 = vpop.xlane.xlu0 %3858
  %v3860 = vrcp.pop 49.0
  %v3861 = vmul.f32 %v3784, %v3860
  %v3862 = vmul.f32 %v3787, %v3860
  %v3863 = vmul.f32 %v3790, %v3860
  %v3864 = vmul.f32 %v3793, %v3860
  %v3865 = vmul.f32 %v3796, %v3860
  %v3866 = vmul.f32 %v3799, %v3860
  %v3867 = vmul.f32 %v3802, %v3860
  %v3868 = vmul.f32 %v3805, %v3860
  %v3869 = vmul.f32 %v3808, %v3860
  %v3870 = vmul.f32 %v3811, %v3860
  %v3871 = vmul.f32 %v3814, %v3860
  %v3872 = vmul.f32 %v3817, %v3860
  %v3873 = vmul.f32 %v3820, %v3860
  %v3874 = vmul.f32 %v3823, %v3860
  %v3875 = vmul.f32 %v3826, %v3860
  %v3876 = vmul.f32 %v3829, %v3860
  %v3877 = vmul.f32 %v3832, %v3860
  %v3878 = vmul.f32 %v3835, %v3860
  %v3879 = vmul.f32 %v3838, %v3860
  %v3880 = vmul.f32 %v3841, %v3860
  %v3881 = vmul.f32 %v3844, %v3860
  %v3882 = vmul.f32 %v3847, %v3860
  %v3883 = vmul.f32 %v3850, %v3860
  %v3884 = vmul.f32 %v3853, %v3860
  %v3885 = vmul.f32 %v3856, %v3860
  %v3886 = vmul.f32 %v3859, %v3860
  %v3887 = vmul.f32 %v3679, %v3679
  %v3888 = vmul.f32 %v3682, %v3682
  %v3889 = vmul.f32 %v3687, %v3687
  %v3890 = vmul.f32 %v3690, %v3690
  %v3891 = vmul.f32 %v3695, %v3695
  %v3892 = vmul.f32 %v3698, %v3698
  %v3893 = vmul.f32 %v3703, %v3703
  %v3894 = vmul.f32 %v3706, %v3706
  %v3895 = vmul.f32 %v3711, %v3711
  %v3896 = vmul.f32 %v3714, %v3714
  %v3897 = vmul.f32 %v3719, %v3719
  %v3898 = vmul.f32 %v3722, %v3722
  %v3899 = vmul.f32 %v3727, %v3727
  %v3900 = vmul.f32 %v3730, %v3730
  %v3901 = vmul.f32 %v3735, %v3735
  %v3902 = vmul.f32 %v3738, %v3738
  %v3903 = vmul.f32 %v3743, %v3743
  %v3904 = vmul.f32 %v3746, %v3746
  %v3905 = vmul.f32 %v3751, %v3751
  %v3906 = vmul.f32 %v3754, %v3754
  %v3907 = vmul.f32 %v3759, %v3759
  %v3908 = vmul.f32 %v3762, %v3762
  %v3909 = vmul.f32 %v3767, %v3767
  %v3910 = vmul.f32 %v3770, %v3770
  %v3911 = vmul.f32 %v3775, %v3775
  %v3912 = vmul.f32 %v3778, %v3778
  %v3913 = vsel %vm3781, %v3887, 0.0
  %3914 = vadd.xlane.f32.xlu0 %v3913
  %v3915 = vpop.xlane.xlu0 %3914
  %v3916 = vsel %vm3781, %v3888, 0.0
  %3917 = vadd.xlane.f32.xlu0 %v3916
  %v3918 = vpop.xlane.xlu0 %3917
  %v3919 = vsel %vm3781, %v3889, 0.0
  %3920 = vadd.xlane.f32.xlu0 %v3919
  %v3921 = vpop.xlane.xlu0 %3920
  %v3922 = vsel %vm3781, %v3890, 0.0
  %3923 = vadd.xlane.f32.xlu0 %v3922
  %v3924 = vpop.xlane.xlu0 %3923
  %v3925 = vsel %vm3781, %v3891, 0.0
  %3926 = vadd.xlane.f32.xlu0 %v3925
  %v3927 = vpop.xlane.xlu0 %3926
  %v3928 = vsel %vm3781, %v3892, 0.0
  %3929 = vadd.xlane.f32.xlu0 %v3928
  %v3930 = vpop.xlane.xlu0 %3929
  %v3931 = vsel %vm3781, %v3893, 0.0
  %3932 = vadd.xlane.f32.xlu0 %v3931
  %v3933 = vpop.xlane.xlu0 %3932
  %v3934 = vsel %vm3781, %v3894, 0.0
  %3935 = vadd.xlane.f32.xlu0 %v3934
  %v3936 = vpop.xlane.xlu0 %3935
  %v3937 = vsel %vm3781, %v3895, 0.0
  %3938 = vadd.xlane.f32.xlu0 %v3937
  %v3939 = vpop.xlane.xlu0 %3938
  %v3940 = vsel %vm3781, %v3896, 0.0
  %3941 = vadd.xlane.f32.xlu0 %v3940
  %v3942 = vpop.xlane.xlu0 %3941
  %v3943 = vsel %vm3781, %v3897, 0.0
  %3944 = vadd.xlane.f32.xlu0 %v3943
  %v3945 = vpop.xlane.xlu0 %3944
  %v3946 = vsel %vm3781, %v3898, 0.0
  %3947 = vadd.xlane.f32.xlu0 %v3946
  %v3948 = vpop.xlane.xlu0 %3947
  %v3949 = vsel %vm3781, %v3899, 0.0
  %3950 = vadd.xlane.f32.xlu0 %v3949
  %v3951 = vpop.xlane.xlu0 %3950
  %v3952 = vsel %vm3781, %v3900, 0.0
  %3953 = vadd.xlane.f32.xlu0 %v3952
  %v3954 = vpop.xlane.xlu0 %3953
  %v3955 = vsel %vm3781, %v3901, 0.0
  %3956 = vadd.xlane.f32.xlu0 %v3955
  %v3957 = vpop.xlane.xlu0 %3956
  %v3958 = vsel %vm3781, %v3902, 0.0
  %3959 = vadd.xlane.f32.xlu0 %v3958
  %v3960 = vpop.xlane.xlu0 %3959
  %v3961 = vsel %vm3781, %v3903, 0.0
  %3962 = vadd.xlane.f32.xlu0 %v3961
  %v3963 = vpop.xlane.xlu0 %3962
  %v3964 = vsel %vm3781, %v3904, 0.0
  %3965 = vadd.xlane.f32.xlu0 %v3964
  %v3966 = vpop.xlane.xlu0 %3965
  %v3967 = vsel %vm3781, %v3905, 0.0
  %3968 = vadd.xlane.f32.xlu0 %v3967
  %v3969 = vpop.xlane.xlu0 %3968
  %v3970 = vsel %vm3781, %v3906, 0.0
  %3971 = vadd.xlane.f32.xlu0 %v3970
  %v3972 = vpop.xlane.xlu0 %3971
  %v3973 = vsel %vm3781, %v3907, 0.0
  %3974 = vadd.xlane.f32.xlu0 %v3973
  %v3975 = vpop.xlane.xlu0 %3974
  %v3976 = vsel %vm3781, %v3908, 0.0
  %3977 = vadd.xlane.f32.xlu0 %v3976
  %v3978 = vpop.xlane.xlu0 %3977
  %v3979 = vsel %vm3781, %v3909, 0.0
  %3980 = vadd.xlane.f32.xlu0 %v3979
  %v3981 = vpop.xlane.xlu0 %3980
  %v3982 = vsel %vm3781, %v3910, 0.0
  %3983 = vadd.xlane.f32.xlu0 %v3982
  %v3984 = vpop.xlane.xlu0 %3983
  %v3985 = vsel %vm3781, %v3911, 0.0
  %3986 = vadd.xlane.f32.xlu0 %v3985
  %v3987 = vpop.xlane.xlu0 %3986
  %v3988 = vsel %vm3781, %v3912, 0.0
  %3989 = vadd.xlane.f32.xlu0 %v3988
  %v3990 = vpop.xlane.xlu0 %3989
  %v3991 = vmul.f32 %v3915, %v3860
  %v3992 = vmul.f32 %v3918, %v3860
  %v3993 = vmul.f32 %v3921, %v3860
  %v3994 = vmul.f32 %v3924, %v3860
  %v3995 = vmul.f32 %v3927, %v3860
  %v3996 = vmul.f32 %v3930, %v3860
  %v3997 = vmul.f32 %v3933, %v3860
  %v3998 = vmul.f32 %v3936, %v3860
  %v3999 = vmul.f32 %v3939, %v3860
  %v4000 = vmul.f32 %v3942, %v3860
  %v4001 = vmul.f32 %v3945, %v3860
  %v4002 = vmul.f32 %v3948, %v3860
  %v4003 = vmul.f32 %v3951, %v3860
  %v4004 = vmul.f32 %v3954, %v3860
  %v4005 = vmul.f32 %v3957, %v3860
  %v4006 = vmul.f32 %v3960, %v3860
  %v4007 = vmul.f32 %v3963, %v3860
  %v4008 = vmul.f32 %v3966, %v3860
  %v4009 = vmul.f32 %v3969, %v3860
  %v4010 = vmul.f32 %v3972, %v3860
  %v4011 = vmul.f32 %v3975, %v3860
  %v4012 = vmul.f32 %v3978, %v3860
  %v4013 = vmul.f32 %v3981, %v3860
  %v4014 = vmul.f32 %v3984, %v3860
  %v4015 = vmul.f32 %v3987, %v3860
  %v4016 = vmul.f32 %v3990, %v3860
  %v4017 = vmul.f32 %v3861, %v3861
  %v4018 = vmul.f32 %v3862, %v3862
  %v4019 = vmul.f32 %v3863, %v3863
  %v4020 = vmul.f32 %v3864, %v3864
  %v4021 = vmul.f32 %v3865, %v3865
  %v4022 = vmul.f32 %v3866, %v3866
  %v4023 = vmul.f32 %v3867, %v3867
  %v4024 = vmul.f32 %v3868, %v3868
  %v4025 = vmul.f32 %v3869, %v3869
  %v4026 = vmul.f32 %v3870, %v3870
  %v4027 = vmul.f32 %v3871, %v3871
  %v4028 = vmul.f32 %v3872, %v3872
  %v4029 = vmul.f32 %v3873, %v3873
  %v4030 = vmul.f32 %v3874, %v3874
  %v4031 = vmul.f32 %v3875, %v3875
  %v4032 = vmul.f32 %v3876, %v3876
  %v4033 = vmul.f32 %v3877, %v3877
  %v4034 = vmul.f32 %v3878, %v3878
  %v4035 = vmul.f32 %v3879, %v3879
  %v4036 = vmul.f32 %v3880, %v3880
  %v4037 = vmul.f32 %v3881, %v3881
  %v4038 = vmul.f32 %v3882, %v3882
  %v4039 = vmul.f32 %v3883, %v3883
  %v4040 = vmul.f32 %v3884, %v3884
  %v4041 = vmul.f32 %v3885, %v3885
  %v4042 = vmul.f32 %v3886, %v3886
  %v4043 = vsub.f32 %v3991, %v4017
  %v4044 = vsub.f32 %v3992, %v4018
  %v4045 = vsub.f32 %v3993, %v4019
  %v4046 = vsub.f32 %v3994, %v4020
  %v4047 = vsub.f32 %v3995, %v4021
  %v4048 = vsub.f32 %v3996, %v4022
  %v4049 = vsub.f32 %v3997, %v4023
  %v4050 = vsub.f32 %v3998, %v4024
  %v4051 = vsub.f32 %v3999, %v4025
  %v4052 = vsub.f32 %v4000, %v4026
  %v4053 = vsub.f32 %v4001, %v4027
  %v4054 = vsub.f32 %v4002, %v4028
  %v4055 = vsub.f32 %v4003, %v4029
  %v4056 = vsub.f32 %v4004, %v4030
  %v4057 = vsub.f32 %v4005, %v4031
  %v4058 = vsub.f32 %v4006, %v4032
  %v4059 = vsub.f32 %v4007, %v4033
  %v4060 = vsub.f32 %v4008, %v4034
  %v4061 = vsub.f32 %v4009, %v4035
  %v4062 = vsub.f32 %v4010, %v4036
  %v4063 = vsub.f32 %v4011, %v4037
  %v4064 = vsub.f32 %v4012, %v4038
  %v4065 = vsub.f32 %v4013, %v4039
  %v4066 = vsub.f32 %v4014, %v4040
  %v4067 = vsub.f32 %v4015, %v4041
  %v4068 = vsub.f32 %v4016, %v4042
  %v4069 = vsub.f32 %v3679, %v3861
  %v4070 = vsub.f32 %v3682, %v3862
  %v4071 = vsub.f32 %v3687, %v3863
  %v4072 = vsub.f32 %v3690, %v3864
  %v4073 = vsub.f32 %v3695, %v3865
  %v4074 = vsub.f32 %v3698, %v3866
  %v4075 = vsub.f32 %v3703, %v3867
  %v4076 = vsub.f32 %v3706, %v3868
  %v4077 = vsub.f32 %v3711, %v3869
  %v4078 = vsub.f32 %v3714, %v3870
  %v4079 = vsub.f32 %v3719, %v3871
  %v4080 = vsub.f32 %v3722, %v3872
  %v4081 = vsub.f32 %v3727, %v3873
  %v4082 = vsub.f32 %v3730, %v3874
  %v4083 = vsub.f32 %v3735, %v3875
  %v4084 = vsub.f32 %v3738, %v3876
  %v4085 = vsub.f32 %v3743, %v3877
  %v4086 = vsub.f32 %v3746, %v3878
  %v4087 = vsub.f32 %v3751, %v3879
  %v4088 = vsub.f32 %v3754, %v3880
  %v4089 = vsub.f32 %v3759, %v3881
  %v4090 = vsub.f32 %v3762, %v3882
  %v4091 = vsub.f32 %v3767, %v3883
  %v4092 = vsub.f32 %v3770, %v3884
  %v4093 = vsub.f32 %v3775, %v3885
  %v4094 = vsub.f32 %v3778, %v3886
  %v4095 = vadd.f32 %v4043, 1e-05
  %v4096 = vadd.f32 %v4044, 1e-05
  %v4097 = vadd.f32 %v4045, 1e-05
  %v4098 = vadd.f32 %v4046, 1e-05
  %v4099 = vadd.f32 %v4047, 1e-05
  %v4100 = vadd.f32 %v4048, 1e-05
  %v4101 = vadd.f32 %v4049, 1e-05
  %v4102 = vadd.f32 %v4050, 1e-05
  %v4103 = vadd.f32 %v4051, 1e-05
  %v4104 = vadd.f32 %v4052, 1e-05
  %v4105 = vadd.f32 %v4053, 1e-05
  %v4106 = vadd.f32 %v4054, 1e-05
  %v4107 = vadd.f32 %v4055, 1e-05
  %v4108 = vadd.f32 %v4056, 1e-05
  %v4109 = vadd.f32 %v4057, 1e-05
  %v4110 = vadd.f32 %v4058, 1e-05
  %v4111 = vadd.f32 %v4059, 1e-05
  %v4112 = vadd.f32 %v4060, 1e-05
  %v4113 = vadd.f32 %v4061, 1e-05
  %v4114 = vadd.f32 %v4062, 1e-05
  %v4115 = vadd.f32 %v4063, 1e-05
  %v4116 = vadd.f32 %v4064, 1e-05
  %v4117 = vadd.f32 %v4065, 1e-05
  %v4118 = vadd.f32 %v4066, 1e-05
  %v4119 = vadd.f32 %v4067, 1e-05
  %v4120 = vadd.f32 %v4068, 1e-05
  %v4121 = vrsqrt.pop %v4095
  %v4122 = vrsqrt.pop %v4096
  %v4123 = vrsqrt.pop %v4097
  %v4124 = vrsqrt.pop %v4098
  %v4125 = vrsqrt.pop %v4099
  %v4126 = vrsqrt.pop %v4100
  %v4127 = vrsqrt.pop %v4101
  %v4128 = vrsqrt.pop %v4102
  %v4129 = vrsqrt.pop %v4103
  %v4130 = vrsqrt.pop %v4104
  %v4131 = vrsqrt.pop %v4105
  %v4132 = vrsqrt.pop %v4106
  %v4133 = vrsqrt.pop %v4107
  %v4134 = vrsqrt.pop %v4108
  %v4135 = vrsqrt.pop %v4109
  %v4136 = vrsqrt.pop %v4110
  %v4137 = vrsqrt.pop %v4111
  %v4138 = vrsqrt.pop %v4112
  %v4139 = vrsqrt.pop %v4113
  %v4140 = vrsqrt.pop %v4114
  %v4141 = vrsqrt.pop %v4115
  %v4142 = vrsqrt.pop %v4116
  %v4143 = vrsqrt.pop %v4117
  %v4144 = vrsqrt.pop %v4118
  %v4145 = vrsqrt.pop %v4119
  %v4146 = vrsqrt.pop %v4120
  %v4147 = vmul.f32 %v4069, %v4121
  %v4148 = vmul.f32 %v4070, %v4122
  %v4149 = vmul.f32 %v4071, %v4123
  %v4150 = vmul.f32 %v4072, %v4124
  %v4151 = vmul.f32 %v4073, %v4125
  %v4152 = vmul.f32 %v4074, %v4126
  %v4153 = vmul.f32 %v4075, %v4127
  %v4154 = vmul.f32 %v4076, %v4128
  %v4155 = vmul.f32 %v4077, %v4129
  %v4156 = vmul.f32 %v4078, %v4130
  %v4157 = vmul.f32 %v4079, %v4131
  %v4158 = vmul.f32 %v4080, %v4132
  %v4159 = vmul.f32 %v4081, %v4133
  %v4160 = vmul.f32 %v4082, %v4134
  %v4161 = vmul.f32 %v4083, %v4135
  %v4162 = vmul.f32 %v4084, %v4136
  %v4163 = vmul.f32 %v4085, %v4137
  %v4164 = vmul.f32 %v4086, %v4138
  %v4165 = vmul.f32 %v4087, %v4139
  %v4166 = vmul.f32 %v4088, %v4140
  %v4167 = vmul.f32 %v4089, %v4141
  %v4168 = vmul.f32 %v4090, %v4142
  %v4169 = vmul.f32 %v4091, %v4143
  %v4170 = vmul.f32 %v4092, %v4144
  %v4171 = vmul.f32 %v4093, %v4145
  %v4172 = vmul.f32 %v4094, %v4146
  %v4173 = vld [vmem:[%s4] sm:$0xff]
  %v4174 = vld [vmem:[%s4 + $0x8] sm:$0xff]
  %v4175 = vld [vmem:[%s4 + $0x10] sm:$0xff]
  %v4176 = vld [vmem:[%s4 + $0x18] sm:$0xff]
  %v4177 = vld [vmem:[%s4 + $0x20] sm:$0xff]
  %v4178 = vld [vmem:[%s4 + $0x28] sm:$0xff]
  %v4179 = vld [vmem:[%s4 + $0x30] sm:$0xff]
  %v4180 = vld [vmem:[%s4 + $0x38] sm:$0xff]
  %v4181 = vld [vmem:[%s4 + $0x40] sm:$0xff]
  %v4182 = vld [vmem:[%s4 + $0x48] sm:$0xff]
  %v4183 = vld [vmem:[%s4 + $0x50] sm:$0xff]
  %v4184 = vld [vmem:[%s4 + $0x58] sm:$0xff]
  %v4185 = vld [vmem:[%s4 + $0x60] sm:$0xff]
  %v4186 = vld [vmem:[%s4 + $0x68] sm:$0xff]
  %v4187 = vld [vmem:[%s4 + $0x70] sm:$0xff]
  %v4188 = vld [vmem:[%s4 + $0x78] sm:$0xff]
  %v4189 = vld [vmem:[%s4 + $0x80] sm:$0xff]
  %v4190 = vld [vmem:[%s4 + $0x88] sm:$0xff]
  %v4191 = vld [vmem:[%s4 + $0x90] sm:$0xff]
  %v4192 = vld [vmem:[%s4 + $0x98] sm:$0xff]
  %v4193 = vld [vmem:[%s4 + $0xa0] sm:$0xff]
  %v4194 = vld [vmem:[%s4 + $0xa8] sm:$0xff]
  %v4195 = vld [vmem:[%s4 + $0xb0] sm:$0xff]
  %v4196 = vld [vmem:[%s4 + $0xb8] sm:$0xff]
  %v4197 = vld [vmem:[%s4 + $0xc0] sm:$0xff]
  %v4198 = vld [vmem:[%s4 + $0xc8] sm:$0xff]
  %4200 = vset.pattern.permute.xlu0 0
  %4201 = vperm.xlu0 %4200, %v4173
  %v4202 = vpop.permute.xlu0 %4201
  %4205 = vset.pattern.permute.xlu0 0
  %4206 = vperm.xlu0 %4205, %v4174
  %v4207 = vpop.permute.xlu0 %4206
  %4210 = vset.pattern.permute.xlu0 0
  %4211 = vperm.xlu0 %4210, %v4175
  %v4212 = vpop.permute.xlu0 %4211
  %4215 = vset.pattern.permute.xlu0 0
  %4216 = vperm.xlu0 %4215, %v4176
  %v4217 = vpop.permute.xlu0 %4216
  %4220 = vset.pattern.permute.xlu0 0
  %4221 = vperm.xlu0 %4220, %v4177
  %v4222 = vpop.permute.xlu0 %4221
  %4225 = vset.pattern.permute.xlu0 0
  %4226 = vperm.xlu0 %4225, %v4178
  %v4227 = vpop.permute.xlu0 %4226
  %4230 = vset.pattern.permute.xlu0 0
  %4231 = vperm.xlu0 %4230, %v4179
  %v4232 = vpop.permute.xlu0 %4231
  %4235 = vset.pattern.permute.xlu0 0
  %4236 = vperm.xlu0 %4235, %v4180
  %v4237 = vpop.permute.xlu0 %4236
  %4240 = vset.pattern.permute.xlu0 0
  %4241 = vperm.xlu0 %4240, %v4181
  %v4242 = vpop.permute.xlu0 %4241
  %4245 = vset.pattern.permute.xlu0 0
  %4246 = vperm.xlu0 %4245, %v4182
  %v4247 = vpop.permute.xlu0 %4246
  %4250 = vset.pattern.permute.xlu0 0
  %4251 = vperm.xlu0 %4250, %v4183
  %v4252 = vpop.permute.xlu0 %4251
  %4255 = vset.pattern.permute.xlu0 0
  %4256 = vperm.xlu0 %4255, %v4184
  %v4257 = vpop.permute.xlu0 %4256
  %4260 = vset.pattern.permute.xlu0 0
  %4261 = vperm.xlu0 %4260, %v4185
  %v4262 = vpop.permute.xlu0 %4261
  %4265 = vset.pattern.permute.xlu0 0
  %4266 = vperm.xlu0 %4265, %v4186
  %v4267 = vpop.permute.xlu0 %4266
  %4270 = vset.pattern.permute.xlu0 0
  %4271 = vperm.xlu0 %4270, %v4187
  %v4272 = vpop.permute.xlu0 %4271
  %4275 = vset.pattern.permute.xlu0 0
  %4276 = vperm.xlu0 %4275, %v4188
  %v4277 = vpop.permute.xlu0 %4276
  %4280 = vset.pattern.permute.xlu0 0
  %4281 = vperm.xlu0 %4280, %v4189
  %v4282 = vpop.permute.xlu0 %4281
  %4285 = vset.pattern.permute.xlu0 0
  %4286 = vperm.xlu0 %4285, %v4190
  %v4287 = vpop.permute.xlu0 %4286
  %4290 = vset.pattern.permute.xlu0 0
  %4291 = vperm.xlu0 %4290, %v4191
  %v4292 = vpop.permute.xlu0 %4291
  %4295 = vset.pattern.permute.xlu0 0
  %4296 = vperm.xlu0 %4295, %v4192
  %v4297 = vpop.permute.xlu0 %4296
  %4300 = vset.pattern.permute.xlu0 0
  %4301 = vperm.xlu0 %4300, %v4193
  %v4302 = vpop.permute.xlu0 %4301
  %4305 = vset.pattern.permute.xlu0 0
  %4306 = vperm.xlu0 %4305, %v4194
  %v4307 = vpop.permute.xlu0 %4306
  %4310 = vset.pattern.permute.xlu0 0
  %4311 = vperm.xlu0 %4310, %v4195
  %v4312 = vpop.permute.xlu0 %4311
  %4315 = vset.pattern.permute.xlu0 0
  %4316 = vperm.xlu0 %4315, %v4196
  %v4317 = vpop.permute.xlu0 %4316
  %4320 = vset.pattern.permute.xlu0 0
  %4321 = vperm.xlu0 %4320, %v4197
  %v4322 = vpop.permute.xlu0 %4321
  %4325 = vset.pattern.permute.xlu0 0
  %4326 = vperm.xlu0 %4325, %v4198
  %v4327 = vpop.permute.xlu0 %4326
  %v4329 = vmul.f32 %v4147, %v4202
  %v4330 = vmul.f32 %v4148, %v4207
  %v4331 = vmul.f32 %v4149, %v4212
  %v4332 = vmul.f32 %v4150, %v4217
  %v4333 = vmul.f32 %v4151, %v4222
  %v4334 = vmul.f32 %v4152, %v4227
  %v4335 = vmul.f32 %v4153, %v4232
  %v4336 = vmul.f32 %v4154, %v4237
  %v4337 = vmul.f32 %v4155, %v4242
  %v4338 = vmul.f32 %v4156, %v4247
  %v4339 = vmul.f32 %v4157, %v4252
  %v4340 = vmul.f32 %v4158, %v4257
  %v4341 = vmul.f32 %v4159, %v4262
  %v4342 = vmul.f32 %v4160, %v4267
  %v4343 = vmul.f32 %v4161, %v4272
  %v4344 = vmul.f32 %v4162, %v4277
  %v4345 = vmul.f32 %v4163, %v4282
  %v4346 = vmul.f32 %v4164, %v4287
  %v4347 = vmul.f32 %v4165, %v4292
  %v4348 = vmul.f32 %v4166, %v4297
  %v4349 = vmul.f32 %v4167, %v4302
  %v4350 = vmul.f32 %v4168, %v4307
  %v4351 = vmul.f32 %v4169, %v4312
  %v4352 = vmul.f32 %v4170, %v4317
  %v4353 = vmul.f32 %v4171, %v4322
  %v4354 = vmul.f32 %v4172, %v4327
  %v4355 = vld [vmem:[%s5] sm:$0xff]
  %v4356 = vld [vmem:[%s5 + $0x8] sm:$0xff]
  %v4357 = vld [vmem:[%s5 + $0x10] sm:$0xff]
  %v4358 = vld [vmem:[%s5 + $0x18] sm:$0xff]
  %v4359 = vld [vmem:[%s5 + $0x20] sm:$0xff]
  %v4360 = vld [vmem:[%s5 + $0x28] sm:$0xff]
  %v4361 = vld [vmem:[%s5 + $0x30] sm:$0xff]
  %v4362 = vld [vmem:[%s5 + $0x38] sm:$0xff]
  %v4363 = vld [vmem:[%s5 + $0x40] sm:$0xff]
  %v4364 = vld [vmem:[%s5 + $0x48] sm:$0xff]
  %v4365 = vld [vmem:[%s5 + $0x50] sm:$0xff]
  %v4366 = vld [vmem:[%s5 + $0x58] sm:$0xff]
  %v4367 = vld [vmem:[%s5 + $0x60] sm:$0xff]
  %v4368 = vld [vmem:[%s5 + $0x68] sm:$0xff]
  %v4369 = vld [vmem:[%s5 + $0x70] sm:$0xff]
  %v4370 = vld [vmem:[%s5 + $0x78] sm:$0xff]
  %v4371 = vld [vmem:[%s5 + $0x80] sm:$0xff]
  %v4372 = vld [vmem:[%s5 + $0x88] sm:$0xff]
  %v4373 = vld [vmem:[%s5 + $0x90] sm:$0xff]
  %v4374 = vld [vmem:[%s5 + $0x98] sm:$0xff]
  %v4375 = vld [vmem:[%s5 + $0xa0] sm:$0xff]
  %v4376 = vld [vmem:[%s5 + $0xa8] sm:$0xff]
  %v4377 = vld [vmem:[%s5 + $0xb0] sm:$0xff]
  %v4378 = vld [vmem:[%s5 + $0xb8] sm:$0xff]
  %v4379 = vld [vmem:[%s5 + $0xc0] sm:$0xff]
  %v4380 = vld [vmem:[%s5 + $0xc8] sm:$0xff]
  %4382 = vset.pattern.permute.xlu0 0
  %4383 = vperm.xlu0 %4382, %v4355
  %v4384 = vpop.permute.xlu0 %4383
  %4387 = vset.pattern.permute.xlu0 0
  %4388 = vperm.xlu0 %4387, %v4356
  %v4389 = vpop.permute.xlu0 %4388
  %4392 = vset.pattern.permute.xlu0 0
  %4393 = vperm.xlu0 %4392, %v4357
  %v4394 = vpop.permute.xlu0 %4393
  %4397 = vset.pattern.permute.xlu0 0
  %4398 = vperm.xlu0 %4397, %v4358
  %v4399 = vpop.permute.xlu0 %4398
  %4402 = vset.pattern.permute.xlu0 0
  %4403 = vperm.xlu0 %4402, %v4359
  %v4404 = vpop.permute.xlu0 %4403
  %4407 = vset.pattern.permute.xlu0 0
  %4408 = vperm.xlu0 %4407, %v4360
  %v4409 = vpop.permute.xlu0 %4408
  %4412 = vset.pattern.permute.xlu0 0
  %4413 = vperm.xlu0 %4412, %v4361
  %v4414 = vpop.permute.xlu0 %4413
  %4417 = vset.pattern.permute.xlu0 0
  %4418 = vperm.xlu0 %4417, %v4362
  %v4419 = vpop.permute.xlu0 %4418
  %4422 = vset.pattern.permute.xlu0 0
  %4423 = vperm.xlu0 %4422, %v4363
  %v4424 = vpop.permute.xlu0 %4423
  %4427 = vset.pattern.permute.xlu0 0
  %4428 = vperm.xlu0 %4427, %v4364
  %v4429 = vpop.permute.xlu0 %4428
  %4432 = vset.pattern.permute.xlu0 0
  %4433 = vperm.xlu0 %4432, %v4365
  %v4434 = vpop.permute.xlu0 %4433
  %4437 = vset.pattern.permute.xlu0 0
  %4438 = vperm.xlu0 %4437, %v4366
  %v4439 = vpop.permute.xlu0 %4438
  %4442 = vset.pattern.permute.xlu0 0
  %4443 = vperm.xlu0 %4442, %v4367
  %v4444 = vpop.permute.xlu0 %4443
  %4447 = vset.pattern.permute.xlu0 0
  %4448 = vperm.xlu0 %4447, %v4368
  %v4449 = vpop.permute.xlu0 %4448
  %4452 = vset.pattern.permute.xlu0 0
  %4453 = vperm.xlu0 %4452, %v4369
  %v4454 = vpop.permute.xlu0 %4453
  %4457 = vset.pattern.permute.xlu0 0
  %4458 = vperm.xlu0 %4457, %v4370
  %v4459 = vpop.permute.xlu0 %4458
  %4462 = vset.pattern.permute.xlu0 0
  %4463 = vperm.xlu0 %4462, %v4371
  %v4464 = vpop.permute.xlu0 %4463
  %4467 = vset.pattern.permute.xlu0 0
  %4468 = vperm.xlu0 %4467, %v4372
  %v4469 = vpop.permute.xlu0 %4468
  %4472 = vset.pattern.permute.xlu0 0
  %4473 = vperm.xlu0 %4472, %v4373
  %v4474 = vpop.permute.xlu0 %4473
  %4477 = vset.pattern.permute.xlu0 0
  %4478 = vperm.xlu0 %4477, %v4374
  %v4479 = vpop.permute.xlu0 %4478
  %4482 = vset.pattern.permute.xlu0 0
  %4483 = vperm.xlu0 %4482, %v4375
  %v4484 = vpop.permute.xlu0 %4483
  %4487 = vset.pattern.permute.xlu0 0
  %4488 = vperm.xlu0 %4487, %v4376
  %v4489 = vpop.permute.xlu0 %4488
  %4492 = vset.pattern.permute.xlu0 0
  %4493 = vperm.xlu0 %4492, %v4377
  %v4494 = vpop.permute.xlu0 %4493
  %4497 = vset.pattern.permute.xlu0 0
  %4498 = vperm.xlu0 %4497, %v4378
  %v4499 = vpop.permute.xlu0 %4498
  %4502 = vset.pattern.permute.xlu0 0
  %4503 = vperm.xlu0 %4502, %v4379
  %v4504 = vpop.permute.xlu0 %4503
  %4507 = vset.pattern.permute.xlu0 0
  %4508 = vperm.xlu0 %4507, %v4380
  %v4509 = vpop.permute.xlu0 %4508
  %v4511 = vadd.f32 %v4329, %v4384
  %v4512 = vadd.f32 %v4330, %v4389
  %v4513 = vadd.f32 %v4331, %v4394
  %v4514 = vadd.f32 %v4332, %v4399
  %v4515 = vadd.f32 %v4333, %v4404
  %v4516 = vadd.f32 %v4334, %v4409
  %v4517 = vadd.f32 %v4335, %v4414
  %v4518 = vadd.f32 %v4336, %v4419
  %v4519 = vadd.f32 %v4337, %v4424
  %v4520 = vadd.f32 %v4338, %v4429
  %v4521 = vadd.f32 %v4339, %v4434
  %v4522 = vadd.f32 %v4340, %v4439
  %v4523 = vadd.f32 %v4341, %v4444
  %v4524 = vadd.f32 %v4342, %v4449
  %v4525 = vadd.f32 %v4343, %v4454
  %v4526 = vadd.f32 %v4344, %v4459
  %v4527 = vadd.f32 %v4345, %v4464
  %v4528 = vadd.f32 %v4346, %v4469
  %v4529 = vadd.f32 %v4347, %v4474
  %v4530 = vadd.f32 %v4348, %v4479
  %v4531 = vadd.f32 %v4349, %v4484
  %v4532 = vadd.f32 %v4350, %v4489
  %v4533 = vadd.f32 %v4351, %v4494
  %v4534 = vadd.f32 %v4352, %v4499
  %v4535 = vadd.f32 %v4353, %v4504
  %v4536 = vadd.f32 %v4354, %v4509
  %v4537 = vld [vmem:[%s2] sm:$0xff]
  %v4538 = vld [vmem:[%s2 + $0x8] sm:$0xff]
  %v4539 = vld [vmem:[%s2 + $0x10] sm:$0xff]
  %v4540 = vld [vmem:[%s2 + $0x18] sm:$0xff]
  %v4541 = vld [vmem:[%s2 + $0x20] sm:$0xff]
  %v4542 = vld [vmem:[%s2 + $0x28] sm:$0xff]
  %v4543 = vld [vmem:[%s2 + $0x30] sm:$0xff]
  %v4544 = vld [vmem:[%s2 + $0x38] sm:$0xff]
  %v4545 = vld [vmem:[%s2 + $0x40] sm:$0xff]
  %v4546 = vld [vmem:[%s2 + $0x48] sm:$0xff]
  %v4547 = vld [vmem:[%s2 + $0x50] sm:$0xff]
  %v4548 = vld [vmem:[%s2 + $0x58] sm:$0xff]
  %v4549 = vld [vmem:[%s2 + $0x60] sm:$0xff]
  %v4550 = vld [vmem:[%s2 + $0x68] sm:$0xff]
  %v4551 = vld [vmem:[%s2 + $0x70] sm:$0xff]
  %v4552 = vld [vmem:[%s2 + $0x78] sm:$0xff]
  %v4553 = vld [vmem:[%s2 + $0x80] sm:$0xff]
  %v4554 = vld [vmem:[%s2 + $0x88] sm:$0xff]
  %v4555 = vld [vmem:[%s2 + $0x90] sm:$0xff]
  %v4556 = vld [vmem:[%s2 + $0x98] sm:$0xff]
  %v4557 = vld [vmem:[%s2 + $0xa0] sm:$0xff]
  %v4558 = vld [vmem:[%s2 + $0xa8] sm:$0xff]
  %v4559 = vld [vmem:[%s2 + $0xb0] sm:$0xff]
  %v4560 = vld [vmem:[%s2 + $0xb8] sm:$0xff]
  %v4561 = vld [vmem:[%s2 + $0xc0] sm:$0xff]
  %v4562 = vld [vmem:[%s2 + $0xc8] sm:$0xff]
  %v4563 = vadd.f32 %v4511, %v4537
  %v4564 = vadd.f32 %v4512, %v4538
  %v4565 = vadd.f32 %v4513, %v4539
  %v4566 = vadd.f32 %v4514, %v4540
  %v4567 = vadd.f32 %v4515, %v4541
  %v4568 = vadd.f32 %v4516, %v4542
  %v4569 = vadd.f32 %v4517, %v4543
  %v4570 = vadd.f32 %v4518, %v4544
  %v4571 = vadd.f32 %v4519, %v4545
  %v4572 = vadd.f32 %v4520, %v4546
  %v4573 = vadd.f32 %v4521, %v4547
  %v4574 = vadd.f32 %v4522, %v4548
  %v4575 = vadd.f32 %v4523, %v4549
  %v4576 = vadd.f32 %v4524, %v4550
  %v4577 = vadd.f32 %v4525, %v4551
  %v4578 = vadd.f32 %v4526, %v4552
  %v4579 = vadd.f32 %v4527, %v4553
  %v4580 = vadd.f32 %v4528, %v4554
  %v4581 = vadd.f32 %v4529, %v4555
  %v4582 = vadd.f32 %v4530, %v4556
  %v4583 = vadd.f32 %v4531, %v4557
  %v4584 = vadd.f32 %v4532, %v4558
  %v4585 = vadd.f32 %v4533, %v4559
  %v4586 = vadd.f32 %v4534, %v4560
  %v4587 = vadd.f32 %v4535, %v4561
  %v4588 = vadd.f32 %v4536, %v4562
  %v4589 = vld [vmem:[%s6] sm:$0xff]
  %v4590 = vld [vmem:[%s6 + $0x8] sm:$0xff]
  %v4591 = vld [vmem:[%s6 + $0x10] sm:$0xff]
  %v4592 = vld [vmem:[%s6 + $0x18] sm:$0xff]
  %v4593 = vld [vmem:[%s6 + $0x20] sm:$0xff]
  %v4594 = vld [vmem:[%s6 + $0x28] sm:$0xff]
  %v4595 = vld [vmem:[%s6 + $0x30] sm:$0xff]
  %v4596 = vld [vmem:[%s6 + $0x38] sm:$0xff]
  %v4597 = vld [vmem:[%s6 + $0x40] sm:$0xff]
  %v4598 = vld [vmem:[%s6 + $0x48] sm:$0xff]
  %v4599 = vld [vmem:[%s6 + $0x50] sm:$0xff]
  %v4600 = vld [vmem:[%s6 + $0x58] sm:$0xff]
  %v4601 = vld [vmem:[%s6 + $0x60] sm:$0xff]
  %v4602 = vld [vmem:[%s6 + $0x68] sm:$0xff]
  %v4603 = vld [vmem:[%s6 + $0x70] sm:$0xff]
  %v4604 = vld [vmem:[%s6 + $0x78] sm:$0xff]
  %v4605 = vld [vmem:[%s6 + $0x80] sm:$0xff]
  %v4606 = vld [vmem:[%s6 + $0x88] sm:$0xff]
  %v4607 = vld [vmem:[%s6 + $0x90] sm:$0xff]
  %v4608 = vld [vmem:[%s6 + $0x98] sm:$0xff]
  %v4609 = vld [vmem:[%s6 + $0xa0] sm:$0xff]
  %v4610 = vld [vmem:[%s6 + $0xa8] sm:$0xff]
  %v4611 = vld [vmem:[%s6 + $0xb0] sm:$0xff]
  %v4612 = vld [vmem:[%s6 + $0xb8] sm:$0xff]
  %v4613 = vld [vmem:[%s6 + $0xc0] sm:$0xff]
  %v4614 = vld [vmem:[%s6 + $0xc8] sm:$0xff]
  %v4615 = vld [vmem:[%s6 + $0xd0] sm:$0xff]
  %v4616 = vld [vmem:[%s6 + $0xd8] sm:$0xff]
  %v4617 = vld [vmem:[%s6 + $0xe0] sm:$0xff]
  %v4618 = vld [vmem:[%s6 + $0xe8] sm:$0xff]
  %v4619 = vld [vmem:[%s6 + $0xf0] sm:$0xff]
  %v4620 = vld [vmem:[%s6 + $0xf8] sm:$0xff]
  %v4621 = vld [vmem:[%s6 + $0x100] sm:$0xff]
  %v4622 = vld [vmem:[%s6 + $0x108] sm:$0xff]
  %v4623 = vld [vmem:[%s6 + $0x110] sm:$0xff]
  %v4624 = vld [vmem:[%s6 + $0x118] sm:$0xff]
  %v4625 = vld [vmem:[%s6 + $0x120] sm:$0xff]
  %v4626 = vld [vmem:[%s6 + $0x128] sm:$0xff]
  %v4627 = vld [vmem:[%s6 + $0x130] sm:$0xff]
  %v4628 = vld [vmem:[%s6 + $0x138] sm:$0xff]
  %v4629 = vld [vmem:[%s6 + $0x140] sm:$0xff]
  %v4630 = vld [vmem:[%s6 + $0x148] sm:$0xff]
  %v4631 = vld [vmem:[%s6 + $0x150] sm:$0xff]
  %v4632 = vld [vmem:[%s6 + $0x158] sm:$0xff]
  %v4633 = vld [vmem:[%s6 + $0x160] sm:$0xff]
  %v4634 = vld [vmem:[%s6 + $0x168] sm:$0xff]
  %v4635 = vld [vmem:[%s6 + $0x170] sm:$0xff]
  %v4636 = vld [vmem:[%s6 + $0x178] sm:$0xff]
  %v4637 = vld [vmem:[%s6 + $0x180] sm:$0xff]
  %v4638 = vld [vmem:[%s6 + $0x188] sm:$0xff]
  %v4639 = vld [vmem:[%s6 + $0x190] sm:$0xff]
  %v4640 = vld [vmem:[%s6 + $0x198] sm:$0xff]
  %v4641 = vld [vmem:[%s6 + $0x1a0] sm:$0xff]
  %v4642 = vld [vmem:[%s6 + $0x1a8] sm:$0xff]
  %v4643 = vld [vmem:[%s6 + $0x1b0] sm:$0xff]
  %v4644 = vld [vmem:[%s6 + $0x1b8] sm:$0xff]
  %v4645 = vld [vmem:[%s6 + $0x1c0] sm:$0xff]
  %v4646 = vld [vmem:[%s6 + $0x1c8] sm:$0xff]
  %v4647 = vld [vmem:[%s6 + $0x1d0] sm:$0xff]
  %v4648 = vld [vmem:[%s6 + $0x1d8] sm:$0xff]
  %v4649 = vld [vmem:[%s6 + $0x1e0] sm:$0xff]
  %v4650 = vld [vmem:[%s6 + $0x1e8] sm:$0xff]
  %v4651 = vld [vmem:[%s6 + $0x1f0] sm:$0xff]
  %v4652 = vld [vmem:[%s6 + $0x1f8] sm:$0xff]
  %v4653 = vld [vmem:[%s6 + $0x200] sm:$0xff]
  %v4654 = vld [vmem:[%s6 + $0x208] sm:$0xff]
  %v4655 = vld [vmem:[%s6 + $0x210] sm:$0xff]
  %v4656 = vld [vmem:[%s6 + $0x218] sm:$0xff]
  %v4657 = vld [vmem:[%s6 + $0x220] sm:$0xff]
  %v4658 = vld [vmem:[%s6 + $0x228] sm:$0xff]
  %v4659 = vld [vmem:[%s6 + $0x230] sm:$0xff]
  %v4660 = vld [vmem:[%s6 + $0x238] sm:$0xff]
  %v4661 = vld [vmem:[%s6 + $0x240] sm:$0xff]
  %v4662 = vld [vmem:[%s6 + $0x248] sm:$0xff]
  %v4663 = vld [vmem:[%s6 + $0x250] sm:$0xff]
  %v4664 = vld [vmem:[%s6 + $0x258] sm:$0xff]
  %v4665 = vld [vmem:[%s6 + $0x260] sm:$0xff]
  %v4666 = vld [vmem:[%s6 + $0x268] sm:$0xff]
  %v4667 = vld [vmem:[%s6 + $0x270] sm:$0xff]
  %v4668 = vld [vmem:[%s6 + $0x278] sm:$0xff]
  %v4669 = vld [vmem:[%s6 + $0x280] sm:$0xff]
  %v4670 = vld [vmem:[%s6 + $0x288] sm:$0xff]
  %v4671 = vld [vmem:[%s6 + $0x290] sm:$0xff]
  %v4672 = vld [vmem:[%s6 + $0x298] sm:$0xff]
  %v4673 = vld [vmem:[%s6 + $0x2a0] sm:$0xff]
  %v4674 = vld [vmem:[%s6 + $0x2a8] sm:$0xff]
  %v4675 = vld [vmem:[%s6 + $0x2b0] sm:$0xff]
  %v4676 = vld [vmem:[%s6 + $0x2b8] sm:$0xff]
  %v4677 = vld [vmem:[%s6 + $0x2c0] sm:$0xff]
  %v4678 = vld [vmem:[%s6 + $0x2c8] sm:$0xff]
  %v4679 = vld [vmem:[%s6 + $0x2d0] sm:$0xff]
  %v4680 = vld [vmem:[%s6 + $0x2d8] sm:$0xff]
  %v4681 = vld [vmem:[%s6 + $0x2e0] sm:$0xff]
  %v4682 = vld [vmem:[%s6 + $0x2e8] sm:$0xff]
  %v4683 = vld [vmem:[%s6 + $0x2f0] sm:$0xff]
  %v4684 = vld [vmem:[%s6 + $0x2f8] sm:$0xff]
  %v4685 = vld [vmem:[%s6 + $0x300] sm:$0xff]
  %v4686 = vld [vmem:[%s6 + $0x308] sm:$0xff]
  %v4687 = vld [vmem:[%s6 + $0x310] sm:$0xff]
  %v4688 = vld [vmem:[%s6 + $0x318] sm:$0xff]
  %v4689 = vld [vmem:[%s6 + $0x320] sm:$0xff]
  %v4690 = vld [vmem:[%s6 + $0x328] sm:$0xff]
  %v4691 = vld [vmem:[%s6 + $0x330] sm:$0xff]
  %v4692 = vld [vmem:[%s6 + $0x338] sm:$0xff]
  %v4693 = vld [vmem:[%s6 + $0x340] sm:$0xff]
  %v4694 = vld [vmem:[%s6 + $0x348] sm:$0xff]
  %v4695 = vld [vmem:[%s6 + $0x350] sm:$0xff]
  %v4696 = vld [vmem:[%s6 + $0x358] sm:$0xff]
  %v4697 = vld [vmem:[%s6 + $0x360] sm:$0xff]
  %v4698 = vld [vmem:[%s6 + $0x368] sm:$0xff]
  %v4699 = vld [vmem:[%s6 + $0x370] sm:$0xff]
  %v4700 = vld [vmem:[%s6 + $0x378] sm:$0xff]
  %v4701 = vld [vmem:[%s6 + $0x380] sm:$0xff]
  %v4702 = vld [vmem:[%s6 + $0x388] sm:$0xff]
  %v4703 = vld [vmem:[%s6 + $0x390] sm:$0xff]
  %v4704 = vld [vmem:[%s6 + $0x398] sm:$0xff]
  %v4705 = vld [vmem:[%s6 + $0x3a0] sm:$0xff]
  %v4706 = vld [vmem:[%s6 + $0x3a8] sm:$0xff]
  %v4707 = vld [vmem:[%s6 + $0x3b0] sm:$0xff]
  %v4708 = vld [vmem:[%s6 + $0x3b8] sm:$0xff]
  %v4709 = vld [vmem:[%s6 + $0x3c0] sm:$0xff]
  %v4710 = vld [vmem:[%s6 + $0x3c8] sm:$0xff]
  %v4711 = vld [vmem:[%s6 + $0x3d0] sm:$0xff]
  %v4712 = vld [vmem:[%s6 + $0x3d8] sm:$0xff]
  %v4713 = vld [vmem:[%s6 + $0x3e0] sm:$0xff]
  %v4714 = vld [vmem:[%s6 + $0x3e8] sm:$0xff]
  %v4715 = vld [vmem:[%s6 + $0x3f0] sm:$0xff]
  %v4716 = vld [vmem:[%s6 + $0x3f8] sm:$0xff]
  %v4717 = vld [vmem:[%s6 + $0x400] sm:$0xff]
  %v4718 = vld [vmem:[%s6 + $0x408] sm:$0xff]
  %v4719 = vld [vmem:[%s6 + $0x410] sm:$0xff]
  %v4720 = vld [vmem:[%s6 + $0x418] sm:$0xff]
  %v4721 = vld [vmem:[%s6 + $0x420] sm:$0xff]
  %v4722 = vld [vmem:[%s6 + $0x428] sm:$0xff]
  %v4723 = vld [vmem:[%s6 + $0x430] sm:$0xff]
  %v4724 = vld [vmem:[%s6 + $0x438] sm:$0xff]
  %v4725 = vld [vmem:[%s6 + $0x440] sm:$0xff]
  %v4726 = vld [vmem:[%s6 + $0x448] sm:$0xff]
  %v4727 = vld [vmem:[%s6 + $0x450] sm:$0xff]
  %v4728 = vld [vmem:[%s6 + $0x458] sm:$0xff]
  %v4729 = vld [vmem:[%s6 + $0x460] sm:$0xff]
  %v4730 = vld [vmem:[%s6 + $0x468] sm:$0xff]
  %v4731 = vld [vmem:[%s6 + $0x470] sm:$0xff]
  %v4732 = vld [vmem:[%s6 + $0x478] sm:$0xff]
  %v4733 = vld [vmem:[%s6 + $0x480] sm:$0xff]
  %v4734 = vld [vmem:[%s6 + $0x488] sm:$0xff]
  %v4735 = vld [vmem:[%s6 + $0x490] sm:$0xff]
  %v4736 = vld [vmem:[%s6 + $0x498] sm:$0xff]
  %v4737 = vld [vmem:[%s6 + $0x4a0] sm:$0xff]
  %v4738 = vld [vmem:[%s6 + $0x4a8] sm:$0xff]
  %v4739 = vld [vmem:[%s6 + $0x4b0] sm:$0xff]
  %v4740 = vld [vmem:[%s6 + $0x4b8] sm:$0xff]
  %v4741 = vld [vmem:[%s6 + $0x4c0] sm:$0xff]
  %v4742 = vld [vmem:[%s6 + $0x4c8] sm:$0xff]
  %v4743 = vld [vmem:[%s6 + $0x4d0] sm:$0xff]
  %v4744 = vld [vmem:[%s6 + $0x4d8] sm:$0xff]
  %v4745 = vpack.c.bf16 %v4564, %v4563
  %v4746 = vpack.c.bf16 %v4566, %v4565
  %v4747 = vpack.c.bf16 %v4568, %v4567
  %v4748 = vpack.c.bf16 %v4570, %v4569
  %v4749 = vpack.c.bf16 %v4572, %v4571
  %v4750 = vpack.c.bf16 %v4574, %v4573
  %v4751 = vpack.c.bf16 %v4576, %v4575
  %v4752 = vpack.c.bf16 %v4578, %v4577
  %v4753 = vpack.c.bf16 %v4580, %v4579
  %v4754 = vpack.c.bf16 %v4582, %v4581
  %v4755 = vpack.c.bf16 %v4584, %v4583
  %v4756 = vpack.c.bf16 %v4586, %v4585
  %v4757 = vpack.c.bf16 %v4588, %v4587
  %v4914 = vunpack.c.l.b16 %v4589
  %v4915 = vunpack.c.h.b16 %v4589
  %v4916 = vunpack.c.l.b16 %v4590
  %v4917 = vunpack.c.h.b16 %v4590
  %v4918 = vunpack.c.l.b16 %v4591
  %v4919 = vunpack.c.h.b16 %v4591
  %v4920 = vunpack.c.l.b16 %v4592
  %v4921 = vunpack.c.h.b16 %v4592
  %v4922 = vunpack.c.l.b16 %v4593
  %v4923 = vunpack.c.h.b16 %v4593
  %v4924 = vunpack.c.l.b16 %v4594
  %v4925 = vunpack.c.h.b16 %v4594
  %v4926 = vunpack.c.l.b16 %v4595
  %v4927 = vunpack.c.h.b16 %v4595
  %v4928 = vunpack.c.l.b16 %v4596
  %v4929 = vunpack.c.h.b16 %v4596
  %v4930 = vunpack.c.l.b16 %v4597
  %v4931 = vunpack.c.h.b16 %v4597
  %v4932 = vunpack.c.l.b16 %v4598
  %v4933 = vunpack.c.h.b16 %v4598
  %v4934 = vunpack.c.l.b16 %v4599
  %v4935 = vunpack.c.h.b16 %v4599
  %v4936 = vunpack.c.l.b16 %v4600
  %v4937 = vunpack.c.h.b16 %v4600
  %v4938 = vunpack.c.l.b16 %v4601
  %v4939 = vunpack.c.h.b16 %v4601
  %v4940 = vunpack.c.l.b16 %v4602
  %v4941 = vunpack.c.h.b16 %v4602
  %v4942 = vunpack.c.l.b16 %v4603
  %v4943 = vunpack.c.h.b16 %v4603
  %v4944 = vunpack.c.l.b16 %v4604
  %v4945 = vunpack.c.h.b16 %v4604
  %v4946 = vunpack.c.l.b16 %v4605
  %v4947 = vunpack.c.h.b16 %v4605
  %v4948 = vunpack.c.l.b16 %v4606
  %v4949 = vunpack.c.h.b16 %v4606
  %v4950 = vunpack.c.l.b16 %v4607
  %v4951 = vunpack.c.h.b16 %v4607
  %v4952 = vunpack.c.l.b16 %v4608
  %v4953 = vunpack.c.h.b16 %v4608
  %v4954 = vunpack.c.l.b16 %v4609
  %v4955 = vunpack.c.h.b16 %v4609
  %v4956 = vunpack.c.l.b16 %v4610
  %v4957 = vunpack.c.h.b16 %v4610
  %v4958 = vunpack.c.l.b16 %v4611
  %v4959 = vunpack.c.h.b16 %v4611
  %v4960 = vunpack.c.l.b16 %v4612
  %v4961 = vunpack.c.h.b16 %v4612
  %v4962 = vunpack.c.l.b16 %v4613
  %v4963 = vunpack.c.h.b16 %v4613
  %v4964 = vunpack.c.l.b16 %v4614
  %v4965 = vunpack.c.h.b16 %v4614
  %v4966 = vunpack.c.l.b16 %v4615
  %v4967 = vunpack.c.h.b16 %v4615
  %v4968 = vunpack.c.l.b16 %v4616
  %v4969 = vunpack.c.h.b16 %v4616
  %v4970 = vunpack.c.l.b16 %v4617
  %v4971 = vunpack.c.h.b16 %v4617
  %v4972 = vunpack.c.l.b16 %v4618
  %v4973 = vunpack.c.h.b16 %v4618
  %v4974 = vunpack.c.l.b16 %v4619
  %v4975 = vunpack.c.h.b16 %v4619
  %v4976 = vunpack.c.l.b16 %v4620
  %v4977 = vunpack.c.h.b16 %v4620
  %v4978 = vunpack.c.l.b16 %v4621
  %v4979 = vunpack.c.h.b16 %v4621
  %v4980 = vunpack.c.l.b16 %v4622
  %v4981 = vunpack.c.h.b16 %v4622
  %v4982 = vunpack.c.l.b16 %v4623
  %v4983 = vunpack.c.h.b16 %v4623
  %v4984 = vunpack.c.l.b16 %v4624
  %v4985 = vunpack.c.h.b16 %v4624
  %v4986 = vunpack.c.l.b16 %v4625
  %v4987 = vunpack.c.h.b16 %v4625
  %v4988 = vunpack.c.l.b16 %v4626
  %v4989 = vunpack.c.h.b16 %v4626
  %v4990 = vunpack.c.l.b16 %v4627
  %v4991 = vunpack.c.h.b16 %v4627
  %v4992 = vunpack.c.l.b16 %v4628
  %v4993 = vunpack.c.h.b16 %v4628
  %v4994 = vunpack.c.l.b16 %v4629
  %v4995 = vunpack.c.h.b16 %v4629
  %v4996 = vunpack.c.l.b16 %v4630
  %v4997 = vunpack.c.h.b16 %v4630
  %v4998 = vunpack.c.l.b16 %v4631
  %v4999 = vunpack.c.h.b16 %v4631
  %v5000 = vunpack.c.l.b16 %v4632
  %v5001 = vunpack.c.h.b16 %v4632
  %v5002 = vunpack.c.l.b16 %v4633
  %v5003 = vunpack.c.h.b16 %v4633
  %v5004 = vunpack.c.l.b16 %v4634
  %v5005 = vunpack.c.h.b16 %v4634
  %v5006 = vunpack.c.l.b16 %v4635
  %v5007 = vunpack.c.h.b16 %v4635
  %v5008 = vunpack.c.l.b16 %v4636
  %v5009 = vunpack.c.h.b16 %v4636
  %v5010 = vunpack.c.l.b16 %v4637
  %v5011 = vunpack.c.h.b16 %v4637
  %v5012 = vunpack.c.l.b16 %v4638
  %v5013 = vunpack.c.h.b16 %v4638
  %v5014 = vunpack.c.l.b16 %v4639
  %v5015 = vunpack.c.h.b16 %v4639
  %v5016 = vunpack.c.l.b16 %v4640
  %v5017 = vunpack.c.h.b16 %v4640
  %v5018 = vunpack.c.l.b16 %v4641
  %v5019 = vunpack.c.h.b16 %v4641
  %v5020 = vunpack.c.l.b16 %v4642
  %v5021 = vunpack.c.h.b16 %v4642
  %v5022 = vunpack.c.l.b16 %v4643
  %v5023 = vunpack.c.h.b16 %v4643
  %v5024 = vunpack.c.l.b16 %v4644
  %v5025 = vunpack.c.h.b16 %v4644
  %v5026 = vunpack.c.l.b16 %v4645
  %v5027 = vunpack.c.h.b16 %v4645
  %v5028 = vunpack.c.l.b16 %v4646
  %v5029 = vunpack.c.h.b16 %v4646
  %v5030 = vunpack.c.l.b16 %v4647
  %v5031 = vunpack.c.h.b16 %v4647
  %v5032 = vunpack.c.l.b16 %v4648
  %v5033 = vunpack.c.h.b16 %v4648
  %v5034 = vunpack.c.l.b16 %v4649
  %v5035 = vunpack.c.h.b16 %v4649
  %v5036 = vunpack.c.l.b16 %v4650
  %v5037 = vunpack.c.h.b16 %v4650
  %v5038 = vunpack.c.l.b16 %v4651
  %v5039 = vunpack.c.h.b16 %v4651
  %v5040 = vunpack.c.l.b16 %v4652
  %v5041 = vunpack.c.h.b16 %v4652
  %v5042 = vunpack.c.l.b16 %v4653
  %v5043 = vunpack.c.h.b16 %v4653
  %v5044 = vunpack.c.l.b16 %v4654
  %v5045 = vunpack.c.h.b16 %v4654
  %v5046 = vunpack.c.l.b16 %v4655
  %v5047 = vunpack.c.h.b16 %v4655
  %v5048 = vunpack.c.l.b16 %v4656
  %v5049 = vunpack.c.h.b16 %v4656
  %v5050 = vunpack.c.l.b16 %v4657
  %v5051 = vunpack.c.h.b16 %v4657
  %v5052 = vunpack.c.l.b16 %v4658
  %v5053 = vunpack.c.h.b16 %v4658
  %v5054 = vunpack.c.l.b16 %v4659
  %v5055 = vunpack.c.h.b16 %v4659
  %v5056 = vunpack.c.l.b16 %v4660
  %v5057 = vunpack.c.h.b16 %v4660
  %v5058 = vunpack.c.l.b16 %v4661
  %v5059 = vunpack.c.h.b16 %v4661
  %v5060 = vunpack.c.l.b16 %v4662
  %v5061 = vunpack.c.h.b16 %v4662
  %v5062 = vunpack.c.l.b16 %v4663
  %v5063 = vunpack.c.h.b16 %v4663
  %v5064 = vunpack.c.l.b16 %v4664
  %v5065 = vunpack.c.h.b16 %v4664
  %v5066 = vunpack.c.l.b16 %v4665
  %v5067 = vunpack.c.h.b16 %v4665
  %v5068 = vunpack.c.l.b16 %v4666
  %v5069 = vunpack.c.h.b16 %v4666
  %v5070 = vunpack.c.l.b16 %v4667
  %v5071 = vunpack.c.h.b16 %v4667
  %v5072 = vunpack.c.l.b16 %v4668
  %v5073 = vunpack.c.h.b16 %v4668
  %v5074 = vunpack.c.l.b16 %v4669
  %v5075 = vunpack.c.h.b16 %v4669
  %v5076 = vunpack.c.l.b16 %v4670
  %v5077 = vunpack.c.h.b16 %v4670
  %v5078 = vunpack.c.l.b16 %v4671
  %v5079 = vunpack.c.h.b16 %v4671
  %v5080 = vunpack.c.l.b16 %v4672
  %v5081 = vunpack.c.h.b16 %v4672
  %v5082 = vunpack.c.l.b16 %v4673
  %v5083 = vunpack.c.h.b16 %v4673
  %v5084 = vunpack.c.l.b16 %v4674
  %v5085 = vunpack.c.h.b16 %v4674
  %v5086 = vunpack.c.l.b16 %v4675
  %v5087 = vunpack.c.h.b16 %v4675
  %v5088 = vunpack.c.l.b16 %v4676
  %v5089 = vunpack.c.h.b16 %v4676
  %v5090 = vunpack.c.l.b16 %v4677
  %v5091 = vunpack.c.h.b16 %v4677
  %v5092 = vunpack.c.l.b16 %v4678
  %v5093 = vunpack.c.h.b16 %v4678
  %v5094 = vunpack.c.l.b16 %v4679
  %v5095 = vunpack.c.h.b16 %v4679
  %v5096 = vunpack.c.l.b16 %v4680
  %v5097 = vunpack.c.h.b16 %v4680
  %v5098 = vunpack.c.l.b16 %v4681
  %v5099 = vunpack.c.h.b16 %v4681
  %v5100 = vunpack.c.l.b16 %v4682
  %v5101 = vunpack.c.h.b16 %v4682
  %v5102 = vunpack.c.l.b16 %v4683
  %v5103 = vunpack.c.h.b16 %v4683
  %v5104 = vunpack.c.l.b16 %v4684
  %v5105 = vunpack.c.h.b16 %v4684
  %v5106 = vunpack.c.l.b16 %v4685
  %v5107 = vunpack.c.h.b16 %v4685
  %v5108 = vunpack.c.l.b16 %v4686
  %v5109 = vunpack.c.h.b16 %v4686
  %v5110 = vunpack.c.l.b16 %v4687
  %v5111 = vunpack.c.h.b16 %v4687
  %v5112 = vunpack.c.l.b16 %v4688
  %v5113 = vunpack.c.h.b16 %v4688
  %v5114 = vunpack.c.l.b16 %v4689
  %v5115 = vunpack.c.h.b16 %v4689
  %v5116 = vunpack.c.l.b16 %v4690
  %v5117 = vunpack.c.h.b16 %v4690
  %v5118 = vunpack.c.l.b16 %v4691
  %v5119 = vunpack.c.h.b16 %v4691
  %v5120 = vunpack.c.l.b16 %v4692
  %v5121 = vunpack.c.h.b16 %v4692
  %v5122 = vunpack.c.l.b16 %v4693
  %v5123 = vunpack.c.h.b16 %v4693
  %v5124 = vunpack.c.l.b16 %v4694
  %v5125 = vunpack.c.h.b16 %v4694
  %v5126 = vunpack.c.l.b16 %v4695
  %v5127 = vunpack.c.h.b16 %v4695
  %v5128 = vunpack.c.l.b16 %v4696
  %v5129 = vunpack.c.h.b16 %v4696
  %v5130 = vunpack.c.l.b16 %v4697
  %v5131 = vunpack.c.h.b16 %v4697
  %v5132 = vunpack.c.l.b16 %v4698
  %v5133 = vunpack.c.h.b16 %v4698
  %v5134 = vunpack.c.l.b16 %v4699
  %v5135 = vunpack.c.h.b16 %v4699
  %v5136 = vunpack.c.l.b16 %v4700
  %v5137 = vunpack.c.h.b16 %v4700
  %v5138 = vunpack.c.l.b16 %v4701
  %v5139 = vunpack.c.h.b16 %v4701
  %v5140 = vunpack.c.l.b16 %v4702
  %v5141 = vunpack.c.h.b16 %v4702
  %v5142 = vunpack.c.l.b16 %v4703
  %v5143 = vunpack.c.h.b16 %v4703
  %v5144 = vunpack.c.l.b16 %v4704
  %v5145 = vunpack.c.h.b16 %v4704
  %v5146 = vunpack.c.l.b16 %v4705
  %v5147 = vunpack.c.h.b16 %v4705
  %v5148 = vunpack.c.l.b16 %v4706
  %v5149 = vunpack.c.h.b16 %v4706
  %v5150 = vunpack.c.l.b16 %v4707
  %v5151 = vunpack.c.h.b16 %v4707
  %v5152 = vunpack.c.l.b16 %v4708
  %v5153 = vunpack.c.h.b16 %v4708
  %v5154 = vunpack.c.l.b16 %v4709
  %v5155 = vunpack.c.h.b16 %v4709
  %v5156 = vunpack.c.l.b16 %v4710
  %v5157 = vunpack.c.h.b16 %v4710
  %v5158 = vunpack.c.l.b16 %v4711
  %v5159 = vunpack.c.h.b16 %v4711
  %v5160 = vunpack.c.l.b16 %v4712
  %v5161 = vunpack.c.h.b16 %v4712
  %v5162 = vunpack.c.l.b16 %v4713
  %v5163 = vunpack.c.h.b16 %v4713
  %v5164 = vunpack.c.l.b16 %v4714
  %v5165 = vunpack.c.h.b16 %v4714
  %v5166 = vunpack.c.l.b16 %v4715
  %v5167 = vunpack.c.h.b16 %v4715
  %v5168 = vunpack.c.l.b16 %v4716
  %v5169 = vunpack.c.h.b16 %v4716
  %v5170 = vunpack.c.l.b16 %v4717
  %v5171 = vunpack.c.h.b16 %v4717
  %v5172 = vunpack.c.l.b16 %v4718
  %v5173 = vunpack.c.h.b16 %v4718
  %v5174 = vunpack.c.l.b16 %v4719
  %v5175 = vunpack.c.h.b16 %v4719
  %v5176 = vunpack.c.l.b16 %v4720
  %v5177 = vunpack.c.h.b16 %v4720
  %v5178 = vunpack.c.l.b16 %v4721
  %v5179 = vunpack.c.h.b16 %v4721
  %v5180 = vunpack.c.l.b16 %v4722
  %v5181 = vunpack.c.h.b16 %v4722
  %v5182 = vunpack.c.l.b16 %v4723
  %v5183 = vunpack.c.h.b16 %v4723
  %v5184 = vunpack.c.l.b16 %v4724
  %v5185 = vunpack.c.h.b16 %v4724
  %v5186 = vunpack.c.l.b16 %v4725
  %v5187 = vunpack.c.h.b16 %v4725
  %v5188 = vunpack.c.l.b16 %v4726
  %v5189 = vunpack.c.h.b16 %v4726
  %v5190 = vunpack.c.l.b16 %v4727
  %v5191 = vunpack.c.h.b16 %v4727
  %v5192 = vunpack.c.l.b16 %v4728
  %v5193 = vunpack.c.h.b16 %v4728
  %v5194 = vunpack.c.l.b16 %v4729
  %v5195 = vunpack.c.h.b16 %v4729
  %v5196 = vunpack.c.l.b16 %v4730
  %v5197 = vunpack.c.h.b16 %v4730
  %v5198 = vunpack.c.l.b16 %v4731
  %v5199 = vunpack.c.h.b16 %v4731
  %v5200 = vunpack.c.l.b16 %v4732
  %v5201 = vunpack.c.h.b16 %v4732
  %v5202 = vunpack.c.l.b16 %v4733
  %v5203 = vunpack.c.h.b16 %v4733
  %v5204 = vunpack.c.l.b16 %v4734
  %v5205 = vunpack.c.h.b16 %v4734
  %v5206 = vunpack.c.l.b16 %v4735
  %v5207 = vunpack.c.h.b16 %v4735
  %v5208 = vunpack.c.l.b16 %v4736
  %v5209 = vunpack.c.h.b16 %v4736
  %v5210 = vunpack.c.l.b16 %v4737
  %v5211 = vunpack.c.h.b16 %v4737
  %v5212 = vunpack.c.l.b16 %v4738
  %v5213 = vunpack.c.h.b16 %v4738
  %v5214 = vunpack.c.l.b16 %v4739
  %v5215 = vunpack.c.h.b16 %v4739
  %v5216 = vunpack.c.l.b16 %v4740
  %v5217 = vunpack.c.h.b16 %v4740
  %v5218 = vunpack.c.l.b16 %v4741
  %v5219 = vunpack.c.h.b16 %v4741
  %v5220 = vunpack.c.l.b16 %v4742
  %v5221 = vunpack.c.h.b16 %v4742
  %v5222 = vunpack.c.l.b16 %v4743
  %v5223 = vunpack.c.h.b16 %v4743
  %v5224 = vunpack.c.l.b16 %v4744
  %v5225 = vunpack.c.h.b16 %v4744
  %v5226 = vpack.c.b16 %v4916, %v4914
  %v5227 = vpack.c.b16 %v4917, %v4915
  %v5228 = vpack.c.b16 %v4920, %v4918
  %v5229 = vpack.c.b16 %v4921, %v4919
  %v5230 = vpack.c.b16 %v4924, %v4922
  %v5231 = vpack.c.b16 %v4925, %v4923
  %v5232 = vpack.c.b16 %v4928, %v4926
  %v5233 = vpack.c.b16 %v4929, %v4927
  %v5234 = vpack.c.b16 %v4932, %v4930
  %v5235 = vpack.c.b16 %v4933, %v4931
  %v5236 = vpack.c.b16 %v4936, %v4934
  %v5237 = vpack.c.b16 %v4937, %v4935
  %v5238 = vpack.c.b16 %v4940, %v4938
  %v5239 = vpack.c.b16 %v4941, %v4939
  %v5240 = vpack.c.b16 %v4944, %v4942
  %v5241 = vpack.c.b16 %v4945, %v4943
  %v5242 = vpack.c.b16 %v4948, %v4946
  %v5243 = vpack.c.b16 %v4949, %v4947
  %v5244 = vpack.c.b16 %v4952, %v4950
  %v5245 = vpack.c.b16 %v4953, %v4951
  %v5246 = vpack.c.b16 %v4956, %v4954
  %v5247 = vpack.c.b16 %v4957, %v4955
  %v5248 = vpack.c.b16 %v4960, %v4958
  %v5249 = vpack.c.b16 %v4961, %v4959
  %v5250 = vpack.c.b16 %v4964, %v4962
  %v5251 = vpack.c.b16 %v4965, %v4963
  %v5252 = vpack.c.b16 %v4968, %v4966
  %v5253 = vpack.c.b16 %v4969, %v4967
  %v5254 = vpack.c.b16 %v4972, %v4970
  %v5255 = vpack.c.b16 %v4973, %v4971
  %v5256 = vpack.c.b16 %v4976, %v4974
  %v5257 = vpack.c.b16 %v4977, %v4975
  %v5258 = vpack.c.b16 %v4980, %v4978
  %v5259 = vpack.c.b16 %v4981, %v4979
  %v5260 = vpack.c.b16 %v4984, %v4982
  %v5261 = vpack.c.b16 %v4985, %v4983
  %v5262 = vpack.c.b16 %v4988, %v4986
  %v5263 = vpack.c.b16 %v4989, %v4987
  %v5264 = vpack.c.b16 %v4992, %v4990
  %v5265 = vpack.c.b16 %v4993, %v4991
  %v5266 = vpack.c.b16 %v4996, %v4994
  %v5267 = vpack.c.b16 %v4997, %v4995
  %v5268 = vpack.c.b16 %v5000, %v4998
  %v5269 = vpack.c.b16 %v5001, %v4999
  %v5270 = vpack.c.b16 %v5004, %v5002
  %v5271 = vpack.c.b16 %v5005, %v5003
  %v5272 = vpack.c.b16 %v5008, %v5006
  %v5273 = vpack.c.b16 %v5009, %v5007
  %v5274 = vpack.c.b16 %v5012, %v5010
  %v5275 = vpack.c.b16 %v5013, %v5011
  %v5276 = vpack.c.b16 %v5016, %v5014
  %v5277 = vpack.c.b16 %v5017, %v5015
  %v5278 = vpack.c.b16 %v5020, %v5018
  %v5279 = vpack.c.b16 %v5021, %v5019
  %v5280 = vpack.c.b16 %v5024, %v5022
  %v5281 = vpack.c.b16 %v5025, %v5023
  %v5282 = vpack.c.b16 %v5028, %v5026
  %v5283 = vpack.c.b16 %v5029, %v5027
  %v5284 = vpack.c.b16 %v5032, %v5030
  %v5285 = vpack.c.b16 %v5033, %v5031
  %v5286 = vpack.c.b16 %v5036, %v5034
  %v5287 = vpack.c.b16 %v5037, %v5035
  %v5288 = vpack.c.b16 %v5040, %v5038
  %v5289 = vpack.c.b16 %v5041, %v5039
  %v5290 = vpack.c.b16 %v5044, %v5042
  %v5291 = vpack.c.b16 %v5045, %v5043
  %v5292 = vpack.c.b16 %v5048, %v5046
  %v5293 = vpack.c.b16 %v5049, %v5047
  %v5294 = vpack.c.b16 %v5052, %v5050
  %v5295 = vpack.c.b16 %v5053, %v5051
  %v5296 = vpack.c.b16 %v5056, %v5054
  %v5297 = vpack.c.b16 %v5057, %v5055
  %v5298 = vpack.c.b16 %v5060, %v5058
  %v5299 = vpack.c.b16 %v5061, %v5059
  %v5300 = vpack.c.b16 %v5064, %v5062
  %v5301 = vpack.c.b16 %v5065, %v5063
  %v5302 = vpack.c.b16 %v5068, %v5066
  %v5303 = vpack.c.b16 %v5069, %v5067
  %v5304 = vpack.c.b16 %v5072, %v5070
  %v5305 = vpack.c.b16 %v5073, %v5071
  %v5306 = vpack.c.b16 %v5076, %v5074
  %v5307 = vpack.c.b16 %v5077, %v5075
  %v5308 = vpack.c.b16 %v5080, %v5078
  %v5309 = vpack.c.b16 %v5081, %v5079
  %v5310 = vpack.c.b16 %v5084, %v5082
  %v5311 = vpack.c.b16 %v5085, %v5083
  %v5312 = vpack.c.b16 %v5088, %v5086
  %v5313 = vpack.c.b16 %v5089, %v5087
  %v5314 = vpack.c.b16 %v5092, %v5090
  %v5315 = vpack.c.b16 %v5093, %v5091
  %v5316 = vpack.c.b16 %v5096, %v5094
  %v5317 = vpack.c.b16 %v5097, %v5095
  %v5318 = vpack.c.b16 %v5100, %v5098
  %v5319 = vpack.c.b16 %v5101, %v5099
  %v5320 = vpack.c.b16 %v5104, %v5102
  %v5321 = vpack.c.b16 %v5105, %v5103
  %v5322 = vpack.c.b16 %v5108, %v5106
  %v5323 = vpack.c.b16 %v5109, %v5107
  %v5324 = vpack.c.b16 %v5112, %v5110
  %v5325 = vpack.c.b16 %v5113, %v5111
  %v5326 = vpack.c.b16 %v5116, %v5114
  %v5327 = vpack.c.b16 %v5117, %v5115
  %v5328 = vpack.c.b16 %v5120, %v5118
  %v5329 = vpack.c.b16 %v5121, %v5119
  %v5330 = vpack.c.b16 %v5124, %v5122
  %v5331 = vpack.c.b16 %v5125, %v5123
  %v5332 = vpack.c.b16 %v5128, %v5126
  %v5333 = vpack.c.b16 %v5129, %v5127
  %v5334 = vpack.c.b16 %v5132, %v5130
  %v5335 = vpack.c.b16 %v5133, %v5131
  %v5336 = vpack.c.b16 %v5136, %v5134
  %v5337 = vpack.c.b16 %v5137, %v5135
  %v5338 = vpack.c.b16 %v5140, %v5138
  %v5339 = vpack.c.b16 %v5141, %v5139
  %v5340 = vpack.c.b16 %v5144, %v5142
  %v5341 = vpack.c.b16 %v5145, %v5143
  %v5342 = vpack.c.b16 %v5148, %v5146
  %v5343 = vpack.c.b16 %v5149, %v5147
  %v5344 = vpack.c.b16 %v5152, %v5150
  %v5345 = vpack.c.b16 %v5153, %v5151
  %v5346 = vpack.c.b16 %v5156, %v5154
  %v5347 = vpack.c.b16 %v5157, %v5155
  %v5348 = vpack.c.b16 %v5160, %v5158
  %v5349 = vpack.c.b16 %v5161, %v5159
  %v5350 = vpack.c.b16 %v5164, %v5162
  %v5351 = vpack.c.b16 %v5165, %v5163
  %v5352 = vpack.c.b16 %v5168, %v5166
  %v5353 = vpack.c.b16 %v5169, %v5167
  %v5354 = vpack.c.b16 %v5172, %v5170
  %v5355 = vpack.c.b16 %v5173, %v5171
  %v5356 = vpack.c.b16 %v5176, %v5174
  %v5357 = vpack.c.b16 %v5177, %v5175
  %v5358 = vpack.c.b16 %v5180, %v5178
  %v5359 = vpack.c.b16 %v5181, %v5179
  %v5360 = vpack.c.b16 %v5184, %v5182
  %v5361 = vpack.c.b16 %v5185, %v5183
  %v5362 = vpack.c.b16 %v5188, %v5186
  %v5363 = vpack.c.b16 %v5189, %v5187
  %v5364 = vpack.c.b16 %v5192, %v5190
  %v5365 = vpack.c.b16 %v5193, %v5191
  %v5366 = vpack.c.b16 %v5196, %v5194
  %v5367 = vpack.c.b16 %v5197, %v5195
  %v5368 = vpack.c.b16 %v5200, %v5198
  %v5369 = vpack.c.b16 %v5201, %v5199
  %v5370 = vpack.c.b16 %v5204, %v5202
  %v5371 = vpack.c.b16 %v5205, %v5203
  %v5372 = vpack.c.b16 %v5208, %v5206
  %v5373 = vpack.c.b16 %v5209, %v5207
  %v5374 = vpack.c.b16 %v5212, %v5210
  %v5375 = vpack.c.b16 %v5213, %v5211
  %v5376 = vpack.c.b16 %v5216, %v5214
  %v5377 = vpack.c.b16 %v5217, %v5215
  %v5378 = vpack.c.b16 %v5220, %v5218
  %v5379 = vpack.c.b16 %v5221, %v5219
  %v5380 = vpack.c.b16 %v5224, %v5222
  %v5381 = vpack.c.b16 %v5225, %v5223
  %vm5460 = vcmask 654336
  %v5462 = vsel %vm5460, %v5227, 0
  %v5465 = vsel %vm5460, %v5229, 0
  %v5468 = vsel %vm5460, %v5231, 0
  %v5471 = vsel %vm5460, %v5233, 0
  %v5474 = vsel %vm5460, %v5235, 0
  %v5477 = vsel %vm5460, %v5237, 0
  %v5480 = vsel %vm5460, %v5239, 0
  %v5483 = vsel %vm5460, %v5241, 0
  %v5486 = vsel %vm5460, %v5243, 0
  %v5489 = vsel %vm5460, %v5245, 0
  %v5492 = vsel %vm5460, %v5247, 0
  %v5495 = vsel %vm5460, %v5249, 0
  %v5498 = vsel %vm5460, %v5251, 0
  %v5501 = vsel %vm5460, %v5253, 0
  %v5504 = vsel %vm5460, %v5255, 0
  %v5507 = vsel %vm5460, %v5257, 0
  %v5510 = vsel %vm5460, %v5259, 0
  %v5513 = vsel %vm5460, %v5261, 0
  %v5516 = vsel %vm5460, %v5263, 0
  %v5519 = vsel %vm5460, %v5265, 0
  %v5522 = vsel %vm5460, %v5267, 0
  %v5525 = vsel %vm5460, %v5269, 0
  %v5528 = vsel %vm5460, %v5271, 0
  %v5531 = vsel %vm5460, %v5273, 0
  %v5534 = vsel %vm5460, %v5275, 0
  %v5537 = vsel %vm5460, %v5277, 0
  %v5540 = vsel %vm5460, %v5279, 0
  %v5543 = vsel %vm5460, %v5281, 0
  %v5546 = vsel %vm5460, %v5283, 0
  %v5549 = vsel %vm5460, %v5285, 0
  %v5552 = vsel %vm5460, %v5287, 0
  %v5555 = vsel %vm5460, %v5289, 0
  %v5558 = vsel %vm5460, %v5291, 0
  %v5561 = vsel %vm5460, %v5293, 0
  %v5564 = vsel %vm5460, %v5295, 0
  %v5567 = vsel %vm5460, %v5297, 0
  %v5570 = vsel %vm5460, %v5299, 0
  %v5573 = vsel %vm5460, %v5301, 0
  %v5576 = vsel %vm5460, %v5303, 0
  %v5579 = vsel %vm5460, %v5305, 0
  %v5582 = vsel %vm5460, %v5307, 0
  %v5585 = vsel %vm5460, %v5309, 0
  %v5588 = vsel %vm5460, %v5311, 0
  %v5591 = vsel %vm5460, %v5313, 0
  %v5594 = vsel %vm5460, %v5315, 0
  %v5597 = vsel %vm5460, %v5317, 0
  %v5600 = vsel %vm5460, %v5319, 0
  %v5603 = vsel %vm5460, %v5321, 0
  %v5606 = vsel %vm5460, %v5323, 0
  %v5609 = vsel %vm5460, %v5325, 0
  %v5612 = vsel %vm5460, %v5327, 0
  %v5615 = vsel %vm5460, %v5329, 0
  %v5618 = vsel %vm5460, %v5331, 0
  %v5621 = vsel %vm5460, %v5333, 0
  %v5624 = vsel %vm5460, %v5335, 0
  %v5627 = vsel %vm5460, %v5337, 0
  %v5630 = vsel %vm5460, %v5339, 0
  %v5633 = vsel %vm5460, %v5341, 0
  %v5636 = vsel %vm5460, %v5343, 0
  %v5639 = vsel %vm5460, %v5345, 0
  %v5642 = vsel %vm5460, %v5347, 0
  %v5645 = vsel %vm5460, %v5349, 0
  %v5648 = vsel %vm5460, %v5351, 0
  %v5651 = vsel %vm5460, %v5353, 0
  %v5654 = vsel %vm5460, %v5355, 0
  %v5657 = vsel %vm5460, %v5357, 0
  %v5660 = vsel %vm5460, %v5359, 0
  %v5663 = vsel %vm5460, %v5361, 0
  %v5666 = vsel %vm5460, %v5363, 0
  %v5669 = vsel %vm5460, %v5365, 0
  %v5672 = vsel %vm5460, %v5367, 0
  %v5675 = vsel %vm5460, %v5369, 0
  %v5678 = vsel %vm5460, %v5371, 0
  %v5681 = vsel %vm5460, %v5373, 0
  %v5684 = vsel %vm5460, %v5375, 0
  %v5687 = vsel %vm5460, %v5377, 0
  %v5690 = vsel %vm5460, %v5379, 0
  %v5693 = vsel %vm5460, %v5381, 0
  %5695 = vmatprep.subr.bf16.mxu0 0
  %5696 = vmatpush1.bf16.msra.mxu0 %v4745
  %5697 = vmatprep.subr.bf16.mxu0 0
  %5698 = vmatpush1.bf16.msra.mxu0 %v4746
  %5699 = vmatprep.subr.bf16.mxu0 0
  %5700 = vmatpush1.bf16.msra.mxu0 %v4747
  %5701 = vmatprep.subr.bf16.mxu0 0
  %5702 = vmatpush1.bf16.msra.mxu0 %v4748
  %5703 = vmatprep.subr.bf16.mxu0 0
  %5704 = vmatpush1.bf16.msra.mxu0 %v4749
  %5705 = vmatprep.subr.bf16.mxu0 0
  %5706 = vmatpush1.bf16.msra.mxu0 %v4750
  %5707 = vmatprep.subr.bf16.mxu0 0
  %5708 = vmatpush1.bf16.msra.mxu0 %v4751
  %5709 = vmatprep.subr.bf16.mxu0 0
  %5710 = vmatpush1.bf16.msra.mxu0 %v4752
  %5711 = vmatprep.subr.bf16.mxu0 0
  %5712 = vmatpush1.bf16.msra.mxu0 %v4753
  %5713 = vmatprep.subr.bf16.mxu0 0
  %5714 = vmatpush1.bf16.msra.mxu0 %v4754
  %5715 = vmatprep.subr.bf16.mxu0 0
  %5716 = vmatpush1.bf16.msra.mxu0 %v4755
  %5717 = vmatprep.subr.bf16.mxu0 0
  %5718 = vmatpush1.bf16.msra.mxu0 %v4756
  %5719 = vmatprep.subr.bf16.mxu0 0
  %5720 = vmatpush1.bf16.msra.mxu0 %v4757
  %5721 = vmatprep.subr.bf16.mxu0 0
  %5722 = vmatpush1.bf16.msra.mxu0 0
  %5723 = vmatprep.subr.bf16.mxu0 0
  %5724 = vmatpush1.bf16.msra.mxu0 0
  %5725 = vmatprep.subr.bf16.mxu0 0
  %5726 = vmatpush1.bf16.msra.mxu0 0
  %5727 = vmatprep.mubr.bf16.mxu0 %v5462
  %5728 = vmatmul.mubr.bf16.gmra.mrb[0].mxu0 %v5226
  %v5729 = vpop.f32.mrb[0].mxu0
  %v5730 = vadd.f32 0.0, %v5729
  %v5731 = vpop.f32.mrb[0].mxu0
  %v5732 = vpop.f32.mrb[0].mxu0
  %v5733 = vadd.f32 0.0, %v5732
  %v5734 = vpop.f32.mrb[0].mxu0
  %5735 = vmatprep.mubr.bf16.mxu0 %v5465
  %5736 = vmatmul.mubr.bf16.gmra.mrb[0].mxu0 %v5228
  %v5737 = vpop.f32.mrb[0].mxu0
  %v5738 = vadd.f32 0.0, %v5737
  %v5739 = vpop.f32.mrb[0].mxu0
  %v5740 = vpop.f32.mrb[0].mxu0
  %v5741 = vadd.f32 0.0, %v5740
  %v5742 = vpop.f32.mrb[0].mxu0
  %5743 = vmatprep.mubr.bf16.mxu0 %v5468
  %5744 = vmatmul.mubr.bf16.gmra.mrb[0].mxu0 %v5230
  %v5745 = vpop.f32.mrb[0].mxu0
  %v5746 = vadd.f32 0.0, %v5745
  %v5747 = vpop.f32.mrb[0].mxu0
  %v5748 = vpop.f32.mrb[0].mxu0
  %v5749 = vadd.f32 0.0, %v5748
  %v5750 = vpop.f32.mrb[0].mxu0
  %5751 = vmatprep.mubr.bf16.mxu0 %v5471
  %5752 = vmatmul.mubr.bf16.gmra.mrb[0].mxu0 %v5232
  %v5753 = vpop.f32.mrb[0].mxu0
  %v5754 = vadd.f32 0.0, %v5753
  %v5755 = vpop.f32.mrb[0].mxu0
  %v5756 = vpop.f32.mrb[0].mxu0
  %v5757 = vadd.f32 0.0, %v5756
  %v5758 = vpop.f32.mrb[0].mxu0
  %5759 = vmatprep.mubr.bf16.mxu0 %v5474
  %5760 = vmatmul.mubr.bf16.gmra.mrb[0].mxu0 %v5234
  %v5761 = vpop.f32.mrb[0].mxu0
  %v5762 = vadd.f32 0.0, %v5761
  %v5763 = vpop.f32.mrb[0].mxu0
  %v5764 = vpop.f32.mrb[0].mxu0
  %v5765 = vadd.f32 0.0, %v5764
  %v5766 = vpop.f32.mrb[0].mxu0
  %5767 = vmatprep.mubr.bf16.mxu0 %v5477
  %5768 = vmatmul.mubr.bf16.gmra.mrb[0].mxu0 %v5236
  %v5769 = vpop.f32.mrb[0].mxu0
  %v5770 = vadd.f32 0.0, %v5769
  %v5771 = vpop.f32.mrb[0].mxu0
  %v5772 = vpop.f32.mrb[0].mxu0
  %v5773 = vadd.f32 0.0, %v5772
  %v5774 = vpop.f32.mrb[0].mxu0
  %5775 = vmatprep.mubr.bf16.mxu0 %v5480
  %5776 = vmatmul.mubr.bf16.gmra.mrb[0].mxu0 %v5238
  %v5777 = vpop.f32.mrb[0].mxu0
  %v5778 = vadd.f32 0.0, %v5777
  %v5779 = vpop.f32.mrb[0].mxu0
  %v5780 = vpop.f32.mrb[0].mxu0
  %v5781 = vadd.f32 0.0, %v5780
  %v5782 = vpop.f32.mrb[0].mxu0
  %5783 = vmatprep.mubr.bf16.mxu0 %v5483
  %5784 = vmatmul.mubr.bf16.gmra.mrb[0].mxu0 %v5240
  %v5785 = vpop.f32.mrb[0].mxu0
  %v5786 = vadd.f32 0.0, %v5785
  %v5787 = vpop.f32.mrb[0].mxu0
  %v5788 = vpop.f32.mrb[0].mxu0
  %v5789 = vadd.f32 0.0, %v5788
  %v5790 = vpop.f32.mrb[0].mxu0
  %5791 = vmatprep.mubr.bf16.mxu0 %v5486
  %5792 = vmatmul.mubr.bf16.gmra.mrb[0].mxu0 %v5242
  %v5793 = vpop.f32.mrb[0].mxu0
  %v5794 = vadd.f32 0.0, %v5793
  %v5795 = vpop.f32.mrb[0].mxu0
  %v5796 = vpop.f32.mrb[0].mxu0
  %v5797 = vadd.f32 0.0, %v5796
  %v5798 = vpop.f32.mrb[0].mxu0
  %5799 = vmatprep.mubr.bf16.mxu0 %v5489
  %5800 = vmatmul.mubr.bf16.gmra.mrb[0].mxu0 %v5244
  %v5801 = vpop.f32.mrb[0].mxu0
  %v5802 = vadd.f32 0.0, %v5801
  %v5803 = vpop.f32.mrb[0].mxu0
  %v5804 = vpop.f32.mrb[0].mxu0
  %v5805 = vadd.f32 0.0, %v5804
  %v5806 = vpop.f32.mrb[0].mxu0
  %5807 = vmatprep.mubr.bf16.mxu0 %v5492
  %5808 = vmatmul.mubr.bf16.gmra.mrb[0].mxu0 %v5246
  %v5809 = vpop.f32.mrb[0].mxu0
  %v5810 = vadd.f32 0.0, %v5809
  %v5811 = vpop.f32.mrb[0].mxu0
  %v5812 = vpop.f32.mrb[0].mxu0
  %v5813 = vadd.f32 0.0, %v5812
  %v5814 = vpop.f32.mrb[0].mxu0
  %5815 = vmatprep.mubr.bf16.mxu0 %v5495
  %5816 = vmatmul.mubr.bf16.gmra.mrb[0].mxu0 %v5248
  %v5817 = vpop.f32.mrb[0].mxu0
  %v5818 = vadd.f32 0.0, %v5817
  %v5819 = vpop.f32.mrb[0].mxu0
  %v5820 = vpop.f32.mrb[0].mxu0
  %v5821 = vadd.f32 0.0, %v5820
  %v5822 = vpop.f32.mrb[0].mxu0
  %5823 = vmatprep.mubr.bf16.mxu0 %v5498
  %5824 = vmatmul.mubr.bf16.gmra.mrb[0].mxu0 %v5250
  %v5825 = vpop.f32.mrb[0].mxu0
  %v5826 = vadd.f32 0.0, %v5825
  %v5827 = vpop.f32.mrb[0].mxu0
  %v5828 = vpop.f32.mrb[0].mxu0
  %v5829 = vadd.f32 0.0, %v5828
  %v5830 = vpop.f32.mrb[0].mxu0
  %5831 = vmatprep.mubr.bf16.mxu0 %v5501
  %5832 = vmatmul.mubr.bf16.gmra.mrb[0].mxu0 %v5252
  %v5833 = vpop.f32.mrb[0].mxu0
  %v5834 = vadd.f32 0.0, %v5833
  %v5835 = vpop.f32.mrb[0].mxu0
  %v5836 = vpop.f32.mrb[0].mxu0
  %v5837 = vadd.f32 0.0, %v5836
  %v5838 = vpop.f32.mrb[0].mxu0
  %5839 = vmatprep.mubr.bf16.mxu0 %v5504
  %5840 = vmatmul.mubr.bf16.gmra.mrb[0].mxu0 %v5254
  %v5841 = vpop.f32.mrb[0].mxu0
  %v5842 = vadd.f32 0.0, %v5841
  %v5843 = vpop.f32.mrb[0].mxu0
  %v5844 = vpop.f32.mrb[0].mxu0
  %v5845 = vadd.f32 0.0, %v5844
  %v5846 = vpop.f32.mrb[0].mxu0
  %5847 = vmatprep.mubr.bf16.mxu0 %v5507
  %5848 = vmatmul.mubr.bf16.gmra.mrb[0].mxu0 %v5256
  %v5849 = vpop.f32.mrb[0].mxu0
  %v5850 = vadd.f32 0.0, %v5849
  %v5851 = vpop.f32.mrb[0].mxu0
  %v5852 = vpop.f32.mrb[0].mxu0
  %v5853 = vadd.f32 0.0, %v5852
  %v5854 = vpop.f32.mrb[0].mxu0
  %5855 = vmatprep.mubr.bf16.mxu0 %v5510
  %5856 = vmatmul.mubr.bf16.gmra.mrb[0].mxu0 %v5258
  %v5857 = vpop.f32.mrb[0].mxu0
  %v5858 = vadd.f32 0.0, %v5857
  %v5859 = vpop.f32.mrb[0].mxu0
  %v5860 = vpop.f32.mrb[0].mxu0
  %v5861 = vadd.f32 0.0, %v5860
  %v5862 = vpop.f32.mrb[0].mxu0
  %5863 = vmatprep.mubr.bf16.mxu0 %v5513
  %5864 = vmatmul.mubr.bf16.gmra.mrb[0].mxu0 %v5260
  %v5865 = vpop.f32.mrb[0].mxu0
  %v5866 = vadd.f32 0.0, %v5865
  %v5867 = vpop.f32.mrb[0].mxu0
  %v5868 = vpop.f32.mrb[0].mxu0
  %v5869 = vadd.f32 0.0, %v5868
  %v5870 = vpop.f32.mrb[0].mxu0
  %5871 = vmatprep.mubr.bf16.mxu0 %v5516
  %5872 = vmatmul.mubr.bf16.gmra.mrb[0].mxu0 %v5262
  %v5873 = vpop.f32.mrb[0].mxu0
  %v5874 = vadd.f32 0.0, %v5873
  %v5875 = vpop.f32.mrb[0].mxu0
  %v5876 = vpop.f32.mrb[0].mxu0
  %v5877 = vadd.f32 0.0, %v5876
  %v5878 = vpop.f32.mrb[0].mxu0
  %5879 = vmatprep.mubr.bf16.mxu0 %v5519
  %5880 = vmatmul.mubr.bf16.gmra.mrb[0].mxu0 %v5264
  %v5881 = vpop.f32.mrb[0].mxu0
  %v5882 = vadd.f32 0.0, %v5881
  %v5883 = vpop.f32.mrb[0].mxu0
  %v5884 = vpop.f32.mrb[0].mxu0
  %v5885 = vadd.f32 0.0, %v5884
  %v5886 = vpop.f32.mrb[0].mxu0
  %5887 = vmatprep.mubr.bf16.mxu0 %v5522
  %5888 = vmatmul.mubr.bf16.gmra.mrb[0].mxu0 %v5266
  %v5889 = vpop.f32.mrb[0].mxu0
  %v5890 = vadd.f32 0.0, %v5889
  %v5891 = vpop.f32.mrb[0].mxu0
  %v5892 = vpop.f32.mrb[0].mxu0
  %v5893 = vadd.f32 0.0, %v5892
  %v5894 = vpop.f32.mrb[0].mxu0
  %5895 = vmatprep.mubr.bf16.mxu0 %v5525
  %5896 = vmatmul.mubr.bf16.gmra.mrb[0].mxu0 %v5268
  %v5897 = vpop.f32.mrb[0].mxu0
  %v5898 = vadd.f32 0.0, %v5897
  %v5899 = vpop.f32.mrb[0].mxu0
  %v5900 = vpop.f32.mrb[0].mxu0
  %v5901 = vadd.f32 0.0, %v5900
  %v5902 = vpop.f32.mrb[0].mxu0
  %5903 = vmatprep.mubr.bf16.mxu0 %v5528
  %5904 = vmatmul.mubr.bf16.gmra.mrb[0].mxu0 %v5270
  %v5905 = vpop.f32.mrb[0].mxu0
  %v5906 = vadd.f32 0.0, %v5905
  %v5907 = vpop.f32.mrb[0].mxu0
  %v5908 = vpop.f32.mrb[0].mxu0
  %v5909 = vadd.f32 0.0, %v5908
  %v5910 = vpop.f32.mrb[0].mxu0
  %5911 = vmatprep.mubr.bf16.mxu0 %v5531
  %5912 = vmatmul.mubr.bf16.gmra.mrb[0].mxu0 %v5272
  %v5913 = vpop.f32.mrb[0].mxu0
  %v5914 = vadd.f32 0.0, %v5913
  %v5915 = vpop.f32.mrb[0].mxu0
  %v5916 = vpop.f32.mrb[0].mxu0
  %v5917 = vadd.f32 0.0, %v5916
  %v5918 = vpop.f32.mrb[0].mxu0
  %5919 = vmatprep.mubr.bf16.mxu0 %v5534
  %5920 = vmatmul.mubr.bf16.gmra.mrb[0].mxu0 %v5274
  %v5921 = vpop.f32.mrb[0].mxu0
  %v5922 = vadd.f32 0.0, %v5921
  %v5923 = vpop.f32.mrb[0].mxu0
  %v5924 = vpop.f32.mrb[0].mxu0
  %v5925 = vadd.f32 0.0, %v5924
  %v5926 = vpop.f32.mrb[0].mxu0
  %5927 = vmatprep.mubr.bf16.mxu0 %v5537
  %5928 = vmatmul.mubr.bf16.gmra.mrb[0].mxu0 %v5276
  %v5929 = vpop.f32.mrb[0].mxu0
  %v5930 = vadd.f32 0.0, %v5929
  %v5931 = vpop.f32.mrb[0].mxu0
  %v5932 = vpop.f32.mrb[0].mxu0
  %v5933 = vadd.f32 0.0, %v5932
  %v5934 = vpop.f32.mrb[0].mxu0
  %5935 = vmatprep.mubr.bf16.mxu0 %v5540
  %5936 = vmatmul.mubr.bf16.gmra.mrb[0].mxu0 %v5278
  %v5937 = vpop.f32.mrb[0].mxu0
  %v5938 = vadd.f32 0.0, %v5937
  %v5939 = vpop.f32.mrb[0].mxu0
  %v5940 = vpop.f32.mrb[0].mxu0
  %v5941 = vadd.f32 0.0, %v5940
  %v5942 = vpop.f32.mrb[0].mxu0
  %5943 = vmatprep.mubr.bf16.mxu0 %v5543
  %5944 = vmatmul.mubr.bf16.gmra.mrb[0].mxu0 %v5280
  %v5945 = vpop.f32.mrb[0].mxu0
  %v5946 = vadd.f32 0.0, %v5945
  %v5947 = vpop.f32.mrb[0].mxu0
  %v5948 = vpop.f32.mrb[0].mxu0
  %v5949 = vadd.f32 0.0, %v5948
  %v5950 = vpop.f32.mrb[0].mxu0
  %5951 = vmatprep.mubr.bf16.mxu0 %v5546
  %5952 = vmatmul.mubr.bf16.gmra.mrb[0].mxu0 %v5282
  %v5953 = vpop.f32.mrb[0].mxu0
  %v5954 = vadd.f32 0.0, %v5953
  %v5955 = vpop.f32.mrb[0].mxu0
  %v5956 = vpop.f32.mrb[0].mxu0
  %v5957 = vadd.f32 0.0, %v5956
  %v5958 = vpop.f32.mrb[0].mxu0
  %5959 = vmatprep.mubr.bf16.mxu0 %v5549
  %5960 = vmatmul.mubr.bf16.gmra.mrb[0].mxu0 %v5284
  %v5961 = vpop.f32.mrb[0].mxu0
  %v5962 = vadd.f32 0.0, %v5961
  %v5963 = vpop.f32.mrb[0].mxu0
  %v5964 = vpop.f32.mrb[0].mxu0
  %v5965 = vadd.f32 0.0, %v5964
  %v5966 = vpop.f32.mrb[0].mxu0
  %5967 = vmatprep.mubr.bf16.mxu0 %v5552
  %5968 = vmatmul.mubr.bf16.gmra.mrb[0].mxu0 %v5286
  %v5969 = vpop.f32.mrb[0].mxu0
  %v5970 = vadd.f32 0.0, %v5969
  %v5971 = vpop.f32.mrb[0].mxu0
  %v5972 = vpop.f32.mrb[0].mxu0
  %v5973 = vadd.f32 0.0, %v5972
  %v5974 = vpop.f32.mrb[0].mxu0
  %5975 = vmatprep.mubr.bf16.mxu0 %v5555
  %5976 = vmatmul.mubr.bf16.gmra.mrb[0].mxu0 %v5288
  %v5977 = vpop.f32.mrb[0].mxu0
  %v5978 = vadd.f32 0.0, %v5977
  %v5979 = vpop.f32.mrb[0].mxu0
  %v5980 = vpop.f32.mrb[0].mxu0
  %v5981 = vadd.f32 0.0, %v5980
  %v5982 = vpop.f32.mrb[0].mxu0
  %5983 = vmatprep.mubr.bf16.mxu0 %v5558
  %5984 = vmatmul.mubr.bf16.gmra.mrb[0].mxu0 %v5290
  %v5985 = vpop.f32.mrb[0].mxu0
  %v5986 = vadd.f32 0.0, %v5985
  %v5987 = vpop.f32.mrb[0].mxu0
  %v5988 = vpop.f32.mrb[0].mxu0
  %v5989 = vadd.f32 0.0, %v5988
  %v5990 = vpop.f32.mrb[0].mxu0
  %5991 = vmatprep.mubr.bf16.mxu0 %v5561
  %5992 = vmatmul.mubr.bf16.gmra.mrb[0].mxu0 %v5292
  %v5993 = vpop.f32.mrb[0].mxu0
  %v5994 = vadd.f32 0.0, %v5993
  %v5995 = vpop.f32.mrb[0].mxu0
  %v5996 = vpop.f32.mrb[0].mxu0
  %v5997 = vadd.f32 0.0, %v5996
  %v5998 = vpop.f32.mrb[0].mxu0
  %5999 = vmatprep.mubr.bf16.mxu0 %v5564
  %6000 = vmatmul.mubr.bf16.gmra.mrb[0].mxu0 %v5294
  %v6001 = vpop.f32.mrb[0].mxu0
  %v6002 = vadd.f32 0.0, %v6001
  %v6003 = vpop.f32.mrb[0].mxu0
  %v6004 = vpop.f32.mrb[0].mxu0
  %v6005 = vadd.f32 0.0, %v6004
  %v6006 = vpop.f32.mrb[0].mxu0
  %6007 = vmatprep.mubr.bf16.mxu0 %v5567
  %6008 = vmatmul.mubr.bf16.gmra.mrb[0].mxu0 %v5296
  %v6009 = vpop.f32.mrb[0].mxu0
  %v6010 = vadd.f32 0.0, %v6009
  %v6011 = vpop.f32.mrb[0].mxu0
  %v6012 = vpop.f32.mrb[0].mxu0
  %v6013 = vadd.f32 0.0, %v6012
  %v6014 = vpop.f32.mrb[0].mxu0
  %6015 = vmatprep.mubr.bf16.mxu0 %v5570
  %6016 = vmatmul.mubr.bf16.gmra.mrb[0].mxu0 %v5298
  %v6017 = vpop.f32.mrb[0].mxu0
  %v6018 = vadd.f32 0.0, %v6017
  %v6019 = vpop.f32.mrb[0].mxu0
  %v6020 = vpop.f32.mrb[0].mxu0
  %v6021 = vadd.f32 0.0, %v6020
  %v6022 = vpop.f32.mrb[0].mxu0
  %6023 = vmatprep.mubr.bf16.mxu0 %v5573
  %6024 = vmatmul.mubr.bf16.gmra.mrb[0].mxu0 %v5300
  %v6025 = vpop.f32.mrb[0].mxu0
  %v6026 = vadd.f32 0.0, %v6025
  %v6027 = vpop.f32.mrb[0].mxu0
  %v6028 = vpop.f32.mrb[0].mxu0
  %v6029 = vadd.f32 0.0, %v6028
  %v6030 = vpop.f32.mrb[0].mxu0
  %6031 = vmatprep.mubr.bf16.mxu0 %v5576
  %6032 = vmatmul.mubr.bf16.gmra.mrb[0].mxu0 %v5302
  %v6033 = vpop.f32.mrb[0].mxu0
  %v6034 = vadd.f32 0.0, %v6033
  %v6035 = vpop.f32.mrb[0].mxu0
  %v6036 = vpop.f32.mrb[0].mxu0
  %v6037 = vadd.f32 0.0, %v6036
  %v6038 = vpop.f32.mrb[0].mxu0
  %6039 = vmatprep.mubr.bf16.mxu0 %v5579
  %6040 = vmatmul.mubr.bf16.gmra.mrb[0].mxu0 %v5304
  %v6041 = vpop.f32.mrb[0].mxu0
  %v6042 = vadd.f32 0.0, %v6041
  %v6043 = vpop.f32.mrb[0].mxu0
  %v6044 = vpop.f32.mrb[0].mxu0
  %v6045 = vadd.f32 0.0, %v6044
  %v6046 = vpop.f32.mrb[0].mxu0
  %6047 = vmatprep.mubr.bf16.mxu0 %v5582
  %6048 = vmatmul.mubr.bf16.gmra.mrb[0].mxu0 %v5306
  %v6049 = vpop.f32.mrb[0].mxu0
  %v6050 = vadd.f32 0.0, %v6049
  %v6051 = vpop.f32.mrb[0].mxu0
  %v6052 = vpop.f32.mrb[0].mxu0
  %v6053 = vadd.f32 0.0, %v6052
  %v6054 = vpop.f32.mrb[0].mxu0
  %6055 = vmatprep.mubr.bf16.mxu0 %v5585
  %6056 = vmatmul.mubr.bf16.gmra.mrb[0].mxu0 %v5308
  %v6057 = vpop.f32.mrb[0].mxu0
  %v6058 = vadd.f32 0.0, %v6057
  %v6059 = vpop.f32.mrb[0].mxu0
  %v6060 = vpop.f32.mrb[0].mxu0
  %v6061 = vadd.f32 0.0, %v6060
  %v6062 = vpop.f32.mrb[0].mxu0
  %6063 = vmatprep.mubr.bf16.mxu0 %v5588
  %6064 = vmatmul.mubr.bf16.gmra.mrb[0].mxu0 %v5310
  %v6065 = vpop.f32.mrb[0].mxu0
  %v6066 = vadd.f32 0.0, %v6065
  %v6067 = vpop.f32.mrb[0].mxu0
  %v6068 = vpop.f32.mrb[0].mxu0
  %v6069 = vadd.f32 0.0, %v6068
  %v6070 = vpop.f32.mrb[0].mxu0
  %6071 = vmatprep.mubr.bf16.mxu0 %v5591
  %6072 = vmatmul.mubr.bf16.gmra.mrb[0].mxu0 %v5312
  %v6073 = vpop.f32.mrb[0].mxu0
  %v6074 = vadd.f32 0.0, %v6073
  %v6075 = vpop.f32.mrb[0].mxu0
  %v6076 = vpop.f32.mrb[0].mxu0
  %v6077 = vadd.f32 0.0, %v6076
  %v6078 = vpop.f32.mrb[0].mxu0
  %6079 = vmatprep.mubr.bf16.mxu0 %v5594
  %6080 = vmatmul.mubr.bf16.gmra.mrb[0].mxu0 %v5314
  %v6081 = vpop.f32.mrb[0].mxu0
  %v6082 = vadd.f32 0.0, %v6081
  %v6083 = vpop.f32.mrb[0].mxu0
  %v6084 = vpop.f32.mrb[0].mxu0
  %v6085 = vadd.f32 0.0, %v6084
  %v6086 = vpop.f32.mrb[0].mxu0
  %6087 = vmatprep.mubr.bf16.mxu0 %v5597
  %6088 = vmatmul.mubr.bf16.gmra.mrb[0].mxu0 %v5316
  %v6089 = vpop.f32.mrb[0].mxu0
  %v6090 = vadd.f32 0.0, %v6089
  %v6091 = vpop.f32.mrb[0].mxu0
  %v6092 = vpop.f32.mrb[0].mxu0
  %v6093 = vadd.f32 0.0, %v6092
  %v6094 = vpop.f32.mrb[0].mxu0
  %6095 = vmatprep.mubr.bf16.mxu0 %v5600
  %6096 = vmatmul.mubr.bf16.gmra.mrb[0].mxu0 %v5318
  %v6097 = vpop.f32.mrb[0].mxu0
  %v6098 = vadd.f32 0.0, %v6097
  %v6099 = vpop.f32.mrb[0].mxu0
  %v6100 = vpop.f32.mrb[0].mxu0
  %v6101 = vadd.f32 0.0, %v6100
  %v6102 = vpop.f32.mrb[0].mxu0
  %6103 = vmatprep.mubr.bf16.mxu0 %v5603
  %6104 = vmatmul.mubr.bf16.gmra.mrb[0].mxu0 %v5320
  %v6105 = vpop.f32.mrb[0].mxu0
  %v6106 = vadd.f32 0.0, %v6105
  %v6107 = vpop.f32.mrb[0].mxu0
  %v6108 = vpop.f32.mrb[0].mxu0
  %v6109 = vadd.f32 0.0, %v6108
  %v6110 = vpop.f32.mrb[0].mxu0
  %6111 = vmatprep.mubr.bf16.mxu0 %v5606
  %6112 = vmatmul.mubr.bf16.gmra.mrb[0].mxu0 %v5322
  %v6113 = vpop.f32.mrb[0].mxu0
  %v6114 = vadd.f32 0.0, %v6113
  %v6115 = vpop.f32.mrb[0].mxu0
  %v6116 = vpop.f32.mrb[0].mxu0
  %v6117 = vadd.f32 0.0, %v6116
  %v6118 = vpop.f32.mrb[0].mxu0
  %6119 = vmatprep.mubr.bf16.mxu0 %v5609
  %6120 = vmatmul.mubr.bf16.gmra.mrb[0].mxu0 %v5324
  %v6121 = vpop.f32.mrb[0].mxu0
  %v6122 = vadd.f32 0.0, %v6121
  %v6123 = vpop.f32.mrb[0].mxu0
  %v6124 = vpop.f32.mrb[0].mxu0
  %v6125 = vadd.f32 0.0, %v6124
  %v6126 = vpop.f32.mrb[0].mxu0
  %6127 = vmatprep.mubr.bf16.mxu0 %v5612
  %6128 = vmatmul.mubr.bf16.gmra.mrb[0].mxu0 %v5326
  %v6129 = vpop.f32.mrb[0].mxu0
  %v6130 = vadd.f32 0.0, %v6129
  %v6131 = vpop.f32.mrb[0].mxu0
  %v6132 = vpop.f32.mrb[0].mxu0
  %v6133 = vadd.f32 0.0, %v6132
  %v6134 = vpop.f32.mrb[0].mxu0
  %6135 = vmatprep.mubr.bf16.mxu0 %v5615
  %6136 = vmatmul.mubr.bf16.gmra.mrb[0].mxu0 %v5328
  %v6137 = vpop.f32.mrb[0].mxu0
  %v6138 = vadd.f32 0.0, %v6137
  %v6139 = vpop.f32.mrb[0].mxu0
  %v6140 = vpop.f32.mrb[0].mxu0
  %v6141 = vadd.f32 0.0, %v6140
  %v6142 = vpop.f32.mrb[0].mxu0
  %6143 = vmatprep.mubr.bf16.mxu0 %v5618
  %6144 = vmatmul.mubr.bf16.gmra.mrb[0].mxu0 %v5330
  %v6145 = vpop.f32.mrb[0].mxu0
  %v6146 = vadd.f32 0.0, %v6145
  %v6147 = vpop.f32.mrb[0].mxu0
  %v6148 = vpop.f32.mrb[0].mxu0
  %v6149 = vadd.f32 0.0, %v6148
  %v6150 = vpop.f32.mrb[0].mxu0
  %6151 = vmatprep.mubr.bf16.mxu0 %v5621
  %6152 = vmatmul.mubr.bf16.gmra.mrb[0].mxu0 %v5332
  %v6153 = vpop.f32.mrb[0].mxu0
  %v6154 = vadd.f32 0.0, %v6153
  %v6155 = vpop.f32.mrb[0].mxu0
  %v6156 = vpop.f32.mrb[0].mxu0
  %v6157 = vadd.f32 0.0, %v6156
  %v6158 = vpop.f32.mrb[0].mxu0
  %6159 = vmatprep.mubr.bf16.mxu0 %v5624
  %6160 = vmatmul.mubr.bf16.gmra.mrb[0].mxu0 %v5334
  %v6161 = vpop.f32.mrb[0].mxu0
  %v6162 = vadd.f32 0.0, %v6161
  %v6163 = vpop.f32.mrb[0].mxu0
  %v6164 = vpop.f32.mrb[0].mxu0
  %v6165 = vadd.f32 0.0, %v6164
  %v6166 = vpop.f32.mrb[0].mxu0
  %6167 = vmatprep.mubr.bf16.mxu0 %v5627
  %6168 = vmatmul.mubr.bf16.gmra.mrb[0].mxu0 %v5336
  %v6169 = vpop.f32.mrb[0].mxu0
  %v6170 = vadd.f32 0.0, %v6169
  %v6171 = vpop.f32.mrb[0].mxu0
  %v6172 = vpop.f32.mrb[0].mxu0
  %v6173 = vadd.f32 0.0, %v6172
  %v6174 = vpop.f32.mrb[0].mxu0
  %6175 = vmatprep.mubr.bf16.mxu0 %v5630
  %6176 = vmatmul.mubr.bf16.gmra.mrb[0].mxu0 %v5338
  %v6177 = vpop.f32.mrb[0].mxu0
  %v6178 = vadd.f32 0.0, %v6177
  %v6179 = vpop.f32.mrb[0].mxu0
  %v6180 = vpop.f32.mrb[0].mxu0
  %v6181 = vadd.f32 0.0, %v6180
  %v6182 = vpop.f32.mrb[0].mxu0
  %6183 = vmatprep.mubr.bf16.mxu0 %v5633
  %6184 = vmatmul.mubr.bf16.gmra.mrb[0].mxu0 %v5340
  %v6185 = vpop.f32.mrb[0].mxu0
  %v6186 = vadd.f32 0.0, %v6185
  %v6187 = vpop.f32.mrb[0].mxu0
  %v6188 = vpop.f32.mrb[0].mxu0
  %v6189 = vadd.f32 0.0, %v6188
  %v6190 = vpop.f32.mrb[0].mxu0
  %6191 = vmatprep.mubr.bf16.mxu0 %v5636
  %6192 = vmatmul.mubr.bf16.gmra.mrb[0].mxu0 %v5342
  %v6193 = vpop.f32.mrb[0].mxu0
  %v6194 = vadd.f32 0.0, %v6193
  %v6195 = vpop.f32.mrb[0].mxu0
  %v6196 = vpop.f32.mrb[0].mxu0
  %v6197 = vadd.f32 0.0, %v6196
  %v6198 = vpop.f32.mrb[0].mxu0
  %6199 = vmatprep.mubr.bf16.mxu0 %v5639
  %6200 = vmatmul.mubr.bf16.gmra.mrb[0].mxu0 %v5344
  %v6201 = vpop.f32.mrb[0].mxu0
  %v6202 = vadd.f32 0.0, %v6201
  %v6203 = vpop.f32.mrb[0].mxu0
  %v6204 = vpop.f32.mrb[0].mxu0
  %v6205 = vadd.f32 0.0, %v6204
  %v6206 = vpop.f32.mrb[0].mxu0
  %6207 = vmatprep.mubr.bf16.mxu0 %v5642
  %6208 = vmatmul.mubr.bf16.gmra.mrb[0].mxu0 %v5346
  %v6209 = vpop.f32.mrb[0].mxu0
  %v6210 = vadd.f32 0.0, %v6209
  %v6211 = vpop.f32.mrb[0].mxu0
  %v6212 = vpop.f32.mrb[0].mxu0
  %v6213 = vadd.f32 0.0, %v6212
  %v6214 = vpop.f32.mrb[0].mxu0
  %6215 = vmatprep.mubr.bf16.mxu0 %v5645
  %6216 = vmatmul.mubr.bf16.gmra.mrb[0].mxu0 %v5348
  %v6217 = vpop.f32.mrb[0].mxu0
  %v6218 = vadd.f32 0.0, %v6217
  %v6219 = vpop.f32.mrb[0].mxu0
  %v6220 = vpop.f32.mrb[0].mxu0
  %v6221 = vadd.f32 0.0, %v6220
  %v6222 = vpop.f32.mrb[0].mxu0
  %6223 = vmatprep.mubr.bf16.mxu0 %v5648
  %6224 = vmatmul.mubr.bf16.gmra.mrb[0].mxu0 %v5350
  %v6225 = vpop.f32.mrb[0].mxu0
  %v6226 = vadd.f32 0.0, %v6225
  %v6227 = vpop.f32.mrb[0].mxu0
  %v6228 = vpop.f32.mrb[0].mxu0
  %v6229 = vadd.f32 0.0, %v6228
  %v6230 = vpop.f32.mrb[0].mxu0
  %6231 = vmatprep.mubr.bf16.mxu0 %v5651
  %6232 = vmatmul.mubr.bf16.gmra.mrb[0].mxu0 %v5352
  %v6233 = vpop.f32.mrb[0].mxu0
  %v6234 = vadd.f32 0.0, %v6233
  %v6235 = vpop.f32.mrb[0].mxu0
  %v6236 = vpop.f32.mrb[0].mxu0
  %v6237 = vadd.f32 0.0, %v6236
  %v6238 = vpop.f32.mrb[0].mxu0
  %6239 = vmatprep.mubr.bf16.mxu0 %v5654
  %6240 = vmatmul.mubr.bf16.gmra.mrb[0].mxu0 %v5354
  %v6241 = vpop.f32.mrb[0].mxu0
  %v6242 = vadd.f32 0.0, %v6241
  %v6243 = vpop.f32.mrb[0].mxu0
  %v6244 = vpop.f32.mrb[0].mxu0
  %v6245 = vadd.f32 0.0, %v6244
  %v6246 = vpop.f32.mrb[0].mxu0
  %6247 = vmatprep.mubr.bf16.mxu0 %v5657
  %6248 = vmatmul.mubr.bf16.gmra.mrb[0].mxu0 %v5356
  %v6249 = vpop.f32.mrb[0].mxu0
  %v6250 = vadd.f32 0.0, %v6249
  %v6251 = vpop.f32.mrb[0].mxu0
  %v6252 = vpop.f32.mrb[0].mxu0
  %v6253 = vadd.f32 0.0, %v6252
  %v6254 = vpop.f32.mrb[0].mxu0
  %6255 = vmatprep.mubr.bf16.mxu0 %v5660
  %6256 = vmatmul.mubr.bf16.gmra.mrb[0].mxu0 %v5358
  %v6257 = vpop.f32.mrb[0].mxu0
  %v6258 = vadd.f32 0.0, %v6257
  %v6259 = vpop.f32.mrb[0].mxu0
  %v6260 = vpop.f32.mrb[0].mxu0
  %v6261 = vadd.f32 0.0, %v6260
  %v6262 = vpop.f32.mrb[0].mxu0
  %6263 = vmatprep.mubr.bf16.mxu0 %v5663
  %6264 = vmatmul.mubr.bf16.gmra.mrb[0].mxu0 %v5360
  %v6265 = vpop.f32.mrb[0].mxu0
  %v6266 = vadd.f32 0.0, %v6265
  %v6267 = vpop.f32.mrb[0].mxu0
  %v6268 = vpop.f32.mrb[0].mxu0
  %v6269 = vadd.f32 0.0, %v6268
  %v6270 = vpop.f32.mrb[0].mxu0
  %6271 = vmatprep.mubr.bf16.mxu0 %v5666
  %6272 = vmatmul.mubr.bf16.gmra.mrb[0].mxu0 %v5362
  %v6273 = vpop.f32.mrb[0].mxu0
  %v6274 = vadd.f32 0.0, %v6273
  %v6275 = vpop.f32.mrb[0].mxu0
  %v6276 = vpop.f32.mrb[0].mxu0
  %v6277 = vadd.f32 0.0, %v6276
  %v6278 = vpop.f32.mrb[0].mxu0
  %6279 = vmatprep.mubr.bf16.mxu0 %v5669
  %6280 = vmatmul.mubr.bf16.gmra.mrb[0].mxu0 %v5364
  %v6281 = vpop.f32.mrb[0].mxu0
  %v6282 = vadd.f32 0.0, %v6281
  %v6283 = vpop.f32.mrb[0].mxu0
  %v6284 = vpop.f32.mrb[0].mxu0
  %v6285 = vadd.f32 0.0, %v6284
  %v6286 = vpop.f32.mrb[0].mxu0
  %6287 = vmatprep.mubr.bf16.mxu0 %v5672
  %6288 = vmatmul.mubr.bf16.gmra.mrb[0].mxu0 %v5366
  %v6289 = vpop.f32.mrb[0].mxu0
  %v6290 = vadd.f32 0.0, %v6289
  %v6291 = vpop.f32.mrb[0].mxu0
  %v6292 = vpop.f32.mrb[0].mxu0
  %v6293 = vadd.f32 0.0, %v6292
  %v6294 = vpop.f32.mrb[0].mxu0
  %6295 = vmatprep.mubr.bf16.mxu0 %v5675
  %6296 = vmatmul.mubr.bf16.gmra.mrb[0].mxu0 %v5368
  %v6297 = vpop.f32.mrb[0].mxu0
  %v6298 = vadd.f32 0.0, %v6297
  %v6299 = vpop.f32.mrb[0].mxu0
  %v6300 = vpop.f32.mrb[0].mxu0
  %v6301 = vadd.f32 0.0, %v6300
  %v6302 = vpop.f32.mrb[0].mxu0
  %6303 = vmatprep.mubr.bf16.mxu0 %v5678
  %6304 = vmatmul.mubr.bf16.gmra.mrb[0].mxu0 %v5370
  %v6305 = vpop.f32.mrb[0].mxu0
  %v6306 = vadd.f32 0.0, %v6305
  %v6307 = vpop.f32.mrb[0].mxu0
  %v6308 = vpop.f32.mrb[0].mxu0
  %v6309 = vadd.f32 0.0, %v6308
  %v6310 = vpop.f32.mrb[0].mxu0
  %6311 = vmatprep.mubr.bf16.mxu0 %v5681
  %6312 = vmatmul.mubr.bf16.gmra.mrb[0].mxu0 %v5372
  %v6313 = vpop.f32.mrb[0].mxu0
  %v6314 = vadd.f32 0.0, %v6313
  %v6315 = vpop.f32.mrb[0].mxu0
  %v6316 = vpop.f32.mrb[0].mxu0
  %v6317 = vadd.f32 0.0, %v6316
  %v6318 = vpop.f32.mrb[0].mxu0
  %6319 = vmatprep.mubr.bf16.mxu0 %v5684
  %6320 = vmatmul.mubr.bf16.gmra.mrb[0].mxu0 %v5374
  %v6321 = vpop.f32.mrb[0].mxu0
  %v6322 = vadd.f32 0.0, %v6321
  %v6323 = vpop.f32.mrb[0].mxu0
  %v6324 = vpop.f32.mrb[0].mxu0
  %v6325 = vadd.f32 0.0, %v6324
  %v6326 = vpop.f32.mrb[0].mxu0
  %6327 = vmatprep.mubr.bf16.mxu0 %v5687
  %6328 = vmatmul.mubr.bf16.gmra.mrb[0].mxu0 %v5376
  %v6329 = vpop.f32.mrb[0].mxu0
  %v6330 = vadd.f32 0.0, %v6329
  %v6331 = vpop.f32.mrb[0].mxu0
  %v6332 = vpop.f32.mrb[0].mxu0
  %v6333 = vadd.f32 0.0, %v6332
  %v6334 = vpop.f32.mrb[0].mxu0
  %6335 = vmatprep.mubr.bf16.mxu0 %v5690
  %6336 = vmatmul.mubr.bf16.gmra.mrb[0].mxu0 %v5378
  %v6337 = vpop.f32.mrb[0].mxu0
  %v6338 = vadd.f32 0.0, %v6337
  %v6339 = vpop.f32.mrb[0].mxu0
  %v6340 = vpop.f32.mrb[0].mxu0
  %v6341 = vadd.f32 0.0, %v6340
  %v6342 = vpop.f32.mrb[0].mxu0
  %6343 = vmatprep.mubr.bf16.mxu0 %v5693
  %6344 = vmatmul.mubr.bf16.gmra.mrb[0].mxu0 %v5380
  %v6345 = vpop.f32.mrb[0].mxu0
  %v6346 = vadd.f32 0.0, %v6345
  %v6347 = vpop.f32.mrb[0].mxu0
  %v6348 = vpop.f32.mrb[0].mxu0
  %v6349 = vadd.f32 0.0, %v6348
  %v6350 = vpop.f32.mrb[0].mxu0
  %6351 = vdwg.mxu0
  %6352 = vst.msk [vmem:[%s7] sm:$0xff] %vm3781, %v5730
  %6353 = vst.msk [vmem:[%s7 + $0x8] sm:$0xff] %vm3781, %v5733
  %6354 = vst.msk [vmem:[%s7 + $0x10] sm:$0xff] %vm3781, %v5738
  %6355 = vst.msk [vmem:[%s7 + $0x18] sm:$0xff] %vm3781, %v5741
  %6356 = vst.msk [vmem:[%s7 + $0x20] sm:$0xff] %vm3781, %v5746
  %6357 = vst.msk [vmem:[%s7 + $0x28] sm:$0xff] %vm3781, %v5749
  %6358 = vst.msk [vmem:[%s7 + $0x30] sm:$0xff] %vm3781, %v5754
  %6359 = vst.msk [vmem:[%s7 + $0x38] sm:$0xff] %vm3781, %v5757
  %6360 = vst.msk [vmem:[%s7 + $0x40] sm:$0xff] %vm3781, %v5762
  %6361 = vst.msk [vmem:[%s7 + $0x48] sm:$0xff] %vm3781, %v5765
  %6362 = vst.msk [vmem:[%s7 + $0x50] sm:$0xff] %vm3781, %v5770
  %6363 = vst.msk [vmem:[%s7 + $0x58] sm:$0xff] %vm3781, %v5773
  %6364 = vst.msk [vmem:[%s7 + $0x60] sm:$0xff] %vm3781, %v5778
  %6365 = vst.msk [vmem:[%s7 + $0x68] sm:$0xff] %vm3781, %v5781
  %6366 = vst.msk [vmem:[%s7 + $0x70] sm:$0xff] %vm3781, %v5786
  %6367 = vst.msk [vmem:[%s7 + $0x78] sm:$0xff] %vm3781, %v5789
  %6368 = vst.msk [vmem:[%s7 + $0x80] sm:$0xff] %vm3781, %v5794
  %6369 = vst.msk [vmem:[%s7 + $0x88] sm:$0xff] %vm3781, %v5797
  %6370 = vst.msk [vmem:[%s7 + $0x90] sm:$0xff] %vm3781, %v5802
  %6371 = vst.msk [vmem:[%s7 + $0x98] sm:$0xff] %vm3781, %v5805
  %6372 = vst.msk [vmem:[%s7 + $0xa0] sm:$0xff] %vm3781, %v5810
  %6373 = vst.msk [vmem:[%s7 + $0xa8] sm:$0xff] %vm3781, %v5813
  %6374 = vst.msk [vmem:[%s7 + $0xb0] sm:$0xff] %vm3781, %v5818
  %6375 = vst.msk [vmem:[%s7 + $0xb8] sm:$0xff] %vm3781, %v5821
  %6376 = vst.msk [vmem:[%s7 + $0xc0] sm:$0xff] %vm3781, %v5826
  %6377 = vst.msk [vmem:[%s7 + $0xc8] sm:$0xff] %vm3781, %v5829
  %6378 = vst.msk [vmem:[%s7 + $0xd0] sm:$0xff] %vm3781, %v5834
  %6379 = vst.msk [vmem:[%s7 + $0xd8] sm:$0xff] %vm3781, %v5837
  %6380 = vst.msk [vmem:[%s7 + $0xe0] sm:$0xff] %vm3781, %v5842
  %6381 = vst.msk [vmem:[%s7 + $0xe8] sm:$0xff] %vm3781, %v5845
  %6382 = vst.msk [vmem:[%s7 + $0xf0] sm:$0xff] %vm3781, %v5850
  %6383 = vst.msk [vmem:[%s7 + $0xf8] sm:$0xff] %vm3781, %v5853
  %6384 = vst.msk [vmem:[%s7 + $0x100] sm:$0xff] %vm3781, %v5858
  %6385 = vst.msk [vmem:[%s7 + $0x108] sm:$0xff] %vm3781, %v5861
  %6386 = vst.msk [vmem:[%s7 + $0x110] sm:$0xff] %vm3781, %v5866
  %6387 = vst.msk [vmem:[%s7 + $0x118] sm:$0xff] %vm3781, %v5869
  %6388 = vst.msk [vmem:[%s7 + $0x120] sm:$0xff] %vm3781, %v5874
  %6389 = vst.msk [vmem:[%s7 + $0x128] sm:$0xff] %vm3781, %v5877
  %6390 = vst.msk [vmem:[%s7 + $0x130] sm:$0xff] %vm3781, %v5882
  %6391 = vst.msk [vmem:[%s7 + $0x138] sm:$0xff] %vm3781, %v5885
  %6392 = vst.msk [vmem:[%s7 + $0x140] sm:$0xff] %vm3781, %v5890
  %6393 = vst.msk [vmem:[%s7 + $0x148] sm:$0xff] %vm3781, %v5893
  %6394 = vst.msk [vmem:[%s7 + $0x150] sm:$0xff] %vm3781, %v5898
  %6395 = vst.msk [vmem:[%s7 + $0x158] sm:$0xff] %vm3781, %v5901
  %6396 = vst.msk [vmem:[%s7 + $0x160] sm:$0xff] %vm3781, %v5906
  %6397 = vst.msk [vmem:[%s7 + $0x168] sm:$0xff] %vm3781, %v5909
  %6398 = vst.msk [vmem:[%s7 + $0x170] sm:$0xff] %vm3781, %v5914
  %6399 = vst.msk [vmem:[%s7 + $0x178] sm:$0xff] %vm3781, %v5917
  %6400 = vst.msk [vmem:[%s7 + $0x180] sm:$0xff] %vm3781, %v5922
  %6401 = vst.msk [vmem:[%s7 + $0x188] sm:$0xff] %vm3781, %v5925
  %6402 = vst.msk [vmem:[%s7 + $0x190] sm:$0xff] %vm3781, %v5930
  %6403 = vst.msk [vmem:[%s7 + $0x198] sm:$0xff] %vm3781, %v5933
  %6404 = vst.msk [vmem:[%s7 + $0x1a0] sm:$0xff] %vm3781, %v5938
  %6405 = vst.msk [vmem:[%s7 + $0x1a8] sm:$0xff] %vm3781, %v5941
  %6406 = vst.msk [vmem:[%s7 + $0x1b0] sm:$0xff] %vm3781, %v5946
  %6407 = vst.msk [vmem:[%s7 + $0x1b8] sm:$0xff] %vm3781, %v5949
  %6408 = vst.msk [vmem:[%s7 + $0x1c0] sm:$0xff] %vm3781, %v5954
  %6409 = vst.msk [vmem:[%s7 + $0x1c8] sm:$0xff] %vm3781, %v5957
  %6410 = vst.msk [vmem:[%s7 + $0x1d0] sm:$0xff] %vm3781, %v5962
  %6411 = vst.msk [vmem:[%s7 + $0x1d8] sm:$0xff] %vm3781, %v5965
  %6412 = vst.msk [vmem:[%s7 + $0x1e0] sm:$0xff] %vm3781, %v5970
  %6413 = vst.msk [vmem:[%s7 + $0x1e8] sm:$0xff] %vm3781, %v5973
  %6414 = vst.msk [vmem:[%s7 + $0x1f0] sm:$0xff] %vm3781, %v5978
  %6415 = vst.msk [vmem:[%s7 + $0x1f8] sm:$0xff] %vm3781, %v5981
  %6416 = vst.msk [vmem:[%s7 + $0x200] sm:$0xff] %vm3781, %v5986
  %6417 = vst.msk [vmem:[%s7 + $0x208] sm:$0xff] %vm3781, %v5989
  %6418 = vst.msk [vmem:[%s7 + $0x210] sm:$0xff] %vm3781, %v5994
  %6419 = vst.msk [vmem:[%s7 + $0x218] sm:$0xff] %vm3781, %v5997
  %6420 = vst.msk [vmem:[%s7 + $0x220] sm:$0xff] %vm3781, %v6002
  %6421 = vst.msk [vmem:[%s7 + $0x228] sm:$0xff] %vm3781, %v6005
  %6422 = vst.msk [vmem:[%s7 + $0x230] sm:$0xff] %vm3781, %v6010
  %6423 = vst.msk [vmem:[%s7 + $0x238] sm:$0xff] %vm3781, %v6013
  %6424 = vst.msk [vmem:[%s7 + $0x240] sm:$0xff] %vm3781, %v6018
  %6425 = vst.msk [vmem:[%s7 + $0x248] sm:$0xff] %vm3781, %v6021
  %6426 = vst.msk [vmem:[%s7 + $0x250] sm:$0xff] %vm3781, %v6026
  %6427 = vst.msk [vmem:[%s7 + $0x258] sm:$0xff] %vm3781, %v6029
  %6428 = vst.msk [vmem:[%s7 + $0x260] sm:$0xff] %vm3781, %v6034
  %6429 = vst.msk [vmem:[%s7 + $0x268] sm:$0xff] %vm3781, %v6037
  %6430 = vst.msk [vmem:[%s7 + $0x270] sm:$0xff] %vm3781, %v6042
  %6431 = vst.msk [vmem:[%s7 + $0x278] sm:$0xff] %vm3781, %v6045
  %6432 = vst.msk [vmem:[%s7 + $0x280] sm:$0xff] %vm3781, %v6050
  %6433 = vst.msk [vmem:[%s7 + $0x288] sm:$0xff] %vm3781, %v6053
  %6434 = vst.msk [vmem:[%s7 + $0x290] sm:$0xff] %vm3781, %v6058
  %6435 = vst.msk [vmem:[%s7 + $0x298] sm:$0xff] %vm3781, %v6061
  %6436 = vst.msk [vmem:[%s7 + $0x2a0] sm:$0xff] %vm3781, %v6066
  %6437 = vst.msk [vmem:[%s7 + $0x2a8] sm:$0xff] %vm3781, %v6069
  %6438 = vst.msk [vmem:[%s7 + $0x2b0] sm:$0xff] %vm3781, %v6074
  %6439 = vst.msk [vmem:[%s7 + $0x2b8] sm:$0xff] %vm3781, %v6077
  %6440 = vst.msk [vmem:[%s7 + $0x2c0] sm:$0xff] %vm3781, %v6082
  %6441 = vst.msk [vmem:[%s7 + $0x2c8] sm:$0xff] %vm3781, %v6085
  %6442 = vst.msk [vmem:[%s7 + $0x2d0] sm:$0xff] %vm3781, %v6090
  %6443 = vst.msk [vmem:[%s7 + $0x2d8] sm:$0xff] %vm3781, %v6093
  %6444 = vst.msk [vmem:[%s7 + $0x2e0] sm:$0xff] %vm3781, %v6098
  %6445 = vst.msk [vmem:[%s7 + $0x2e8] sm:$0xff] %vm3781, %v6101
  %6446 = vst.msk [vmem:[%s7 + $0x2f0] sm:$0xff] %vm3781, %v6106
  %6447 = vst.msk [vmem:[%s7 + $0x2f8] sm:$0xff] %vm3781, %v6109
  %6448 = vst.msk [vmem:[%s7 + $0x300] sm:$0xff] %vm3781, %v6114
  %6449 = vst.msk [vmem:[%s7 + $0x308] sm:$0xff] %vm3781, %v6117
  %6450 = vst.msk [vmem:[%s7 + $0x310] sm:$0xff] %vm3781, %v6122
  %6451 = vst.msk [vmem:[%s7 + $0x318] sm:$0xff] %vm3781, %v6125
  %6452 = vst.msk [vmem:[%s7 + $0x320] sm:$0xff] %vm3781, %v6130
  %6453 = vst.msk [vmem:[%s7 + $0x328] sm:$0xff] %vm3781, %v6133
  %6454 = vst.msk [vmem:[%s7 + $0x330] sm:$0xff] %vm3781, %v6138
  %6455 = vst.msk [vmem:[%s7 + $0x338] sm:$0xff] %vm3781, %v6141
  %6456 = vst.msk [vmem:[%s7 + $0x340] sm:$0xff] %vm3781, %v6146
  %6457 = vst.msk [vmem:[%s7 + $0x348] sm:$0xff] %vm3781, %v6149
  %6458 = vst.msk [vmem:[%s7 + $0x350] sm:$0xff] %vm3781, %v6154
  %6459 = vst.msk [vmem:[%s7 + $0x358] sm:$0xff] %vm3781, %v6157
  %6460 = vst.msk [vmem:[%s7 + $0x360] sm:$0xff] %vm3781, %v6162
  %6461 = vst.msk [vmem:[%s7 + $0x368] sm:$0xff] %vm3781, %v6165
  %6462 = vst.msk [vmem:[%s7 + $0x370] sm:$0xff] %vm3781, %v6170
  %6463 = vst.msk [vmem:[%s7 + $0x378] sm:$0xff] %vm3781, %v6173
  %6464 = vst.msk [vmem:[%s7 + $0x380] sm:$0xff] %vm3781, %v6178
  %6465 = vst.msk [vmem:[%s7 + $0x388] sm:$0xff] %vm3781, %v6181
  %6466 = vst.msk [vmem:[%s7 + $0x390] sm:$0xff] %vm3781, %v6186
  %6467 = vst.msk [vmem:[%s7 + $0x398] sm:$0xff] %vm3781, %v6189
  %6468 = vst.msk [vmem:[%s7 + $0x3a0] sm:$0xff] %vm3781, %v6194
  %6469 = vst.msk [vmem:[%s7 + $0x3a8] sm:$0xff] %vm3781, %v6197
  %6470 = vst.msk [vmem:[%s7 + $0x3b0] sm:$0xff] %vm3781, %v6202
  %6471 = vst.msk [vmem:[%s7 + $0x3b8] sm:$0xff] %vm3781, %v6205
  %6472 = vst.msk [vmem:[%s7 + $0x3c0] sm:$0xff] %vm3781, %v6210
  %6473 = vst.msk [vmem:[%s7 + $0x3c8] sm:$0xff] %vm3781, %v6213
  %6474 = vst.msk [vmem:[%s7 + $0x3d0] sm:$0xff] %vm3781, %v6218
  %6475 = vst.msk [vmem:[%s7 + $0x3d8] sm:$0xff] %vm3781, %v6221
  %6476 = vst.msk [vmem:[%s7 + $0x3e0] sm:$0xff] %vm3781, %v6226
  %6477 = vst.msk [vmem:[%s7 + $0x3e8] sm:$0xff] %vm3781, %v6229
  %6478 = vst.msk [vmem:[%s7 + $0x3f0] sm:$0xff] %vm3781, %v6234
  %6479 = vst.msk [vmem:[%s7 + $0x3f8] sm:$0xff] %vm3781, %v6237
  %6480 = vst.msk [vmem:[%s7 + $0x400] sm:$0xff] %vm3781, %v6242
  %6481 = vst.msk [vmem:[%s7 + $0x408] sm:$0xff] %vm3781, %v6245
  %6482 = vst.msk [vmem:[%s7 + $0x410] sm:$0xff] %vm3781, %v6250
  %6483 = vst.msk [vmem:[%s7 + $0x418] sm:$0xff] %vm3781, %v6253
  %6484 = vst.msk [vmem:[%s7 + $0x420] sm:$0xff] %vm3781, %v6258
  %6485 = vst.msk [vmem:[%s7 + $0x428] sm:$0xff] %vm3781, %v6261
  %6486 = vst.msk [vmem:[%s7 + $0x430] sm:$0xff] %vm3781, %v6266
  %6487 = vst.msk [vmem:[%s7 + $0x438] sm:$0xff] %vm3781, %v6269
  %6488 = vst.msk [vmem:[%s7 + $0x440] sm:$0xff] %vm3781, %v6274
  %6489 = vst.msk [vmem:[%s7 + $0x448] sm:$0xff] %vm3781, %v6277
  %6490 = vst.msk [vmem:[%s7 + $0x450] sm:$0xff] %vm3781, %v6282
  %6491 = vst.msk [vmem:[%s7 + $0x458] sm:$0xff] %vm3781, %v6285
  %6492 = vst.msk [vmem:[%s7 + $0x460] sm:$0xff] %vm3781, %v6290
  %6493 = vst.msk [vmem:[%s7 + $0x468] sm:$0xff] %vm3781, %v6293
  %6494 = vst.msk [vmem:[%s7 + $0x470] sm:$0xff] %vm3781, %v6298
  %6495 = vst.msk [vmem:[%s7 + $0x478] sm:$0xff] %vm3781, %v6301
  %6496 = vst.msk [vmem:[%s7 + $0x480] sm:$0xff] %vm3781, %v6306
  %6497 = vst.msk [vmem:[%s7 + $0x488] sm:$0xff] %vm3781, %v6309
  %6498 = vst.msk [vmem:[%s7 + $0x490] sm:$0xff] %vm3781, %v6314
  %6499 = vst.msk [vmem:[%s7 + $0x498] sm:$0xff] %vm3781, %v6317
  %6500 = vst.msk [vmem:[%s7 + $0x4a0] sm:$0xff] %vm3781, %v6322
  %6501 = vst.msk [vmem:[%s7 + $0x4a8] sm:$0xff] %vm3781, %v6325
  %6502 = vst.msk [vmem:[%s7 + $0x4b0] sm:$0xff] %vm3781, %v6330
  %6503 = vst.msk [vmem:[%s7 + $0x4b8] sm:$0xff] %vm3781, %v6333
  %6504 = vst.msk [vmem:[%s7 + $0x4c0] sm:$0xff] %vm3781, %v6338
  %6505 = vst.msk [vmem:[%s7 + $0x4c8] sm:$0xff] %vm3781, %v6341
  %6506 = vst.msk [vmem:[%s7 + $0x4d0] sm:$0xff] %vm3781, %v6346
  %6507 = vst.msk [vmem:[%s7 + $0x4d8] sm:$0xff] %vm3781, %v6349
  // Predicated region
  $region30: #{fused_forward.1} parent=0 // pred_check
    _
  $region31: #{fused_forward.1} parent=0 // pred_check_branch
    %6509 = sbr.rel (0) target = $region33
  $region32: #{fused_forward.1} parent=0 // pred_region
    _
  $region33: #{fused_forward.1} parent=0 // pred_fallthru
    _
  // Predicated region
  $region34: #{fused_forward.1} parent=0 // pred_check
    _
  $region35: #{fused_forward.1} parent=0 // pred_check_branch
    %6511 = sbr.rel (0) target = $region37
  $region36: #{fused_forward.1} parent=0 // pred_region
    _
  $region37: #{fused_forward.1} parent=0 // pred_fallthru
    _

</llo_original>
